<compile_context>
chip_gen: v7x
topology: tpu7x:2x2x1
jax: 0.10.0
libtpu: 0.0.40
codegen_flags: <defaults>
</compile_context>

<pallas_src>
import functools

import jax
import jax.numpy as jnp
from jax.experimental import pallas as pl
from jax.experimental.pallas import tpu as pltpu

LANES = 128        # pad all channel / feature / K axes to this (lane-dense vregs)
KSIZE = 5          # LeNet conv kernel size
BATCH_BLOCK = 64   # batch tile per grid step (multiple of 8)


# ----------------------------- kernel helpers --------------------------------

def _maxpool2x2_nhwc(t):
    """2x2 / stride-2 max pool on (B, H, W, C) with H, W even.

    Pairwise max + concat along the pooled axis only; avoids reshapes that put
    a size-2 dim in the sublane position (per perf review)."""
    B, H, W, C = t.shape
    t = jnp.concatenate(
        [jnp.maximum(t[:, 2 * k:2 * k + 1], t[:, 2 * k + 1:2 * k + 2])
         for k in range(H // 2)], axis=1)                       # (B, H//2, W, C)
    t = jnp.concatenate(
        [jnp.maximum(t[:, :, 2 * k:2 * k + 1, :], t[:, :, 2 * k + 1:2 * k + 2, :])
         for k in range(W // 2)], axis=2)                       # (B, H//2, W//2, C)
    return t


# ----------------------------- fused kernel ----------------------------------

def _lenet_fused_kernel(p_ref, w1_ref, b1_ref, w2_ref, b2_ref,
                        f1w_ref, f1b_ref, f2w_ref, f2b_ref, f3w_ref, f3b_ref,
                        o_ref, *, oh1, ow1, oh2, ow2):
    f32, bf16 = jnp.float32, jnp.bfloat16
    TB, P1, K1 = p_ref.shape                       # (batch tile, OH1*OW1, 128)
    NP = o_ref.shape[-1]                           # padded lane width (=LANES)
    ph2, pw2 = oh2 // 2, ow2 // 2

    # ---- conv1 + bias + ReLU: ONE MXU matmul over the wrapper-built im2col ----
    h = jnp.dot(p_ref[...].reshape(TB * P1, K1), w1_ref[...],
                preferred_element_type=f32)                      # bf16 x bf16 -> f32
    h = jnp.maximum(h + b1_ref[...], 0.0).reshape(TB, oh1, ow1, NP)

    # ---- maxpool1 (2x2, stride 2) ----
    h = _maxpool2x2_nhwc(h)                                      # (TB, ph1, pw1, NP)

    # ---- conv2 + bias + ReLU: tap-pair K=256 MXU matmuls (13 instead of 25) ----
    m2 = TB * oh2 * ow2
    n_taps = KSIZE * KSIZE
    acc = jnp.zeros((m2, NP), f32)
    # NOTE: statically unrolled (13 short iterations; static tap offsets keep
    # the piece slices / reshapes compile-time static).
    for pair in range((n_taps + 1) // 2):
        t0 = 2 * pair
        t1 = min(t0 + 1, n_taps - 1)        # last odd tap pairs with zero weights
        i0, j0 = divmod(t0, KSIZE)
        i1, j1 = divmod(t1, KSIZE)
        a0 = h[:, i0:i0 + oh2, j0:j0 + ow2, :].reshape(m2, NP)
        a1 = h[:, i1:i1 + oh2, j1:j1 + ow2, :].reshape(m2, NP)
        lhs = jnp.concatenate([a0, a1], axis=-1).astype(bf16)    # (m2, 256)
        acc = acc + jnp.dot(lhs, w2_ref[pair], preferred_element_type=f32)
    h = jnp.maximum(acc + b2_ref[...], 0.0)                      # (m2, NP)

    # ---- maxpool2 + flatten ((ph, pw, c) order; fc1 weight packed to match) ----
    h = _maxpool2x2_nhwc(h.reshape(TB, oh2, ow2, NP))            # (TB, ph2, pw2, NP)
    feat = h.reshape(TB, ph2 * pw2 * NP).astype(bf16)

    # ---- classifier: three lane-dense 128-wide MXU matmuls, fused bias (+ReLU) ----
    z = jnp.maximum(jnp.dot(feat, f1w_ref[...], preferred_element_type=f32)
                    + f1b_ref[...], 0.0)
    z = jnp.maximum(jnp.dot(z.astype(bf16), f2w_ref[...], preferred_element_type=f32)
                    + f2b_ref[...], 0.0)
    z = jnp.dot(z.astype(bf16), f3w_ref[...], preferred_element_type=f32) + f3b_ref[...]
    o_ref[...] = z.astype(o_ref.dtype)


# ----------------------------- wrapper ----------------------------------------

@functools.partial(jax.jit, static_argnames=("num_classes",))
def lenet_forward(packed, x_nchw, *, num_classes):
    """x_nchw: (B, Cin, H, W) float32 (PyTorch layout) -> (B, num_classes)."""
    B, cin, H, W = x_nchw.shape
    oh1, ow1 = H - KSIZE + 1, W - KSIZE + 1
    assert oh1 % 2 == 0 and ow1 % 2 == 0, "2x2 maxpool expects even conv1 output"
    ph1, pw1 = oh1 // 2, ow1 // 2
    oh2, ow2 = ph1 - KSIZE + 1, pw1 - KSIZE + 1
    assert oh2 % 2 == 0 and ow2 % 2 == 0, "2x2 maxpool expects even conv2 output"

    # ---- conv1 im2col built in the wrapper (tiny, lane-dense, bf16) ----
    x = jnp.transpose(x_nchw, (0, 2, 3, 1)).astype(jnp.float32)  # NHWC
    taps = []
    for i in range(KSIZE):                     # (kh, kw, cin) tap order = w1 rows
        for j in range(KSIZE):
            for c in range(cin):
                taps.append(x[:, i:i + oh1, j:j + ow1, c])
    k1 = KSIZE * KSIZE * cin
    assert k1 <= LANES
    patches = jnp.stack(taps, axis=-1).reshape(B, oh1 * ow1, k1)
    patches = jnp.pad(patches, ((0, 0), (0, 0), (0, LANES - k1)))
    patches = patches.astype(jnp.bfloat16)

    # ---- batch tiling ----
    TB = B if B <= BATCH_BLOCK else BATCH_BLOCK
    n_blocks = pl.cdiv(B, TB)
    Bp = n_blocks * TB
    if Bp != B:
        patches = jnp.pad(patches, ((0, Bp - B), (0, 0), (0, 0)))
    P1 = oh1 * ow1

    def _resident(arr):                        # weights stay VMEM-resident
        return pl.BlockSpec(arr.shape, lambda i, _n=arr.ndim: (0,) * _n)

    weights = (packed["w1"], packed["b1"], packed["w2"], packed["b2"],
               packed["f1w"], packed["f1b"], packed["f2w"], packed["f2b"],
               packed["f3w"], packed["f3b"])

    kernel = functools.partial(_lenet_fused_kernel,
                               oh1=oh1, ow1=ow1, oh2=oh2, ow2=ow2)

    out = pl.pallas_call(
        kernel,
        out_shape=jax.ShapeDtypeStruct((Bp, LANES), jnp.float32),
        grid=(n_blocks,),
        in_specs=[pl.BlockSpec((TB, P1, LANES), lambda i: (i, 0, 0))]
                 + [_resident(w) for w in weights],
        out_specs=pl.BlockSpec((TB, LANES), lambda i: (i, 0)),
        compiler_params=pltpu.CompilerParams(
            dimension_semantics=("parallel",),
            vmem_limit_bytes=48 * 1024 * 1024),
    )(patches, *weights)
    return out[:B, :num_classes]               # drop batch pad + padded logit lanes


# ----------------------------- params ------------------------------------------

def _sizes(input_size):
    conv = lambda s: s - KSIZE + 1
    pool = lambda s: (s - 2) // 2 + 1
    oh1 = conv(input_size); ph1 = pool(oh1)
    oh2 = conv(ph1); ph2 = pool(oh2)
    return oh1, ph1, oh2, ph2


def init_lenet_params(key, input_size, in_channels, num_classes):
    """Raw parameters in PyTorch Conv2d/Linear layouts (nn.Module-style init)."""
    _, _, _, p2 = _sizes(input_size)
    flattened = 16 * p2 * p2
    ks = jax.random.split(key, 10)

    def uinit(k, shape, fan_in):
        bound = 1.0 / jnp.sqrt(jnp.float32(fan_in))
        return jax.random.uniform(k, shape, jnp.float32, -bound, bound)

    return {
        "conv1_w": uinit(ks[0], (6, in_channels, KSIZE, KSIZE), in_channels * 25),
        "conv1_b": uinit(ks[1], (6,), in_channels * 25),
        "conv2_w": uinit(ks[2], (16, 6, KSIZE, KSIZE), 6 * 25),
        "conv2_b": uinit(ks[3], (16,), 6 * 25),
        "fc1_w": uinit(ks[4], (flattened, 120), flattened),
        "fc1_b": uinit(ks[5], (120,), flattened),
        "fc2_w": uinit(ks[6], (120, 84), 120),
        "fc2_b": uinit(ks[7], (84,), 120),
        "fc3_w": uinit(ks[8], (84, num_classes), 84),
        "fc3_b": uinit(ks[9], (num_classes,), 84),
    }


def _pad_to(a, shape):
    return jnp.pad(a, [(0, t - s) for s, t in zip(a.shape, shape)])


def pack_lenet_params(params, *, input_size):
    """One-time repack into lane-dense, bf16 GEMM layouts for the fused kernel."""
    oh1, _, oh2, ph2 = _sizes(input_size)
    assert oh1 % 2 == 0 and oh2 % 2 == 0, "2x2 maxpool expects even conv outputs"
    cin = params["conv1_w"].shape[1]
    NP = LANES
    bf16 = jnp.bfloat16
    k1 = KSIZE * KSIZE * cin
    assert k1 <= NP

    # conv1: (OC,Cin,KH,KW) -> (KH*KW*Cin -> 128, OC -> 128); rows in (kh,kw,c)
    # tap order matching the wrapper im2col.
    w1 = jnp.transpose(params["conv1_w"], (2, 3, 1, 0)).reshape(k1, -1)
    w1 = _pad_to(w1, (NP, NP)).astype(bf16)
    b1 = _pad_to(params["conv1_b"].reshape(1, -1), (1, NP))

    # conv2: per-tap (IC->128, OC->128) blocks, consecutive taps paired along K
    # to 256 (last odd tap padded with a zero block).
    n_taps = KSIZE * KSIZE
    n_pairs = (n_taps + 1) // 2
    w2 = jnp.transpose(params["conv2_w"], (2, 3, 1, 0))            # (KH,KW,IC,OC)
    w2 = _pad_to(w2, (KSIZE, KSIZE, NP, NP)).reshape(n_taps, NP, NP)
    w2 = jnp.concatenate(
        [w2, jnp.zeros((2 * n_pairs - n_taps, NP, NP), w2.dtype)], axis=0)
    w2 = w2.reshape(n_pairs, 2 * NP, NP).astype(bf16)              # (13, 256, 128)
    b2 = _pad_to(params["conv2_b"].reshape(1, -1), (1, NP))

    # fc1: reorder rows from torch's (c,ph,pw) flatten to the kernel's
    # (ph,pw,c_padded) flatten; pad channel block and output width to 128.
    f1 = params["fc1_w"].reshape(16, ph2, ph2, 120)
    f1 = jnp.transpose(f1, (1, 2, 0, 3))                           # (ph,pw,c,out)
    f1 = _pad_to(f1, (ph2, ph2, NP, NP)).reshape(ph2 * ph2 * NP, NP).astype(bf16)
    f1b = _pad_to(params["fc1_b"].reshape(1, -1), (1, NP))

    f2 = _pad_to(params["fc2_w"], (NP, NP)).astype(bf16)
    f2b = _pad_to(params["fc2_b"].reshape(1, -1), (1, NP))
    f3 = _pad_to(params["fc3_w"], (NP, NP)).astype(bf16)
    f3b = _pad_to(params["fc3_b"].reshape(1, -1), (1, NP))

    return {"w1": w1, "b1": b1, "w2": w2, "b2": b2,
            "f1w": f1, "f1b": f1b, "f2w": f2, "f2b": f2b,
            "f3w": f3, "f3b": f3b}


# ----------------------------- pure-JAX reference -------------------------------

def lenet_reference(params, x):
    """XLA reference matching the PyTorch module semantics (for validation)."""
    def conv_relu(x, w, b):
        y = jax.lax.conv_general_dilated(
            x, w, window_strides=(1, 1), padding="VALID",
            dimension_numbers=("NCHW", "OIHW", "NCHW"))
        return jnp.maximum(y + b[None, :, None, None], 0.0)

    def pool(x):
        return jax.lax.reduce_window(x, -jnp.inf, jax.lax.max,
                                     (1, 1, 2, 2), (1, 1, 2, 2), "VALID")

    x = pool(conv_relu(x, params["conv1_w"], params["conv1_b"]))
    x = pool(conv_relu(x, params["conv2_w"], params["conv2_b"]))
    x = x.reshape(x.shape[0], -1)
    x = jnp.maximum(x @ params["fc1_w"] + params["fc1_b"], 0.0)
    x = jnp.maximum(x @ params["fc2_w"] + params["fc2_b"], 0.0)
    return x @ params["fc3_w"] + params["fc3_b"]


# ----------------------------- main ---------------------------------------------

if __name__ == "__main__":
    input_size = 16      # 16 -> conv 12 -> pool 6 -> conv 2 -> pool 1
    in_channels = 1
    num_classes = 10
    batch = 2

    key = jax.random.PRNGKey(0)
    k_x, k_p = jax.random.split(key)
    x = jax.random.normal(k_x, (batch, in_channels, input_size, input_size),
                          dtype=jnp.float32)
    params = init_lenet_params(k_p, input_size, in_channels, num_classes)
    packed = pack_lenet_params(params, input_size=input_size)

    logits = lenet_forward(packed, x, num_classes=num_classes)
    jax.block_until_ready(logits)
    assert logits.shape == (batch, num_classes)

    ref = lenet_reference(params, x)
    max_err = float(jnp.max(jnp.abs(logits - ref)))
    assert jnp.allclose(logits, ref, atol=5e-2, rtol=5e-2), max_err
    print("KERNEL_OK")
</pallas_src>

<mosaic_0001>
module attributes {stable_mosaic.version = 11 : i64} {
  func.func @_lenet_fused_kernel(%arg0: i32, %arg1: memref<2x144x128xbf16, #tpu.memory_space<vmem>>, %arg2: memref<128x128xbf16, #tpu.memory_space<vmem>>, %arg3: memref<1x128xf32, #tpu.memory_space<vmem>>, %arg4: memref<13x256x128xbf16, #tpu.memory_space<vmem>>, %arg5: memref<1x128xf32, #tpu.memory_space<vmem>>, %arg6: memref<128x128xbf16, #tpu.memory_space<vmem>>, %arg7: memref<1x128xf32, #tpu.memory_space<vmem>>, %arg8: memref<128x128xbf16, #tpu.memory_space<vmem>>, %arg9: memref<1x128xf32, #tpu.memory_space<vmem>>, %arg10: memref<128x128xbf16, #tpu.memory_space<vmem>>, %arg11: memref<1x128xf32, #tpu.memory_space<vmem>>, %arg12: memref<2x128xf32, #tpu.memory_space<vmem>>) attributes {dimension_semantics = [#tpu.dimension_semantics<parallel>], iteration_bounds = array<i64: 1>, scalar_prefetch = 0 : i64, scratch_operands = 0 : i64, tpu.core_type = #tpu.core_type<tc>, window_params = [{transform_indices = @transform_0, window_bounds = array<i64: 2, 144, 128>}, {pipeline_mode = #tpu.pipeline_mode<synchronous>, transform_indices = @transform_1, window_bounds = array<i64: 128, 128>}, {pipeline_mode = #tpu.pipeline_mode<synchronous>, transform_indices = @transform_2, window_bounds = array<i64: 1, 128>}, {pipeline_mode = #tpu.pipeline_mode<synchronous>, transform_indices = @transform_3, window_bounds = array<i64: 13, 256, 128>}, {pipeline_mode = #tpu.pipeline_mode<synchronous>, transform_indices = @transform_4, window_bounds = array<i64: 1, 128>}, {pipeline_mode = #tpu.pipeline_mode<synchronous>, transform_indices = @transform_5, window_bounds = array<i64: 128, 128>}, {pipeline_mode = #tpu.pipeline_mode<synchronous>, transform_indices = @transform_6, window_bounds = array<i64: 1, 128>}, {pipeline_mode = #tpu.pipeline_mode<synchronous>, transform_indices = @transform_7, window_bounds = array<i64: 128, 128>}, {pipeline_mode = #tpu.pipeline_mode<synchronous>, transform_indices = @transform_8, window_bounds = array<i64: 1, 128>}, {pipeline_mode = #tpu.pipeline_mode<synchronous>, transform_indices = @transform_9, window_bounds = array<i64: 128, 128>}, {pipeline_mode = #tpu.pipeline_mode<synchronous>, transform_indices = @transform_10, window_bounds = array<i64: 1, 128>}, {transform_indices = @transform_11, window_bounds = array<i64: 2, 128>}]} {
    %c0 = arith.constant 0 : index
    %c0_0 = arith.constant 0 : index
    %c0_1 = arith.constant 0 : index
    %0 = vector.load %arg1[%c0, %c0_0, %c0_1] : memref<2x144x128xbf16, #tpu.memory_space<vmem>>, vector<2x144x128xbf16>
    %1 = vector.shape_cast %0 : vector<2x144x128xbf16> to vector<288x128xbf16>
    %c0_2 = arith.constant 0 : index
    %c0_3 = arith.constant 0 : index
    %2 = vector.load %arg2[%c0_2, %c0_3] : memref<128x128xbf16, #tpu.memory_space<vmem>>, vector<128x128xbf16>
    %cst = arith.constant dense<0.000000e+00> : vector<288x128xf32>
    %3 = tpu.matmul %1, %2, %cst {dimension_numbers = #tpu.dot_dimension_numbers<[1], [0], [0], [1], [0, 0, 1, 1], [], []>} : vector<288x128xbf16>, vector<128x128xbf16>, vector<288x128xf32> -> vector<288x128xf32>
    %c0_4 = arith.constant 0 : index
    %c0_5 = arith.constant 0 : index
    %4 = vector.load %arg3[%c0_4, %c0_5] : memref<1x128xf32, #tpu.memory_space<vmem>>, vector<1x128xf32>
    %5 = vector.broadcast %4 : vector<1x128xf32> to vector<288x128xf32>
    %6 = arith.addf %3, %5 : vector<288x128xf32>
    %cst_6 = arith.constant 0.000000e+00 : f32
    %7 = vector.broadcast %cst_6 : f32 to vector<288x128xf32>
    %8 = arith.maximumf %6, %7 : vector<288x128xf32>
    %9 = vector.shape_cast %8 : vector<288x128xf32> to vector<2x12x12x128xf32>
    %10 = vector.extract_strided_slice %9 {offsets = [0, 0, 0, 0], sizes = [2, 1, 12, 128], strides = [1, 1, 1, 1]} : vector<2x12x12x128xf32> to vector<2x1x12x128xf32>
    %11 = vector.extract_strided_slice %9 {offsets = [0, 1, 0, 0], sizes = [2, 1, 12, 128], strides = [1, 1, 1, 1]} : vector<2x12x12x128xf32> to vector<2x1x12x128xf32>
    %12 = arith.maximumf %10, %11 : vector<2x1x12x128xf32>
    %13 = vector.extract_strided_slice %9 {offsets = [0, 2, 0, 0], sizes = [2, 1, 12, 128], strides = [1, 1, 1, 1]} : vector<2x12x12x128xf32> to vector<2x1x12x128xf32>
    %14 = vector.extract_strided_slice %9 {offsets = [0, 3, 0, 0], sizes = [2, 1, 12, 128], strides = [1, 1, 1, 1]} : vector<2x12x12x128xf32> to vector<2x1x12x128xf32>
    %15 = arith.maximumf %13, %14 : vector<2x1x12x128xf32>
    %16 = vector.extract_strided_slice %9 {offsets = [0, 4, 0, 0], sizes = [2, 1, 12, 128], strides = [1, 1, 1, 1]} : vector<2x12x12x128xf32> to vector<2x1x12x128xf32>
    %17 = vector.extract_strided_slice %9 {offsets = [0, 5, 0, 0], sizes = [2, 1, 12, 128], strides = [1, 1, 1, 1]} : vector<2x12x12x128xf32> to vector<2x1x12x128xf32>
    %18 = arith.maximumf %16, %17 : vector<2x1x12x128xf32>
    %19 = vector.extract_strided_slice %9 {offsets = [0, 6, 0, 0], sizes = [2, 1, 12, 128], strides = [1, 1, 1, 1]} : vector<2x12x12x128xf32> to vector<2x1x12x128xf32>
    %20 = vector.extract_strided_slice %9 {offsets = [0, 7, 0, 0], sizes = [2, 1, 12, 128], strides = [1, 1, 1, 1]} : vector<2x12x12x128xf32> to vector<2x1x12x128xf32>
    %21 = arith.maximumf %19, %20 : vector<2x1x12x128xf32>
    %22 = vector.extract_strided_slice %9 {offsets = [0, 8, 0, 0], sizes = [2, 1, 12, 128], strides = [1, 1, 1, 1]} : vector<2x12x12x128xf32> to vector<2x1x12x128xf32>
    %23 = vector.extract_strided_slice %9 {offsets = [0, 9, 0, 0], sizes = [2, 1, 12, 128], strides = [1, 1, 1, 1]} : vector<2x12x12x128xf32> to vector<2x1x12x128xf32>
    %24 = arith.maximumf %22, %23 : vector<2x1x12x128xf32>
    %25 = vector.extract_strided_slice %9 {offsets = [0, 10, 0, 0], sizes = [2, 1, 12, 128], strides = [1, 1, 1, 1]} : vector<2x12x12x128xf32> to vector<2x1x12x128xf32>
    %26 = vector.extract_strided_slice %9 {offsets = [0, 11, 0, 0], sizes = [2, 1, 12, 128], strides = [1, 1, 1, 1]} : vector<2x12x12x128xf32> to vector<2x1x12x128xf32>
    %27 = arith.maximumf %25, %26 : vector<2x1x12x128xf32>
    %28 = tpu.concatenate %12, %15, %18, %21, %24, %27 in 1 : vector<2x1x12x128xf32>, vector<2x1x12x128xf32>, vector<2x1x12x128xf32>, vector<2x1x12x128xf32>, vector<2x1x12x128xf32>, vector<2x1x12x128xf32> -> vector<2x6x12x128xf32>
    %29 = vector.extract_strided_slice %28 {offsets = [0, 0, 0, 0], sizes = [2, 6, 1, 128], strides = [1, 1, 1, 1]} : vector<2x6x12x128xf32> to vector<2x6x1x128xf32>
    %30 = vector.extract_strided_slice %28 {offsets = [0, 0, 1, 0], sizes = [2, 6, 1, 128], strides = [1, 1, 1, 1]} : vector<2x6x12x128xf32> to vector<2x6x1x128xf32>
    %31 = arith.maximumf %29, %30 : vector<2x6x1x128xf32>
    %32 = vector.extract_strided_slice %28 {offsets = [0, 0, 2, 0], sizes = [2, 6, 1, 128], strides = [1, 1, 1, 1]} : vector<2x6x12x128xf32> to vector<2x6x1x128xf32>
    %33 = vector.extract_strided_slice %28 {offsets = [0, 0, 3, 0], sizes = [2, 6, 1, 128], strides = [1, 1, 1, 1]} : vector<2x6x12x128xf32> to vector<2x6x1x128xf32>
    %34 = arith.maximumf %32, %33 : vector<2x6x1x128xf32>
    %35 = vector.extract_strided_slice %28 {offsets = [0, 0, 4, 0], sizes = [2, 6, 1, 128], strides = [1, 1, 1, 1]} : vector<2x6x12x128xf32> to vector<2x6x1x128xf32>
    %36 = vector.extract_strided_slice %28 {offsets = [0, 0, 5, 0], sizes = [2, 6, 1, 128], strides = [1, 1, 1, 1]} : vector<2x6x12x128xf32> to vector<2x6x1x128xf32>
    %37 = arith.maximumf %35, %36 : vector<2x6x1x128xf32>
    %38 = vector.extract_strided_slice %28 {offsets = [0, 0, 6, 0], sizes = [2, 6, 1, 128], strides = [1, 1, 1, 1]} : vector<2x6x12x128xf32> to vector<2x6x1x128xf32>
    %39 = vector.extract_strided_slice %28 {offsets = [0, 0, 7, 0], sizes = [2, 6, 1, 128], strides = [1, 1, 1, 1]} : vector<2x6x12x128xf32> to vector<2x6x1x128xf32>
    %40 = arith.maximumf %38, %39 : vector<2x6x1x128xf32>
    %41 = vector.extract_strided_slice %28 {offsets = [0, 0, 8, 0], sizes = [2, 6, 1, 128], strides = [1, 1, 1, 1]} : vector<2x6x12x128xf32> to vector<2x6x1x128xf32>
    %42 = vector.extract_strided_slice %28 {offsets = [0, 0, 9, 0], sizes = [2, 6, 1, 128], strides = [1, 1, 1, 1]} : vector<2x6x12x128xf32> to vector<2x6x1x128xf32>
    %43 = arith.maximumf %41, %42 : vector<2x6x1x128xf32>
    %44 = vector.extract_strided_slice %28 {offsets = [0, 0, 10, 0], sizes = [2, 6, 1, 128], strides = [1, 1, 1, 1]} : vector<2x6x12x128xf32> to vector<2x6x1x128xf32>
    %45 = vector.extract_strided_slice %28 {offsets = [0, 0, 11, 0], sizes = [2, 6, 1, 128], strides = [1, 1, 1, 1]} : vector<2x6x12x128xf32> to vector<2x6x1x128xf32>
    %46 = arith.maximumf %44, %45 : vector<2x6x1x128xf32>
    %47 = tpu.concatenate %31, %34, %37, %40, %43, %46 in 2 : vector<2x6x1x128xf32>, vector<2x6x1x128xf32>, vector<2x6x1x128xf32>, vector<2x6x1x128xf32>, vector<2x6x1x128xf32>, vector<2x6x1x128xf32> -> vector<2x6x6x128xf32>
    %cst_7 = arith.constant 0.000000e+00 : f32
    %48 = vector.broadcast %cst_7 : f32 to vector<8x128xf32>
    %49 = vector.extract_strided_slice %47 {offsets = [0, 0, 0, 0], sizes = [2, 2, 2, 128], strides = [1, 1, 1, 1]} : vector<2x6x6x128xf32> to vector<2x2x2x128xf32>
    %50 = vector.shape_cast %49 : vector<2x2x2x128xf32> to vector<8x128xf32>
    %51 = vector.extract_strided_slice %47 {offsets = [0, 0, 1, 0], sizes = [2, 2, 2, 128], strides = [1, 1, 1, 1]} : vector<2x6x6x128xf32> to vector<2x2x2x128xf32>
    %52 = vector.shape_cast %51 : vector<2x2x2x128xf32> to vector<8x128xf32>
    %53 = tpu.concatenate %50, %52 in 1 : vector<8x128xf32>, vector<8x128xf32> -> vector<8x256xf32>
    %54 = arith.truncf %53 : vector<8x256xf32> to vector<8x256xbf16>
    %c0_8 = arith.constant 0 : index
    %c0_9 = arith.constant 0 : index
    %c0_10 = arith.constant 0 : index
    %55 = vector.load %arg4[%c0_8, %c0_9, %c0_10] : memref<13x256x128xbf16, #tpu.memory_space<vmem>>, vector<1x256x128xbf16>
    %56 = vector.shape_cast %55 : vector<1x256x128xbf16> to vector<256x128xbf16>
    %cst_11 = arith.constant dense<0.000000e+00> : vector<8x128xf32>
    %57 = tpu.matmul %54, %56, %cst_11 {dimension_numbers = #tpu.dot_dimension_numbers<[1], [0], [0], [1], [0, 0, 1, 1], [], []>} : vector<8x256xbf16>, vector<256x128xbf16>, vector<8x128xf32> -> vector<8x128xf32>
    %58 = arith.addf %48, %57 : vector<8x128xf32>
    %59 = vector.extract_strided_slice %47 {offsets = [0, 0, 2, 0], sizes = [2, 2, 2, 128], strides = [1, 1, 1, 1]} : vector<2x6x6x128xf32> to vector<2x2x2x128xf32>
    %60 = vector.shape_cast %59 : vector<2x2x2x128xf32> to vector<8x128xf32>
    %61 = vector.extract_strided_slice %47 {offsets = [0, 0, 3, 0], sizes = [2, 2, 2, 128], strides = [1, 1, 1, 1]} : vector<2x6x6x128xf32> to vector<2x2x2x128xf32>
    %62 = vector.shape_cast %61 : vector<2x2x2x128xf32> to vector<8x128xf32>
    %63 = tpu.concatenate %60, %62 in 1 : vector<8x128xf32>, vector<8x128xf32> -> vector<8x256xf32>
    %64 = arith.truncf %63 : vector<8x256xf32> to vector<8x256xbf16>
    %c1 = arith.constant 1 : index
    %c0_12 = arith.constant 0 : index
    %c0_13 = arith.constant 0 : index
    %65 = vector.load %arg4[%c1, %c0_12, %c0_13] : memref<13x256x128xbf16, #tpu.memory_space<vmem>>, vector<1x256x128xbf16>
    %66 = vector.shape_cast %65 : vector<1x256x128xbf16> to vector<256x128xbf16>
    %cst_14 = arith.constant dense<0.000000e+00> : vector<8x128xf32>
    %67 = tpu.matmul %64, %66, %cst_14 {dimension_numbers = #tpu.dot_dimension_numbers<[1], [0], [0], [1], [0, 0, 1, 1], [], []>} : vector<8x256xbf16>, vector<256x128xbf16>, vector<8x128xf32> -> vector<8x128xf32>
    %68 = arith.addf %58, %67 : vector<8x128xf32>
    %69 = vector.extract_strided_slice %47 {offsets = [0, 0, 4, 0], sizes = [2, 2, 2, 128], strides = [1, 1, 1, 1]} : vector<2x6x6x128xf32> to vector<2x2x2x128xf32>
    %70 = vector.shape_cast %69 : vector<2x2x2x128xf32> to vector<8x128xf32>
    %71 = vector.extract_strided_slice %47 {offsets = [0, 1, 0, 0], sizes = [2, 2, 2, 128], strides = [1, 1, 1, 1]} : vector<2x6x6x128xf32> to vector<2x2x2x128xf32>
    %72 = vector.shape_cast %71 : vector<2x2x2x128xf32> to vector<8x128xf32>
    %73 = tpu.concatenate %70, %72 in 1 : vector<8x128xf32>, vector<8x128xf32> -> vector<8x256xf32>
    %74 = arith.truncf %73 : vector<8x256xf32> to vector<8x256xbf16>
    %c2 = arith.constant 2 : index
    %c0_15 = arith.constant 0 : index
    %c0_16 = arith.constant 0 : index
    %75 = vector.load %arg4[%c2, %c0_15, %c0_16] : memref<13x256x128xbf16, #tpu.memory_space<vmem>>, vector<1x256x128xbf16>
    %76 = vector.shape_cast %75 : vector<1x256x128xbf16> to vector<256x128xbf16>
    %cst_17 = arith.constant dense<0.000000e+00> : vector<8x128xf32>
    %77 = tpu.matmul %74, %76, %cst_17 {dimension_numbers = #tpu.dot_dimension_numbers<[1], [0], [0], [1], [0, 0, 1, 1], [], []>} : vector<8x256xbf16>, vector<256x128xbf16>, vector<8x128xf32> -> vector<8x128xf32>
    %78 = arith.addf %68, %77 : vector<8x128xf32>
    %79 = vector.extract_strided_slice %47 {offsets = [0, 1, 1, 0], sizes = [2, 2, 2, 128], strides = [1, 1, 1, 1]} : vector<2x6x6x128xf32> to vector<2x2x2x128xf32>
    %80 = vector.shape_cast %79 : vector<2x2x2x128xf32> to vector<8x128xf32>
    %81 = vector.extract_strided_slice %47 {offsets = [0, 1, 2, 0], sizes = [2, 2, 2, 128], strides = [1, 1, 1, 1]} : vector<2x6x6x128xf32> to vector<2x2x2x128xf32>
    %82 = vector.shape_cast %81 : vector<2x2x2x128xf32> to vector<8x128xf32>
    %83 = tpu.concatenate %80, %82 in 1 : vector<8x128xf32>, vector<8x128xf32> -> vector<8x256xf32>
    %84 = arith.truncf %83 : vector<8x256xf32> to vector<8x256xbf16>
    %c3 = arith.constant 3 : index
    %c0_18 = arith.constant 0 : index
    %c0_19 = arith.constant 0 : index
    %85 = vector.load %arg4[%c3, %c0_18, %c0_19] : memref<13x256x128xbf16, #tpu.memory_space<vmem>>, vector<1x256x128xbf16>
    %86 = vector.shape_cast %85 : vector<1x256x128xbf16> to vector<256x128xbf16>
    %cst_20 = arith.constant dense<0.000000e+00> : vector<8x128xf32>
    %87 = tpu.matmul %84, %86, %cst_20 {dimension_numbers = #tpu.dot_dimension_numbers<[1], [0], [0], [1], [0, 0, 1, 1], [], []>} : vector<8x256xbf16>, vector<256x128xbf16>, vector<8x128xf32> -> vector<8x128xf32>
    %88 = arith.addf %78, %87 : vector<8x128xf32>
    %89 = vector.extract_strided_slice %47 {offsets = [0, 1, 3, 0], sizes = [2, 2, 2, 128], strides = [1, 1, 1, 1]} : vector<2x6x6x128xf32> to vector<2x2x2x128xf32>
    %90 = vector.shape_cast %89 : vector<2x2x2x128xf32> to vector<8x128xf32>
    %91 = vector.extract_strided_slice %47 {offsets = [0, 1, 4, 0], sizes = [2, 2, 2, 128], strides = [1, 1, 1, 1]} : vector<2x6x6x128xf32> to vector<2x2x2x128xf32>
    %92 = vector.shape_cast %91 : vector<2x2x2x128xf32> to vector<8x128xf32>
    %93 = tpu.concatenate %90, %92 in 1 : vector<8x128xf32>, vector<8x128xf32> -> vector<8x256xf32>
    %94 = arith.truncf %93 : vector<8x256xf32> to vector<8x256xbf16>
    %c4 = arith.constant 4 : index
    %c0_21 = arith.constant 0 : index
    %c0_22 = arith.constant 0 : index
    %95 = vector.load %arg4[%c4, %c0_21, %c0_22] : memref<13x256x128xbf16, #tpu.memory_space<vmem>>, vector<1x256x128xbf16>
    %96 = vector.shape_cast %95 : vector<1x256x128xbf16> to vector<256x128xbf16>
    %cst_23 = arith.constant dense<0.000000e+00> : vector<8x128xf32>
    %97 = tpu.matmul %94, %96, %cst_23 {dimension_numbers = #tpu.dot_dimension_numbers<[1], [0], [0], [1], [0, 0, 1, 1], [], []>} : vector<8x256xbf16>, vector<256x128xbf16>, vector<8x128xf32> -> vector<8x128xf32>
    %98 = arith.addf %88, %97 : vector<8x128xf32>
    %99 = vector.extract_strided_slice %47 {offsets = [0, 2, 0, 0], sizes = [2, 2, 2, 128], strides = [1, 1, 1, 1]} : vector<2x6x6x128xf32> to vector<2x2x2x128xf32>
    %100 = vector.shape_cast %99 : vector<2x2x2x128xf32> to vector<8x128xf32>
    %101 = vector.extract_strided_slice %47 {offsets = [0, 2, 1, 0], sizes = [2, 2, 2, 128], strides = [1, 1, 1, 1]} : vector<2x6x6x128xf32> to vector<2x2x2x128xf32>
    %102 = vector.shape_cast %101 : vector<2x2x2x128xf32> to vector<8x128xf32>
    %103 = tpu.concatenate %100, %102 in 1 : vector<8x128xf32>, vector<8x128xf32> -> vector<8x256xf32>
    %104 = arith.truncf %103 : vector<8x256xf32> to vector<8x256xbf16>
    %c5 = arith.constant 5 : index
    %c0_24 = arith.constant 0 : index
    %c0_25 = arith.constant 0 : index
    %105 = vector.load %arg4[%c5, %c0_24, %c0_25] : memref<13x256x128xbf16, #tpu.memory_space<vmem>>, vector<1x256x128xbf16>
    %106 = vector.shape_cast %105 : vector<1x256x128xbf16> to vector<256x128xbf16>
    %cst_26 = arith.constant dense<0.000000e+00> : vector<8x128xf32>
    %107 = tpu.matmul %104, %106, %cst_26 {dimension_numbers = #tpu.dot_dimension_numbers<[1], [0], [0], [1], [0, 0, 1, 1], [], []>} : vector<8x256xbf16>, vector<256x128xbf16>, vector<8x128xf32> -> vector<8x128xf32>
    %108 = arith.addf %98, %107 : vector<8x128xf32>
    %109 = vector.extract_strided_slice %47 {offsets = [0, 2, 2, 0], sizes = [2, 2, 2, 128], strides = [1, 1, 1, 1]} : vector<2x6x6x128xf32> to vector<2x2x2x128xf32>
    %110 = vector.shape_cast %109 : vector<2x2x2x128xf32> to vector<8x128xf32>
    %111 = vector.extract_strided_slice %47 {offsets = [0, 2, 3, 0], sizes = [2, 2, 2, 128], strides = [1, 1, 1, 1]} : vector<2x6x6x128xf32> to vector<2x2x2x128xf32>
    %112 = vector.shape_cast %111 : vector<2x2x2x128xf32> to vector<8x128xf32>
    %113 = tpu.concatenate %110, %112 in 1 : vector<8x128xf32>, vector<8x128xf32> -> vector<8x256xf32>
    %114 = arith.truncf %113 : vector<8x256xf32> to vector<8x256xbf16>
    %c6 = arith.constant 6 : index
    %c0_27 = arith.constant 0 : index
    %c0_28 = arith.constant 0 : index
    %115 = vector.load %arg4[%c6, %c0_27, %c0_28] : memref<13x256x128xbf16, #tpu.memory_space<vmem>>, vector<1x256x128xbf16>
    %116 = vector.shape_cast %115 : vector<1x256x128xbf16> to vector<256x128xbf16>
    %cst_29 = arith.constant dense<0.000000e+00> : vector<8x128xf32>
    %117 = tpu.matmul %114, %116, %cst_29 {dimension_numbers = #tpu.dot_dimension_numbers<[1], [0], [0], [1], [0, 0, 1, 1], [], []>} : vector<8x256xbf16>, vector<256x128xbf16>, vector<8x128xf32> -> vector<8x128xf32>
    %118 = arith.addf %108, %117 : vector<8x128xf32>
    %119 = vector.extract_strided_slice %47 {offsets = [0, 2, 4, 0], sizes = [2, 2, 2, 128], strides = [1, 1, 1, 1]} : vector<2x6x6x128xf32> to vector<2x2x2x128xf32>
    %120 = vector.shape_cast %119 : vector<2x2x2x128xf32> to vector<8x128xf32>
    %121 = vector.extract_strided_slice %47 {offsets = [0, 3, 0, 0], sizes = [2, 2, 2, 128], strides = [1, 1, 1, 1]} : vector<2x6x6x128xf32> to vector<2x2x2x128xf32>
    %122 = vector.shape_cast %121 : vector<2x2x2x128xf32> to vector<8x128xf32>
    %123 = tpu.concatenate %120, %122 in 1 : vector<8x128xf32>, vector<8x128xf32> -> vector<8x256xf32>
    %124 = arith.truncf %123 : vector<8x256xf32> to vector<8x256xbf16>
    %c7 = arith.constant 7 : index
    %c0_30 = arith.constant 0 : index
    %c0_31 = arith.constant 0 : index
    %125 = vector.load %arg4[%c7, %c0_30, %c0_31] : memref<13x256x128xbf16, #tpu.memory_space<vmem>>, vector<1x256x128xbf16>
    %126 = vector.shape_cast %125 : vector<1x256x128xbf16> to vector<256x128xbf16>
    %cst_32 = arith.constant dense<0.000000e+00> : vector<8x128xf32>
    %127 = tpu.matmul %124, %126, %cst_32 {dimension_numbers = #tpu.dot_dimension_numbers<[1], [0], [0], [1], [0, 0, 1, 1], [], []>} : vector<8x256xbf16>, vector<256x128xbf16>, vector<8x128xf32> -> vector<8x128xf32>
    %128 = arith.addf %118, %127 : vector<8x128xf32>
    %129 = vector.extract_strided_slice %47 {offsets = [0, 3, 1, 0], sizes = [2, 2, 2, 128], strides = [1, 1, 1, 1]} : vector<2x6x6x128xf32> to vector<2x2x2x128xf32>
    %130 = vector.shape_cast %129 : vector<2x2x2x128xf32> to vector<8x128xf32>
    %131 = vector.extract_strided_slice %47 {offsets = [0, 3, 2, 0], sizes = [2, 2, 2, 128], strides = [1, 1, 1, 1]} : vector<2x6x6x128xf32> to vector<2x2x2x128xf32>
    %132 = vector.shape_cast %131 : vector<2x2x2x128xf32> to vector<8x128xf32>
    %133 = tpu.concatenate %130, %132 in 1 : vector<8x128xf32>, vector<8x128xf32> -> vector<8x256xf32>
    %134 = arith.truncf %133 : vector<8x256xf32> to vector<8x256xbf16>
    %c8 = arith.constant 8 : index
    %c0_33 = arith.constant 0 : index
    %c0_34 = arith.constant 0 : index
    %135 = vector.load %arg4[%c8, %c0_33, %c0_34] : memref<13x256x128xbf16, #tpu.memory_space<vmem>>, vector<1x256x128xbf16>
    %136 = vector.shape_cast %135 : vector<1x256x128xbf16> to vector<256x128xbf16>
    %cst_35 = arith.constant dense<0.000000e+00> : vector<8x128xf32>
    %137 = tpu.matmul %134, %136, %cst_35 {dimension_numbers = #tpu.dot_dimension_numbers<[1], [0], [0], [1], [0, 0, 1, 1], [], []>} : vector<8x256xbf16>, vector<256x128xbf16>, vector<8x128xf32> -> vector<8x128xf32>
    %138 = arith.addf %128, %137 : vector<8x128xf32>
    %139 = vector.extract_strided_slice %47 {offsets = [0, 3, 3, 0], sizes = [2, 2, 2, 128], strides = [1, 1, 1, 1]} : vector<2x6x6x128xf32> to vector<2x2x2x128xf32>
    %140 = vector.shape_cast %139 : vector<2x2x2x128xf32> to vector<8x128xf32>
    %141 = vector.extract_strided_slice %47 {offsets = [0, 3, 4, 0], sizes = [2, 2, 2, 128], strides = [1, 1, 1, 1]} : vector<2x6x6x128xf32> to vector<2x2x2x128xf32>
    %142 = vector.shape_cast %141 : vector<2x2x2x128xf32> to vector<8x128xf32>
    %143 = tpu.concatenate %140, %142 in 1 : vector<8x128xf32>, vector<8x128xf32> -> vector<8x256xf32>
    %144 = arith.truncf %143 : vector<8x256xf32> to vector<8x256xbf16>
    %c9 = arith.constant 9 : index
    %c0_36 = arith.constant 0 : index
    %c0_37 = arith.constant 0 : index
    %145 = vector.load %arg4[%c9, %c0_36, %c0_37] : memref<13x256x128xbf16, #tpu.memory_space<vmem>>, vector<1x256x128xbf16>
    %146 = vector.shape_cast %145 : vector<1x256x128xbf16> to vector<256x128xbf16>
    %cst_38 = arith.constant dense<0.000000e+00> : vector<8x128xf32>
    %147 = tpu.matmul %144, %146, %cst_38 {dimension_numbers = #tpu.dot_dimension_numbers<[1], [0], [0], [1], [0, 0, 1, 1], [], []>} : vector<8x256xbf16>, vector<256x128xbf16>, vector<8x128xf32> -> vector<8x128xf32>
    %148 = arith.addf %138, %147 : vector<8x128xf32>
    %149 = vector.extract_strided_slice %47 {offsets = [0, 4, 0, 0], sizes = [2, 2, 2, 128], strides = [1, 1, 1, 1]} : vector<2x6x6x128xf32> to vector<2x2x2x128xf32>
    %150 = vector.shape_cast %149 : vector<2x2x2x128xf32> to vector<8x128xf32>
    %151 = vector.extract_strided_slice %47 {offsets = [0, 4, 1, 0], sizes = [2, 2, 2, 128], strides = [1, 1, 1, 1]} : vector<2x6x6x128xf32> to vector<2x2x2x128xf32>
    %152 = vector.shape_cast %151 : vector<2x2x2x128xf32> to vector<8x128xf32>
    %153 = tpu.concatenate %150, %152 in 1 : vector<8x128xf32>, vector<8x128xf32> -> vector<8x256xf32>
    %154 = arith.truncf %153 : vector<8x256xf32> to vector<8x256xbf16>
    %c10 = arith.constant 10 : index
    %c0_39 = arith.constant 0 : index
    %c0_40 = arith.constant 0 : index
    %155 = vector.load %arg4[%c10, %c0_39, %c0_40] : memref<13x256x128xbf16, #tpu.memory_space<vmem>>, vector<1x256x128xbf16>
    %156 = vector.shape_cast %155 : vector<1x256x128xbf16> to vector<256x128xbf16>
    %cst_41 = arith.constant dense<0.000000e+00> : vector<8x128xf32>
    %157 = tpu.matmul %154, %156, %cst_41 {dimension_numbers = #tpu.dot_dimension_numbers<[1], [0], [0], [1], [0, 0, 1, 1], [], []>} : vector<8x256xbf16>, vector<256x128xbf16>, vector<8x128xf32> -> vector<8x128xf32>
    %158 = arith.addf %148, %157 : vector<8x128xf32>
    %159 = vector.extract_strided_slice %47 {offsets = [0, 4, 2, 0], sizes = [2, 2, 2, 128], strides = [1, 1, 1, 1]} : vector<2x6x6x128xf32> to vector<2x2x2x128xf32>
    %160 = vector.shape_cast %159 : vector<2x2x2x128xf32> to vector<8x128xf32>
    %161 = vector.extract_strided_slice %47 {offsets = [0, 4, 3, 0], sizes = [2, 2, 2, 128], strides = [1, 1, 1, 1]} : vector<2x6x6x128xf32> to vector<2x2x2x128xf32>
    %162 = vector.shape_cast %161 : vector<2x2x2x128xf32> to vector<8x128xf32>
    %163 = tpu.concatenate %160, %162 in 1 : vector<8x128xf32>, vector<8x128xf32> -> vector<8x256xf32>
    %164 = arith.truncf %163 : vector<8x256xf32> to vector<8x256xbf16>
    %c11 = arith.constant 11 : index
    %c0_42 = arith.constant 0 : index
    %c0_43 = arith.constant 0 : index
    %165 = vector.load %arg4[%c11, %c0_42, %c0_43] : memref<13x256x128xbf16, #tpu.memory_space<vmem>>, vector<1x256x128xbf16>
    %166 = vector.shape_cast %165 : vector<1x256x128xbf16> to vector<256x128xbf16>
    %cst_44 = arith.constant dense<0.000000e+00> : vector<8x128xf32>
    %167 = tpu.matmul %164, %166, %cst_44 {dimension_numbers = #tpu.dot_dimension_numbers<[1], [0], [0], [1], [0, 0, 1, 1], [], []>} : vector<8x256xbf16>, vector<256x128xbf16>, vector<8x128xf32> -> vector<8x128xf32>
    %168 = arith.addf %158, %167 : vector<8x128xf32>
    %169 = vector.extract_strided_slice %47 {offsets = [0, 4, 4, 0], sizes = [2, 2, 2, 128], strides = [1, 1, 1, 1]} : vector<2x6x6x128xf32> to vector<2x2x2x128xf32>
    %170 = vector.shape_cast %169 : vector<2x2x2x128xf32> to vector<8x128xf32>
    %171 = vector.extract_strided_slice %47 {offsets = [0, 4, 4, 0], sizes = [2, 2, 2, 128], strides = [1, 1, 1, 1]} : vector<2x6x6x128xf32> to vector<2x2x2x128xf32>
    %172 = vector.shape_cast %171 : vector<2x2x2x128xf32> to vector<8x128xf32>
    %173 = tpu.concatenate %170, %172 in 1 : vector<8x128xf32>, vector<8x128xf32> -> vector<8x256xf32>
    %174 = arith.truncf %173 : vector<8x256xf32> to vector<8x256xbf16>
    %c12 = arith.constant 12 : index
    %c0_45 = arith.constant 0 : index
    %c0_46 = arith.constant 0 : index
    %175 = vector.load %arg4[%c12, %c0_45, %c0_46] : memref<13x256x128xbf16, #tpu.memory_space<vmem>>, vector<1x256x128xbf16>
    %176 = vector.shape_cast %175 : vector<1x256x128xbf16> to vector<256x128xbf16>
    %cst_47 = arith.constant dense<0.000000e+00> : vector<8x128xf32>
    %177 = tpu.matmul %174, %176, %cst_47 {dimension_numbers = #tpu.dot_dimension_numbers<[1], [0], [0], [1], [0, 0, 1, 1], [], []>} : vector<8x256xbf16>, vector<256x128xbf16>, vector<8x128xf32> -> vector<8x128xf32>
    %178 = arith.addf %168, %177 : vector<8x128xf32>
    %c0_48 = arith.constant 0 : index
    %c0_49 = arith.constant 0 : index
    %179 = vector.load %arg5[%c0_48, %c0_49] : memref<1x128xf32, #tpu.memory_space<vmem>>, vector<1x128xf32>
    %180 = vector.broadcast %179 : vector<1x128xf32> to vector<8x128xf32>
    %181 = arith.addf %178, %180 : vector<8x128xf32>
    %cst_50 = arith.constant 0.000000e+00 : f32
    %182 = vector.broadcast %cst_50 : f32 to vector<8x128xf32>
    %183 = arith.maximumf %181, %182 : vector<8x128xf32>
    %184 = vector.shape_cast %183 : vector<8x128xf32> to vector<2x2x2x128xf32>
    %185 = vector.extract_strided_slice %184 {offsets = [0, 0, 0, 0], sizes = [2, 1, 2, 128], strides = [1, 1, 1, 1]} : vector<2x2x2x128xf32> to vector<2x1x2x128xf32>
    %186 = vector.extract_strided_slice %184 {offsets = [0, 1, 0, 0], sizes = [2, 1, 2, 128], strides = [1, 1, 1, 1]} : vector<2x2x2x128xf32> to vector<2x1x2x128xf32>
    %187 = arith.maximumf %185, %186 : vector<2x1x2x128xf32>
    %188 = vector.extract_strided_slice %187 {offsets = [0, 0, 0, 0], sizes = [2, 1, 1, 128], strides = [1, 1, 1, 1]} : vector<2x1x2x128xf32> to vector<2x1x1x128xf32>
    %189 = vector.extract_strided_slice %187 {offsets = [0, 0, 1, 0], sizes = [2, 1, 1, 128], strides = [1, 1, 1, 1]} : vector<2x1x2x128xf32> to vector<2x1x1x128xf32>
    %190 = arith.maximumf %188, %189 : vector<2x1x1x128xf32>
    %191 = vector.shape_cast %190 : vector<2x1x1x128xf32> to vector<2x128xf32>
    %192 = arith.truncf %191 : vector<2x128xf32> to vector<2x128xbf16>
    %c0_51 = arith.constant 0 : index
    %c0_52 = arith.constant 0 : index
    %193 = vector.load %arg6[%c0_51, %c0_52] : memref<128x128xbf16, #tpu.memory_space<vmem>>, vector<128x128xbf16>
    %cst_53 = arith.constant dense<0.000000e+00> : vector<2x128xf32>
    %194 = tpu.matmul %192, %193, %cst_53 {dimension_numbers = #tpu.dot_dimension_numbers<[1], [0], [0], [1], [0, 0, 1, 1], [], []>} : vector<2x128xbf16>, vector<128x128xbf16>, vector<2x128xf32> -> vector<2x128xf32>
    %c0_54 = arith.constant 0 : index
    %c0_55 = arith.constant 0 : index
    %195 = vector.load %arg7[%c0_54, %c0_55] : memref<1x128xf32, #tpu.memory_space<vmem>>, vector<1x128xf32>
    %196 = vector.broadcast %195 : vector<1x128xf32> to vector<2x128xf32>
    %197 = arith.addf %194, %196 : vector<2x128xf32>
    %cst_56 = arith.constant 0.000000e+00 : f32
    %198 = vector.broadcast %cst_56 : f32 to vector<2x128xf32>
    %199 = arith.maximumf %197, %198 : vector<2x128xf32>
    %200 = arith.truncf %199 : vector<2x128xf32> to vector<2x128xbf16>
    %c0_57 = arith.constant 0 : index
    %c0_58 = arith.constant 0 : index
    %201 = vector.load %arg8[%c0_57, %c0_58] : memref<128x128xbf16, #tpu.memory_space<vmem>>, vector<128x128xbf16>
    %cst_59 = arith.constant dense<0.000000e+00> : vector<2x128xf32>
    %202 = tpu.matmul %200, %201, %cst_59 {dimension_numbers = #tpu.dot_dimension_numbers<[1], [0], [0], [1], [0, 0, 1, 1], [], []>} : vector<2x128xbf16>, vector<128x128xbf16>, vector<2x128xf32> -> vector<2x128xf32>
    %c0_60 = arith.constant 0 : index
    %c0_61 = arith.constant 0 : index
    %203 = vector.load %arg9[%c0_60, %c0_61] : memref<1x128xf32, #tpu.memory_space<vmem>>, vector<1x128xf32>
    %204 = vector.broadcast %203 : vector<1x128xf32> to vector<2x128xf32>
    %205 = arith.addf %202, %204 : vector<2x128xf32>
    %cst_62 = arith.constant 0.000000e+00 : f32
    %206 = vector.broadcast %cst_62 : f32 to vector<2x128xf32>
    %207 = arith.maximumf %205, %206 : vector<2x128xf32>
    %208 = arith.truncf %207 : vector<2x128xf32> to vector<2x128xbf16>
    %c0_63 = arith.constant 0 : index
    %c0_64 = arith.constant 0 : index
    %209 = vector.load %arg10[%c0_63, %c0_64] : memref<128x128xbf16, #tpu.memory_space<vmem>>, vector<128x128xbf16>
    %cst_65 = arith.constant dense<0.000000e+00> : vector<2x128xf32>
    %210 = tpu.matmul %208, %209, %cst_65 {dimension_numbers = #tpu.dot_dimension_numbers<[1], [0], [0], [1], [0, 0, 1, 1], [], []>} : vector<2x128xbf16>, vector<128x128xbf16>, vector<2x128xf32> -> vector<2x128xf32>
    %c0_66 = arith.constant 0 : index
    %c0_67 = arith.constant 0 : index
    %211 = vector.load %arg11[%c0_66, %c0_67] : memref<1x128xf32, #tpu.memory_space<vmem>>, vector<1x128xf32>
    %212 = vector.broadcast %211 : vector<1x128xf32> to vector<2x128xf32>
    %213 = arith.addf %210, %212 : vector<2x128xf32>
    %c0_68 = arith.constant 0 : index
    %c0_69 = arith.constant 0 : index
    %214 = vector.load %arg12[%c0_68, %c0_69] : memref<2x128xf32, #tpu.memory_space<vmem>>, vector<2x128xf32>
    tpu.vector_store %arg12[%c0_68, %c0_69], %213 {strides = array<i32>} : memref<2x128xf32, #tpu.memory_space<vmem>>, vector<2x128xf32>,
    return
  }
  func.func @transform_0(%arg0: i32) -> (i32, i32, i32) {
    %c0_i32 = arith.constant 0 : i32
    %c0_i32_0 = arith.constant 0 : i32
    %c0_i32_1 = arith.constant 0 : i32
    return %arg0, %c0_i32, %c0_i32_0 : i32, i32, i32
  }
  func.func @transform_1(%arg0: i32) -> (i32, i32) {
    %c0_i32 = arith.constant 0 : i32
    %c0_i32_0 = arith.constant 0 : i32
    %c0_i32_1 = arith.constant 0 : i32
    return %c0_i32, %c0_i32_0 : i32, i32
  }
  func.func @transform_2(%arg0: i32) -> (i32, i32) {
    %c0_i32 = arith.constant 0 : i32
    %c0_i32_0 = arith.constant 0 : i32
    %c0_i32_1 = arith.constant 0 : i32
    return %c0_i32, %c0_i32_0 : i32, i32
  }
  func.func @transform_3(%arg0: i32) -> (i32, i32, i32) {
    %c0_i32 = arith.constant 0 : i32
    %c0_i32_0 = arith.constant 0 : i32
    %c0_i32_1 = arith.constant 0 : i32
    %c0_i32_2 = arith.constant 0 : i32
    return %c0_i32, %c0_i32_0, %c0_i32_1 : i32, i32, i32
  }
  func.func @transform_4(%arg0: i32) -> (i32, i32) {
    %c0_i32 = arith.constant 0 : i32
    %c0_i32_0 = arith.constant 0 : i32
    %c0_i32_1 = arith.constant 0 : i32
    return %c0_i32, %c0_i32_0 : i32, i32
  }
  func.func @transform_5(%arg0: i32) -> (i32, i32) {
    %c0_i32 = arith.constant 0 : i32
    %c0_i32_0 = arith.constant 0 : i32
    %c0_i32_1 = arith.constant 0 : i32
    return %c0_i32, %c0_i32_0 : i32, i32
  }
  func.func @transform_6(%arg0: i32) -> (i32, i32) {
    %c0_i32 = arith.constant 0 : i32
    %c0_i32_0 = arith.constant 0 : i32
    %c0_i32_1 = arith.constant 0 : i32
    return %c0_i32, %c0_i32_0 : i32, i32
  }
  func.func @transform_7(%arg0: i32) -> (i32, i32) {
    %c0_i32 = arith.constant 0 : i32
    %c0_i32_0 = arith.constant 0 : i32
    %c0_i32_1 = arith.constant 0 : i32
    return %c0_i32, %c0_i32_0 : i32, i32
  }
  func.func @transform_8(%arg0: i32) -> (i32, i32) {
    %c0_i32 = arith.constant 0 : i32
    %c0_i32_0 = arith.constant 0 : i32
    %c0_i32_1 = arith.constant 0 : i32
    return %c0_i32, %c0_i32_0 : i32, i32
  }
  func.func @transform_9(%arg0: i32) -> (i32, i32) {
    %c0_i32 = arith.constant 0 : i32
    %c0_i32_0 = arith.constant 0 : i32
    %c0_i32_1 = arith.constant 0 : i32
    return %c0_i32, %c0_i32_0 : i32, i32
  }
  func.func @transform_10(%arg0: i32) -> (i32, i32) {
    %c0_i32 = arith.constant 0 : i32
    %c0_i32_0 = arith.constant 0 : i32
    %c0_i32_1 = arith.constant 0 : i32
    return %c0_i32, %c0_i32_0 : i32, i32
  }
  func.func @transform_11(%arg0: i32) -> (i32, i32) {
    %c0_i32 = arith.constant 0 : i32
    %c0_i32_0 = arith.constant 0 : i32
    return %arg0, %c0_i32 : i32, i32
  }
}

</mosaic_0001>

<llo_original>
// kernel: lenet_forward.1
$region0: #{lenet_forward.1}
  #allocation0 [shape = 'u32[]', space=smem, size = 0x4, offset = 0x4, fixed_abs, tag = 'smem constant byte address 0x4 - core index']
  #allocation1 [shape = 'u32[144,128]{1,0:T(1,128)}', space=vmem, size = 0x12000, scoped, tag = 'internal scratch']
  %s0 = inlined_call_operand.vmem [shape: bf16[2,144,128], index: 0, kind: input, shape index: {}]
  %s1 = inlined_call_operand.vmem [shape: bf16[128,128], index: 1, kind: input, shape index: {}]
  %s2 = inlined_call_operand.vmem [shape: f32[1,128], index: 2, kind: input, shape index: {}]
  %s3 = inlined_call_operand.vmem [shape: bf16[13,256,128], index: 3, kind: input, shape index: {}]
  %s4 = inlined_call_operand.vmem [shape: f32[1,128], index: 4, kind: input, shape index: {}]
  %s5 = inlined_call_operand.vmem [shape: bf16[128,128], index: 5, kind: input, shape index: {}]
  %s6 = inlined_call_operand.vmem [shape: f32[1,128], index: 6, kind: input, shape index: {}]
  %s7 = inlined_call_operand.vmem [shape: bf16[128,128], index: 7, kind: input, shape index: {}]
  %s8 = inlined_call_operand.vmem [shape: f32[1,128], index: 8, kind: input, shape index: {}]
  %s9 = inlined_call_operand.vmem [shape: bf16[128,128], index: 9, kind: input, shape index: {}]
  %s10 = inlined_call_operand.vmem [shape: f32[1,128], index: 10, kind: input, shape index: {}]
  %s11 = inlined_call_operand.hbm [shape: f32[2,128], index: 11, kind: output, shape index: {}]
  %s12 = sld [smem:[#allocation0]]
  $region54: #{lenet_forward.1} parent=0
    _
  %s14 = ssub.s32 1, %s12
  %s15 = scalar_select 0, %s14, %s12
  $region1: #{lenet_forward.1} parent=0
    #allocation2 [shape = 'u8[1024]{0}', space=vmem, size = 0x400, scoped, tag = 'output window, operand 0, single buffered']
    #allocation3 [shape = 's32[1]{0}', space=sflag, size = 0x4, scoped, tag = 'scoped memory for lenet_forward.1']
    %16 = vsyncpa [#allocation3], 0
    // Predicated region
    $region2: #{lenet_forward.1} parent=1 // pred_check
      _
    $region3: #{lenet_forward.1} parent=1 // pred_check_branch
      %18 = sbr.rel (0) target = $region5
    $region4: #{lenet_forward.1} parent=1 // pred_region
      _
    $region5: #{lenet_forward.1} parent=1 // pred_fallthru
      _
    // Predicated region
    $region6: #{lenet_forward.1} parent=1 // pred_check
      _
    $region7: #{lenet_forward.1} parent=1 // pred_check_branch
      %20 = sbr.rel (0) target = $region9
    $region8: #{lenet_forward.1} parent=1 // pred_region
      _
    $region9: #{lenet_forward.1} parent=1 // pred_fallthru
      _
    // Predicated region
    $region10: #{lenet_forward.1} parent=1 // pred_check
      _
    $region11: #{lenet_forward.1} parent=1 // pred_check_branch
      %22 = sbr.rel (0) target = $region13
    $region12: #{lenet_forward.1} parent=1 // pred_region
      _
    $region13: #{lenet_forward.1} parent=1 // pred_fallthru
      _
    // Predicated region
    $region14: #{lenet_forward.1} parent=1 // pred_check
      _
    $region15: #{lenet_forward.1} parent=1 // pred_check_branch
      %24 = sbr.rel (0) target = $region17
    $region16: #{lenet_forward.1} parent=1 // pred_region
      _
    $region17: #{lenet_forward.1} parent=1 // pred_fallthru
      _
    // Predicated region
    $region18: #{lenet_forward.1} parent=1 // pred_check
      _
    $region19: #{lenet_forward.1} parent=1 // pred_check_branch
      %26 = sbr.rel (0) target = $region21
    $region20: #{lenet_forward.1} parent=1 // pred_region
      _
    $region21: #{lenet_forward.1} parent=1 // pred_fallthru
      _
    // Predicated region
    $region22: #{lenet_forward.1} parent=1 // pred_check
      _
    $region23: #{lenet_forward.1} parent=1 // pred_check_branch
      %28 = sbr.rel (0) target = $region25
    $region24: #{lenet_forward.1} parent=1 // pred_region
      _
    $region25: #{lenet_forward.1} parent=1 // pred_fallthru
      _
    // Predicated region
    $region26: #{lenet_forward.1} parent=1 // pred_check
      _
    $region27: #{lenet_forward.1} parent=1 // pred_check_branch
      %30 = sbr.rel (0) target = $region29
    $region28: #{lenet_forward.1} parent=1 // pred_region
      _
    $region29: #{lenet_forward.1} parent=1 // pred_fallthru
      _
    // Predicated region
    $region30: #{lenet_forward.1} parent=1 // pred_check
      _
    $region31: #{lenet_forward.1} parent=1 // pred_check_branch
      %32 = sbr.rel (0) target = $region33
    $region32: #{lenet_forward.1} parent=1 // pred_region
      _
    $region33: #{lenet_forward.1} parent=1 // pred_fallthru
      _
    // Predicated region
    $region34: #{lenet_forward.1} parent=1 // pred_check
      _
    $region35: #{lenet_forward.1} parent=1 // pred_check_branch
      %34 = sbr.rel (0) target = $region37
    $region36: #{lenet_forward.1} parent=1 // pred_region
      _
    $region37: #{lenet_forward.1} parent=1 // pred_fallthru
      _
    // Predicated region
    $region38: #{lenet_forward.1} parent=1 // pred_check
      _
    $region39: #{lenet_forward.1} parent=1 // pred_check_branch
      %36 = sbr.rel (0) target = $region41
    $region40: #{lenet_forward.1} parent=1 // pred_region
      _
    $region41: #{lenet_forward.1} parent=1 // pred_fallthru
      _
    // Predicated region
    $region42: #{lenet_forward.1} parent=1 // pred_check
      _
    $region43: #{lenet_forward.1} parent=1 // pred_check_branch
      %38 = sbr.rel (0) target = $region45
    $region44: #{lenet_forward.1} parent=1 // pred_region
      _
    $region45: #{lenet_forward.1} parent=1 // pred_fallthru
      _
    %v40 = vld [vmem:[%s0] sm:$0xf]
    %v41 = vld [vmem:[%s0 + $0x4] sm:$0xf]
    %v42 = vld [vmem:[%s0 + $0x8] sm:$0xf]
    %v43 = vld [vmem:[%s0 + $0xc] sm:$0xf]
    %v44 = vld [vmem:[%s0 + $0x10] sm:$0xf]
    %v45 = vld [vmem:[%s0 + $0x14] sm:$0xf]
    %v46 = vld [vmem:[%s0 + $0x18] sm:$0xf]
    %v47 = vld [vmem:[%s0 + $0x1c] sm:$0xf]
    %v48 = vld [vmem:[%s0 + $0x20] sm:$0xf]
    %v49 = vld [vmem:[%s0 + $0x24] sm:$0xf]
    %v50 = vld [vmem:[%s0 + $0x28] sm:$0xf]
    %v51 = vld [vmem:[%s0 + $0x2c] sm:$0xf]
    %v52 = vld [vmem:[%s0 + $0x30] sm:$0xf]
    %v53 = vld [vmem:[%s0 + $0x34] sm:$0xf]
    %v54 = vld [vmem:[%s0 + $0x38] sm:$0xf]
    %v55 = vld [vmem:[%s0 + $0x3c] sm:$0xf]
    %v56 = vld [vmem:[%s0 + $0x40] sm:$0xf]
    %v57 = vld [vmem:[%s0 + $0x44] sm:$0xf]
    %v58 = vld [vmem:[%s0 + $0x48] sm:$0xf]
    %v59 = vld [vmem:[%s0 + $0x4c] sm:$0xf]
    %v60 = vld [vmem:[%s0 + $0x50] sm:$0xf]
    %v61 = vld [vmem:[%s0 + $0x54] sm:$0xf]
    %v62 = vld [vmem:[%s0 + $0x58] sm:$0xf]
    %v63 = vld [vmem:[%s0 + $0x5c] sm:$0xf]
    %v64 = vld [vmem:[%s0 + $0x60] sm:$0xf]
    %v65 = vld [vmem:[%s0 + $0x64] sm:$0xf]
    %v66 = vld [vmem:[%s0 + $0x68] sm:$0xf]
    %v67 = vld [vmem:[%s0 + $0x6c] sm:$0xf]
    %v68 = vld [vmem:[%s0 + $0x70] sm:$0xf]
    %v69 = vld [vmem:[%s0 + $0x74] sm:$0xf]
    %v70 = vld [vmem:[%s0 + $0x78] sm:$0xf]
    %v71 = vld [vmem:[%s0 + $0x7c] sm:$0xf]
    %v72 = vld [vmem:[%s0 + $0x80] sm:$0xf]
    %v73 = vld [vmem:[%s0 + $0x84] sm:$0xf]
    %v74 = vld [vmem:[%s0 + $0x88] sm:$0xf]
    %v75 = vld [vmem:[%s0 + $0x8c] sm:$0xf]
    %v76 = vld [vmem:[%s1] sm:$0xf]
    %v77 = vld [vmem:[%s1 + $0x4] sm:$0xf]
    %v78 = vld [vmem:[%s1 + $0x8] sm:$0xf]
    %v79 = vld [vmem:[%s1 + $0xc] sm:$0xf]
    %v80 = vld [vmem:[%s1 + $0x10] sm:$0xf]
    %v81 = vld [vmem:[%s1 + $0x14] sm:$0xf]
    %v82 = vld [vmem:[%s1 + $0x18] sm:$0xf]
    %v83 = vld [vmem:[%s1 + $0x1c] sm:$0xf]
    %v84 = vld [vmem:[%s1 + $0x20] sm:$0xf]
    %v85 = vld [vmem:[%s1 + $0x24] sm:$0xf]
    %v86 = vld [vmem:[%s1 + $0x28] sm:$0xf]
    %v87 = vld [vmem:[%s1 + $0x2c] sm:$0xf]
    %v88 = vld [vmem:[%s1 + $0x30] sm:$0xf]
    %v89 = vld [vmem:[%s1 + $0x34] sm:$0xf]
    %v90 = vld [vmem:[%s1 + $0x38] sm:$0xf]
    %v91 = vld [vmem:[%s1 + $0x3c] sm:$0xf]
    %v92 = vld [vmem:[%s2] sm:$0x1]
    %v94 = vlaneseq
    %v95 = vshrl.u32 %v94, 7
    %v96 = vsub.s32 0, %v95
    %v97 = vrot.slane %v92, %v96
    %v135 = vunpack.c.l.b16 %v40
    %v136 = vunpack.c.l.b16 %v41
    %v137 = vunpack.c.l.b16 %v42
    %v138 = vunpack.c.l.b16 %v43
    %v139 = vunpack.c.l.b16 %v44
    %v140 = vunpack.c.l.b16 %v45
    %v141 = vunpack.c.l.b16 %v46
    %v142 = vunpack.c.l.b16 %v47
    %v143 = vunpack.c.l.b16 %v48
    %v144 = vunpack.c.l.b16 %v49
    %v145 = vunpack.c.l.b16 %v50
    %v146 = vunpack.c.l.b16 %v51
    %v147 = vunpack.c.l.b16 %v52
    %v148 = vunpack.c.l.b16 %v53
    %v149 = vunpack.c.l.b16 %v54
    %v150 = vunpack.c.l.b16 %v55
    %v151 = vunpack.c.l.b16 %v56
    %v152 = vunpack.c.l.b16 %v57
    %v153 = vunpack.c.l.b16 %v58
    %v154 = vunpack.c.l.b16 %v59
    %v155 = vunpack.c.l.b16 %v60
    %v156 = vunpack.c.l.b16 %v61
    %v157 = vunpack.c.l.b16 %v62
    %v158 = vunpack.c.l.b16 %v63
    %v159 = vunpack.c.l.b16 %v64
    %v160 = vunpack.c.l.b16 %v65
    %v161 = vunpack.c.l.b16 %v66
    %v162 = vunpack.c.l.b16 %v67
    %v163 = vunpack.c.l.b16 %v68
    %v164 = vunpack.c.l.b16 %v69
    %v165 = vunpack.c.l.b16 %v70
    %v166 = vunpack.c.l.b16 %v71
    %v167 = vunpack.c.l.b16 %v72
    %v168 = vunpack.c.l.b16 %v73
    %v169 = vunpack.c.l.b16 %v74
    %v170 = vunpack.c.l.b16 %v75
    %v171 = vpack.c.b16 %v136, %v135
    %v172 = vpack.c.b16 %v138, %v137
    %v173 = vpack.c.b16 %v140, %v139
    %v174 = vpack.c.b16 %v142, %v141
    %v175 = vpack.c.b16 %v144, %v143
    %v176 = vpack.c.b16 %v146, %v145
    %v177 = vpack.c.b16 %v148, %v147
    %v178 = vpack.c.b16 %v150, %v149
    %v179 = vpack.c.b16 %v152, %v151
    %v180 = vpack.c.b16 %v154, %v153
    %v181 = vpack.c.b16 %v156, %v155
    %v182 = vpack.c.b16 %v158, %v157
    %v183 = vpack.c.b16 %v160, %v159
    %v184 = vpack.c.b16 %v162, %v161
    %v185 = vpack.c.b16 %v164, %v163
    %v186 = vpack.c.b16 %v166, %v165
    %v187 = vpack.c.b16 %v168, %v167
    %v188 = vpack.c.b16 %v170, %v169
    %v223 = vunpack.c.l.b16 %v76
    %v224 = vunpack.c.l.b16 %v77
    %v225 = vunpack.c.l.b16 %v78
    %v226 = vunpack.c.l.b16 %v79
    %v227 = vunpack.c.l.b16 %v80
    %v228 = vunpack.c.l.b16 %v81
    %v229 = vunpack.c.l.b16 %v82
    %v230 = vunpack.c.l.b16 %v83
    %v231 = vunpack.c.l.b16 %v84
    %v232 = vunpack.c.l.b16 %v85
    %v233 = vunpack.c.l.b16 %v86
    %v234 = vunpack.c.l.b16 %v87
    %v235 = vunpack.c.l.b16 %v88
    %v236 = vunpack.c.l.b16 %v89
    %v237 = vunpack.c.l.b16 %v90
    %v238 = vunpack.c.l.b16 %v91
    %v239 = vpack.c.b16 %v224, %v223
    %v240 = vpack.c.b16 %v226, %v225
    %v241 = vpack.c.b16 %v228, %v227
    %v242 = vpack.c.b16 %v230, %v229
    %v243 = vpack.c.b16 %v232, %v231
    %v244 = vpack.c.b16 %v234, %v233
    %v245 = vpack.c.b16 %v236, %v235
    %v246 = vpack.c.b16 %v238, %v237
    %255 = vmatprep.subr.bf16.mxu0 0
    %256 = vmatpush1.bf16.msra.mxu0 %v239
    %257 = vmatprep.subr.bf16.mxu0 0
    %258 = vmatpush1.bf16.msra.mxu0 %v240
    %259 = vmatprep.subr.bf16.mxu0 0
    %260 = vmatpush1.bf16.msra.mxu0 %v241
    %261 = vmatprep.subr.bf16.mxu0 0
    %262 = vmatpush1.bf16.msra.mxu0 %v242
    %263 = vmatprep.subr.bf16.mxu0 0
    %264 = vmatpush1.bf16.msra.mxu0 %v243
    %265 = vmatprep.subr.bf16.mxu0 0
    %266 = vmatpush1.bf16.msra.mxu0 %v244
    %267 = vmatprep.subr.bf16.mxu0 0
    %268 = vmatpush1.bf16.msra.mxu0 %v245
    %269 = vmatprep.subr.bf16.mxu0 0
    %270 = vmatpush1.bf16.msra.mxu0 %v246
    %271 = vmatprep.subr.bf16.mxu0 0
    %272 = vmatpush1.bf16.msra.mxu0 0
    %273 = vmatprep.subr.bf16.mxu0 0
    %274 = vmatpush1.bf16.msra.mxu0 0
    %275 = vmatprep.subr.bf16.mxu0 0
    %276 = vmatpush1.bf16.msra.mxu0 0
    %277 = vmatprep.subr.bf16.mxu0 0
    %278 = vmatpush1.bf16.msra.mxu0 0
    %279 = vmatprep.subr.bf16.mxu0 0
    %280 = vmatpush1.bf16.msra.mxu0 0
    %281 = vmatprep.subr.bf16.mxu0 0
    %282 = vmatpush1.bf16.msra.mxu0 0
    %283 = vmatprep.subr.bf16.mxu0 0
    %284 = vmatpush1.bf16.msra.mxu0 0
    %285 = vmatprep.subr.bf16.mxu0 0
    %286 = vmatpush1.bf16.msra.mxu0 0
    %287 = vmatprep.mubr.bf16.mxu0 0
    %288 = vmatmul.mubr.bf16.gmra.mrb[0].mxu0 %v171
    %v289 = vpop.f32.mrb[0].mxu0
    %v290 = vadd.f32 %v97, %v289
    %v291 = vpop.f32.mrb[0].mxu0
    %v292 = vpop.f32.mrb[0].mxu0
    %v293 = vadd.f32 %v97, %v292
    %v294 = vpop.f32.mrb[0].mxu0
    %295 = vmatprep.mubr.bf16.mxu0 0
    %296 = vmatmul.mubr.bf16.gmra.mrb[0].mxu0 %v172
    %v297 = vpop.f32.mrb[0].mxu0
    %v298 = vadd.f32 %v97, %v297
    %v299 = vpop.f32.mrb[0].mxu0
    %v300 = vpop.f32.mrb[0].mxu0
    %v301 = vadd.f32 %v97, %v300
    %v302 = vpop.f32.mrb[0].mxu0
    %303 = vmatprep.mubr.bf16.mxu0 0
    %304 = vmatmul.mubr.bf16.gmra.mrb[0].mxu0 %v173
    %v305 = vpop.f32.mrb[0].mxu0
    %v306 = vadd.f32 %v97, %v305
    %v307 = vpop.f32.mrb[0].mxu0
    %v308 = vpop.f32.mrb[0].mxu0
    %v309 = vadd.f32 %v97, %v308
    %v310 = vpop.f32.mrb[0].mxu0
    %311 = vmatprep.mubr.bf16.mxu0 0
    %312 = vmatmul.mubr.bf16.gmra.mrb[0].mxu0 %v174
    %v313 = vpop.f32.mrb[0].mxu0
    %v314 = vadd.f32 %v97, %v313
    %v315 = vpop.f32.mrb[0].mxu0
    %v316 = vpop.f32.mrb[0].mxu0
    %v317 = vadd.f32 %v97, %v316
    %v318 = vpop.f32.mrb[0].mxu0
    %319 = vmatprep.mubr.bf16.mxu0 0
    %320 = vmatmul.mubr.bf16.gmra.mrb[0].mxu0 %v175
    %v321 = vpop.f32.mrb[0].mxu0
    %v322 = vadd.f32 %v97, %v321
    %v323 = vpop.f32.mrb[0].mxu0
    %v324 = vpop.f32.mrb[0].mxu0
    %v325 = vadd.f32 %v97, %v324
    %v326 = vpop.f32.mrb[0].mxu0
    %327 = vmatprep.mubr.bf16.mxu0 0
    %328 = vmatmul.mubr.bf16.gmra.mrb[0].mxu0 %v176
    %v329 = vpop.f32.mrb[0].mxu0
    %v330 = vadd.f32 %v97, %v329
    %v331 = vpop.f32.mrb[0].mxu0
    %v332 = vpop.f32.mrb[0].mxu0
    %v333 = vadd.f32 %v97, %v332
    %v334 = vpop.f32.mrb[0].mxu0
    %335 = vmatprep.mubr.bf16.mxu0 0
    %336 = vmatmul.mubr.bf16.gmra.mrb[0].mxu0 %v177
    %v337 = vpop.f32.mrb[0].mxu0
    %v338 = vadd.f32 %v97, %v337
    %v339 = vpop.f32.mrb[0].mxu0
    %v340 = vpop.f32.mrb[0].mxu0
    %v341 = vadd.f32 %v97, %v340
    %v342 = vpop.f32.mrb[0].mxu0
    %343 = vmatprep.mubr.bf16.mxu0 0
    %344 = vmatmul.mubr.bf16.gmra.mrb[0].mxu0 %v178
    %v345 = vpop.f32.mrb[0].mxu0
    %v346 = vadd.f32 %v97, %v345
    %v347 = vpop.f32.mrb[0].mxu0
    %v348 = vpop.f32.mrb[0].mxu0
    %v349 = vadd.f32 %v97, %v348
    %v350 = vpop.f32.mrb[0].mxu0
    %351 = vmatprep.mubr.bf16.mxu0 0
    %352 = vmatmul.mubr.bf16.gmra.mrb[0].mxu0 %v179
    %v353 = vpop.f32.mrb[0].mxu0
    %v354 = vadd.f32 %v97, %v353
    %v355 = vpop.f32.mrb[0].mxu0
    %v356 = vpop.f32.mrb[0].mxu0
    %v357 = vadd.f32 %v97, %v356
    %v358 = vpop.f32.mrb[0].mxu0
    %359 = vmatprep.mubr.bf16.mxu0 0
    %360 = vmatmul.mubr.bf16.gmra.mrb[0].mxu0 %v180
    %v361 = vpop.f32.mrb[0].mxu0
    %v362 = vadd.f32 %v97, %v361
    %v363 = vpop.f32.mrb[0].mxu0
    %v364 = vpop.f32.mrb[0].mxu0
    %v365 = vadd.f32 %v97, %v364
    %v366 = vpop.f32.mrb[0].mxu0
    %367 = vmatprep.mubr.bf16.mxu0 0
    %368 = vmatmul.mubr.bf16.gmra.mrb[0].mxu0 %v181
    %v369 = vpop.f32.mrb[0].mxu0
    %v370 = vadd.f32 %v97, %v369
    %v371 = vpop.f32.mrb[0].mxu0
    %v372 = vpop.f32.mrb[0].mxu0
    %v373 = vadd.f32 %v97, %v372
    %v374 = vpop.f32.mrb[0].mxu0
    %375 = vmatprep.mubr.bf16.mxu0 0
    %376 = vmatmul.mubr.bf16.gmra.mrb[0].mxu0 %v182
    %v377 = vpop.f32.mrb[0].mxu0
    %v378 = vadd.f32 %v97, %v377
    %v379 = vpop.f32.mrb[0].mxu0
    %v380 = vpop.f32.mrb[0].mxu0
    %v381 = vadd.f32 %v97, %v380
    %v382 = vpop.f32.mrb[0].mxu0
    %383 = vmatprep.mubr.bf16.mxu0 0
    %384 = vmatmul.mubr.bf16.gmra.mrb[0].mxu0 %v183
    %v385 = vpop.f32.mrb[0].mxu0
    %v386 = vadd.f32 %v97, %v385
    %v387 = vpop.f32.mrb[0].mxu0
    %v388 = vpop.f32.mrb[0].mxu0
    %v389 = vadd.f32 %v97, %v388
    %v390 = vpop.f32.mrb[0].mxu0
    %391 = vmatprep.mubr.bf16.mxu0 0
    %392 = vmatmul.mubr.bf16.gmra.mrb[0].mxu0 %v184
    %v393 = vpop.f32.mrb[0].mxu0
    %v394 = vadd.f32 %v97, %v393
    %v395 = vpop.f32.mrb[0].mxu0
    %v396 = vpop.f32.mrb[0].mxu0
    %v397 = vadd.f32 %v97, %v396
    %v398 = vpop.f32.mrb[0].mxu0
    %399 = vmatprep.mubr.bf16.mxu0 0
    %400 = vmatmul.mubr.bf16.gmra.mrb[0].mxu0 %v185
    %v401 = vpop.f32.mrb[0].mxu0
    %v402 = vadd.f32 %v97, %v401
    %v403 = vpop.f32.mrb[0].mxu0
    %v404 = vpop.f32.mrb[0].mxu0
    %v405 = vadd.f32 %v97, %v404
    %v406 = vpop.f32.mrb[0].mxu0
    %407 = vmatprep.mubr.bf16.mxu0 0
    %408 = vmatmul.mubr.bf16.gmra.mrb[0].mxu0 %v186
    %v409 = vpop.f32.mrb[0].mxu0
    %v410 = vadd.f32 %v97, %v409
    %v411 = vpop.f32.mrb[0].mxu0
    %v412 = vpop.f32.mrb[0].mxu0
    %v413 = vadd.f32 %v97, %v412
    %v414 = vpop.f32.mrb[0].mxu0
    %415 = vmatprep.mubr.bf16.mxu0 0
    %416 = vmatmul.mubr.bf16.gmra.mrb[0].mxu0 %v187
    %v417 = vpop.f32.mrb[0].mxu0
    %v418 = vadd.f32 %v97, %v417
    %v419 = vpop.f32.mrb[0].mxu0
    %v420 = vpop.f32.mrb[0].mxu0
    %v421 = vadd.f32 %v97, %v420
    %v422 = vpop.f32.mrb[0].mxu0
    %423 = vmatprep.mubr.bf16.mxu0 0
    %424 = vmatmul.mubr.bf16.gmra.mrb[0].mxu0 %v188
    %v425 = vpop.f32.mrb[0].mxu0
    %v426 = vadd.f32 %v97, %v425
    %v427 = vpop.f32.mrb[0].mxu0
    %v428 = vpop.f32.mrb[0].mxu0
    %v429 = vadd.f32 %v97, %v428
    %v430 = vpop.f32.mrb[0].mxu0
    %431 = vdwg.mxu0
    %v432 = vmax.f32 %v290, 0.0
    %v433 = vmax.f32 %v293, 0.0
    %v434 = vmax.f32 %v298, 0.0
    %v435 = vmax.f32 %v301, 0.0
    %v436 = vmax.f32 %v306, 0.0
    %v437 = vmax.f32 %v309, 0.0
    %v438 = vmax.f32 %v314, 0.0
    %v439 = vmax.f32 %v317, 0.0
    %v440 = vmax.f32 %v322, 0.0
    %v441 = vmax.f32 %v325, 0.0
    %v442 = vmax.f32 %v330, 0.0
    %v443 = vmax.f32 %v333, 0.0
    %v444 = vmax.f32 %v338, 0.0
    %v445 = vmax.f32 %v341, 0.0
    %v446 = vmax.f32 %v346, 0.0
    %v447 = vmax.f32 %v349, 0.0
    %v448 = vmax.f32 %v354, 0.0
    %v449 = vmax.f32 %v357, 0.0
    %v450 = vmax.f32 %v362, 0.0
    %v451 = vmax.f32 %v365, 0.0
    %v452 = vmax.f32 %v370, 0.0
    %v453 = vmax.f32 %v373, 0.0
    %v454 = vmax.f32 %v378, 0.0
    %v455 = vmax.f32 %v381, 0.0
    %v456 = vmax.f32 %v386, 0.0
    %v457 = vmax.f32 %v389, 0.0
    %v458 = vmax.f32 %v394, 0.0
    %v459 = vmax.f32 %v397, 0.0
    %v460 = vmax.f32 %v402, 0.0
    %v461 = vmax.f32 %v405, 0.0
    %v462 = vmax.f32 %v410, 0.0
    %v463 = vmax.f32 %v413, 0.0
    %v464 = vmax.f32 %v418, 0.0
    %v465 = vmax.f32 %v421, 0.0
    %v466 = vmax.f32 %v426, 0.0
    %v467 = vmax.f32 %v429, 0.0
    %v504 = vcombine.high %v432, %v432
    %v505 = vcombine.high %v433, %v433
    %v506 = vcombine.high %v434, %v434
    %v507 = vcombine.high %v435, %v435
    %v508 = vcombine.high %v436, %v436
    %v509 = vcombine.high %v437, %v437
    %v510 = vcombine.high %v438, %v438
    %v511 = vcombine.high %v439, %v439
    %v512 = vcombine.high %v440, %v440
    %v513 = vcombine.high %v441, %v441
    %v514 = vcombine.high %v442, %v442
    %v515 = vcombine.high %v443, %v443
    %v516 = vcombine.high %v444, %v444
    %v517 = vcombine.high %v445, %v445
    %v518 = vcombine.high %v446, %v446
    %v519 = vcombine.high %v447, %v447
    %v520 = vcombine.high %v448, %v448
    %v521 = vcombine.high %v449, %v449
    %v522 = vcombine.high %v450, %v450
    %v523 = vcombine.high %v451, %v451
    %v524 = vcombine.high %v452, %v452
    %v525 = vcombine.high %v453, %v453
    %v526 = vcombine.high %v454, %v454
    %v527 = vcombine.high %v455, %v455
    %v528 = vcombine.high %v456, %v456
    %v529 = vcombine.high %v457, %v457
    %v530 = vcombine.high %v458, %v458
    %v531 = vcombine.high %v459, %v459
    %v532 = vcombine.high %v460, %v460
    %v533 = vcombine.high %v461, %v461
    %v534 = vcombine.high %v462, %v462
    %v535 = vcombine.high %v463, %v463
    %v536 = vcombine.high %v464, %v464
    %v537 = vcombine.high %v465, %v465
    %v538 = vcombine.high %v466, %v466
    %v539 = vcombine.high %v467, %v467
    %v576 = vmax.f32 %v432, %v505
    %v577 = vmax.f32 %v504, %v434
    %v578 = vmax.f32 %v433, %v506
    %v579 = vmax.f32 %v450, %v523
    %v580 = vmax.f32 %v522, %v452
    %v581 = vmax.f32 %v451, %v524
    %v582 = vmax.f32 %v435, %v508
    %v583 = vmax.f32 %v507, %v437
    %v584 = vmax.f32 %v436, %v509
    %v585 = vmax.f32 %v453, %v526
    %v586 = vmax.f32 %v525, %v455
    %v587 = vmax.f32 %v454, %v527
    %v588 = vmax.f32 %v438, %v511
    %v589 = vmax.f32 %v510, %v440
    %v590 = vmax.f32 %v439, %v512
    %v591 = vmax.f32 %v456, %v529
    %v592 = vmax.f32 %v528, %v458
    %v593 = vmax.f32 %v457, %v530
    %v594 = vmax.f32 %v441, %v514
    %v595 = vmax.f32 %v513, %v443
    %v596 = vmax.f32 %v442, %v515
    %v597 = vmax.f32 %v459, %v532
    %v598 = vmax.f32 %v531, %v461
    %v599 = vmax.f32 %v460, %v533
    %v600 = vmax.f32 %v444, %v517
    %v601 = vmax.f32 %v516, %v446
    %v602 = vmax.f32 %v445, %v518
    %v603 = vmax.f32 %v462, %v535
    %v604 = vmax.f32 %v534, %v464
    %v605 = vmax.f32 %v463, %v536
    %v606 = vmax.f32 %v447, %v520
    %v607 = vmax.f32 %v519, %v449
    %v608 = vmax.f32 %v448, %v521
    %v609 = vmax.f32 %v465, %v538
    %v610 = vmax.f32 %v537, %v467
    %v611 = vmax.f32 %v466, %v539
    %v624 = vrot.slane %v576, 5
    %v625 = vrot.slane %v624, 4
    %v626 = vrot.slane %v582, 5
    %v627 = vrot.slane %v626, 4
    %v628 = vrot.slane %v588, 5
    %v629 = vrot.slane %v628, 4
    %v630 = vrot.slane %v594, 5
    %v631 = vrot.slane %v630, 4
    %v632 = vrot.slane %v600, 5
    %v633 = vrot.slane %v632, 4
    %v634 = vrot.slane %v606, 5
    %v635 = vrot.slane %v634, 4
    %v636 = vrot.slane %v579, 5
    %v637 = vrot.slane %v636, 4
    %v638 = vrot.slane %v585, 5
    %v639 = vrot.slane %v638, 4
    %v640 = vrot.slane %v591, 5
    %v641 = vrot.slane %v640, 4
    %v642 = vrot.slane %v597, 5
    %v643 = vrot.slane %v642, 4
    %v644 = vrot.slane %v603, 5
    %v645 = vrot.slane %v644, 4
    %v646 = vrot.slane %v609, 5
    %v647 = vrot.slane %v646, 4
    %v660 = vmax.f32 %v576, %v625
    %v661 = vmax.f32 %v582, %v627
    %v662 = vmax.f32 %v588, %v629
    %v663 = vmax.f32 %v594, %v631
    %v664 = vmax.f32 %v600, %v633
    %v665 = vmax.f32 %v606, %v635
    %v666 = vmax.f32 %v579, %v637
    %v667 = vmax.f32 %v585, %v639
    %v668 = vmax.f32 %v591, %v641
    %v669 = vmax.f32 %v597, %v643
    %v670 = vmax.f32 %v603, %v645
    %v671 = vmax.f32 %v609, %v647
    %v684 = vrot.slane %v577, 5
    %v685 = vrot.slane %v684, 4
    %v686 = vrot.slane %v583, 5
    %v687 = vrot.slane %v686, 4
    %v688 = vrot.slane %v589, 5
    %v689 = vrot.slane %v688, 4
    %v690 = vrot.slane %v595, 5
    %v691 = vrot.slane %v690, 4
    %v692 = vrot.slane %v601, 5
    %v693 = vrot.slane %v692, 4
    %v694 = vrot.slane %v607, 5
    %v695 = vrot.slane %v694, 4
    %v696 = vrot.slane %v580, 5
    %v697 = vrot.slane %v696, 4
    %v698 = vrot.slane %v586, 5
    %v699 = vrot.slane %v698, 4
    %v700 = vrot.slane %v592, 5
    %v701 = vrot.slane %v700, 4
    %v702 = vrot.slane %v598, 5
    %v703 = vrot.slane %v702, 4
    %v704 = vrot.slane %v604, 5
    %v705 = vrot.slane %v704, 4
    %v706 = vrot.slane %v610, 5
    %v707 = vrot.slane %v706, 4
    %v720 = vmax.f32 %v577, %v685
    %v721 = vmax.f32 %v583, %v687
    %v722 = vmax.f32 %v589, %v689
    %v723 = vmax.f32 %v595, %v691
    %v724 = vmax.f32 %v601, %v693
    %v725 = vmax.f32 %v607, %v695
    %v726 = vmax.f32 %v580, %v697
    %v727 = vmax.f32 %v586, %v699
    %v728 = vmax.f32 %v592, %v701
    %v729 = vmax.f32 %v598, %v703
    %v730 = vmax.f32 %v604, %v705
    %v731 = vmax.f32 %v610, %v707
    %v744 = vrot.slane %v578, 5
    %v745 = vrot.slane %v744, 4
    %v746 = vrot.slane %v584, 5
    %v747 = vrot.slane %v746, 4
    %v748 = vrot.slane %v590, 5
    %v749 = vrot.slane %v748, 4
    %v750 = vrot.slane %v596, 5
    %v751 = vrot.slane %v750, 4
    %v752 = vrot.slane %v602, 5
    %v753 = vrot.slane %v752, 4
    %v754 = vrot.slane %v608, 5
    %v755 = vrot.slane %v754, 4
    %v756 = vrot.slane %v581, 5
    %v757 = vrot.slane %v756, 4
    %v758 = vrot.slane %v587, 5
    %v759 = vrot.slane %v758, 4
    %v760 = vrot.slane %v593, 5
    %v761 = vrot.slane %v760, 4
    %v762 = vrot.slane %v599, 5
    %v763 = vrot.slane %v762, 4
    %v764 = vrot.slane %v605, 5
    %v765 = vrot.slane %v764, 4
    %v766 = vrot.slane %v611, 5
    %v767 = vrot.slane %v766, 4
    %v780 = vmax.f32 %v578, %v745
    %v781 = vmax.f32 %v584, %v747
    %v782 = vmax.f32 %v590, %v749
    %v783 = vmax.f32 %v596, %v751
    %v784 = vmax.f32 %v602, %v753
    %v785 = vmax.f32 %v608, %v755
    %v786 = vmax.f32 %v581, %v757
    %v787 = vmax.f32 %v587, %v759
    %v788 = vmax.f32 %v593, %v761
    %v789 = vmax.f32 %v599, %v763
    %v790 = vmax.f32 %v605, %v765
    %v791 = vmax.f32 %v611, %v767
    %v804 = vlaneseq
    %v805 = vshrl.u32 %v804, 7
    %v806 = vsub.s32 2, %v805
    %v807 = vrot.slane %v660, %v806
    %v808 = vlaneseq
    %v809 = vshrl.u32 %v808, 7
    %v810 = vsub.s32 2, %v809
    %v811 = vrot.slane %v661, %v810
    %v812 = vlaneseq
    %v813 = vshrl.u32 %v812, 7
    %v814 = vsub.s32 2, %v813
    %v815 = vrot.slane %v662, %v814
    %v816 = vlaneseq
    %v817 = vshrl.u32 %v816, 7
    %v818 = vsub.s32 2, %v817
    %v819 = vrot.slane %v663, %v818
    %v820 = vlaneseq
    %v821 = vshrl.u32 %v820, 7
    %v822 = vsub.s32 2, %v821
    %v823 = vrot.slane %v664, %v822
    %v824 = vlaneseq
    %v825 = vshrl.u32 %v824, 7
    %v826 = vsub.s32 2, %v825
    %v827 = vrot.slane %v665, %v826
    %v828 = vlaneseq
    %v829 = vshrl.u32 %v828, 7
    %v830 = vsub.s32 2, %v829
    %v831 = vrot.slane %v666, %v830
    %v832 = vlaneseq
    %v833 = vshrl.u32 %v832, 7
    %v834 = vsub.s32 2, %v833
    %v835 = vrot.slane %v667, %v834
    %v836 = vlaneseq
    %v837 = vshrl.u32 %v836, 7
    %v838 = vsub.s32 2, %v837
    %v839 = vrot.slane %v668, %v838
    %v840 = vlaneseq
    %v841 = vshrl.u32 %v840, 7
    %v842 = vsub.s32 2, %v841
    %v843 = vrot.slane %v669, %v842
    %v844 = vlaneseq
    %v845 = vshrl.u32 %v844, 7
    %v846 = vsub.s32 2, %v845
    %v847 = vrot.slane %v670, %v846
    %v848 = vlaneseq
    %v849 = vshrl.u32 %v848, 7
    %v850 = vsub.s32 2, %v849
    %v851 = vrot.slane %v671, %v850
    %v876 = vlaneseq
    %v877 = vshrl.u32 %v876, 7
    %v878 = vsub.s32 0, %v877
    %v879 = vrot.slane %v720, %v878
    %v880 = vlaneseq
    %v881 = vshrl.u32 %v880, 7
    %v882 = vsub.s32 0, %v881
    %v883 = vrot.slane %v721, %v882
    %v884 = vlaneseq
    %v885 = vshrl.u32 %v884, 7
    %v886 = vsub.s32 0, %v885
    %v887 = vrot.slane %v722, %v886
    %v888 = vlaneseq
    %v889 = vshrl.u32 %v888, 7
    %v890 = vsub.s32 0, %v889
    %v891 = vrot.slane %v723, %v890
    %v892 = vlaneseq
    %v893 = vshrl.u32 %v892, 7
    %v894 = vsub.s32 0, %v893
    %v895 = vrot.slane %v724, %v894
    %v896 = vlaneseq
    %v897 = vshrl.u32 %v896, 7
    %v898 = vsub.s32 0, %v897
    %v899 = vrot.slane %v725, %v898
    %v900 = vlaneseq
    %v901 = vshrl.u32 %v900, 7
    %v902 = vsub.s32 0, %v901
    %v903 = vrot.slane %v726, %v902
    %v904 = vlaneseq
    %v905 = vshrl.u32 %v904, 7
    %v906 = vsub.s32 0, %v905
    %v907 = vrot.slane %v727, %v906
    %v908 = vlaneseq
    %v909 = vshrl.u32 %v908, 7
    %v910 = vsub.s32 0, %v909
    %v911 = vrot.slane %v728, %v910
    %v912 = vlaneseq
    %v913 = vshrl.u32 %v912, 7
    %v914 = vsub.s32 0, %v913
    %v915 = vrot.slane %v729, %v914
    %v916 = vlaneseq
    %v917 = vshrl.u32 %v916, 7
    %v918 = vsub.s32 0, %v917
    %v919 = vrot.slane %v730, %v918
    %v920 = vlaneseq
    %v921 = vshrl.u32 %v920, 7
    %v922 = vsub.s32 0, %v921
    %v923 = vrot.slane %v731, %v922
    %v936 = vlaneseq
    %v937 = vshrl.u32 %v936, 7
    %v938 = vsub.s32 2, %v937
    %v939 = vrot.slane %v720, %v938
    %v940 = vlaneseq
    %v941 = vshrl.u32 %v940, 7
    %v942 = vsub.s32 2, %v941
    %v943 = vrot.slane %v721, %v942
    %v944 = vlaneseq
    %v945 = vshrl.u32 %v944, 7
    %v946 = vsub.s32 2, %v945
    %v947 = vrot.slane %v722, %v946
    %v948 = vlaneseq
    %v949 = vshrl.u32 %v948, 7
    %v950 = vsub.s32 2, %v949
    %v951 = vrot.slane %v723, %v950
    %v952 = vlaneseq
    %v953 = vshrl.u32 %v952, 7
    %v954 = vsub.s32 2, %v953
    %v955 = vrot.slane %v724, %v954
    %v956 = vlaneseq
    %v957 = vshrl.u32 %v956, 7
    %v958 = vsub.s32 2, %v957
    %v959 = vrot.slane %v725, %v958
    %v960 = vlaneseq
    %v961 = vshrl.u32 %v960, 7
    %v962 = vsub.s32 2, %v961
    %v963 = vrot.slane %v726, %v962
    %v964 = vlaneseq
    %v965 = vshrl.u32 %v964, 7
    %v966 = vsub.s32 2, %v965
    %v967 = vrot.slane %v727, %v966
    %v968 = vlaneseq
    %v969 = vshrl.u32 %v968, 7
    %v970 = vsub.s32 2, %v969
    %v971 = vrot.slane %v728, %v970
    %v972 = vlaneseq
    %v973 = vshrl.u32 %v972, 7
    %v974 = vsub.s32 2, %v973
    %v975 = vrot.slane %v729, %v974
    %v976 = vlaneseq
    %v977 = vshrl.u32 %v976, 7
    %v978 = vsub.s32 2, %v977
    %v979 = vrot.slane %v730, %v978
    %v980 = vlaneseq
    %v981 = vshrl.u32 %v980, 7
    %v982 = vsub.s32 2, %v981
    %v983 = vrot.slane %v731, %v982
    %v1008 = vlaneseq
    %v1009 = vshrl.u32 %v1008, 7
    %v1010 = vsub.s32 0, %v1009
    %v1011 = vrot.slane %v780, %v1010
    %v1012 = vlaneseq
    %v1013 = vshrl.u32 %v1012, 7
    %v1014 = vsub.s32 0, %v1013
    %v1015 = vrot.slane %v781, %v1014
    %v1016 = vlaneseq
    %v1017 = vshrl.u32 %v1016, 7
    %v1018 = vsub.s32 0, %v1017
    %v1019 = vrot.slane %v782, %v1018
    %v1020 = vlaneseq
    %v1021 = vshrl.u32 %v1020, 7
    %v1022 = vsub.s32 0, %v1021
    %v1023 = vrot.slane %v783, %v1022
    %v1024 = vlaneseq
    %v1025 = vshrl.u32 %v1024, 7
    %v1026 = vsub.s32 0, %v1025
    %v1027 = vrot.slane %v784, %v1026
    %v1028 = vlaneseq
    %v1029 = vshrl.u32 %v1028, 7
    %v1030 = vsub.s32 0, %v1029
    %v1031 = vrot.slane %v785, %v1030
    %v1032 = vlaneseq
    %v1033 = vshrl.u32 %v1032, 7
    %v1034 = vsub.s32 0, %v1033
    %v1035 = vrot.slane %v786, %v1034
    %v1036 = vlaneseq
    %v1037 = vshrl.u32 %v1036, 7
    %v1038 = vsub.s32 0, %v1037
    %v1039 = vrot.slane %v787, %v1038
    %v1040 = vlaneseq
    %v1041 = vshrl.u32 %v1040, 7
    %v1042 = vsub.s32 0, %v1041
    %v1043 = vrot.slane %v788, %v1042
    %v1044 = vlaneseq
    %v1045 = vshrl.u32 %v1044, 7
    %v1046 = vsub.s32 0, %v1045
    %v1047 = vrot.slane %v789, %v1046
    %v1048 = vlaneseq
    %v1049 = vshrl.u32 %v1048, 7
    %v1050 = vsub.s32 0, %v1049
    %v1051 = vrot.slane %v790, %v1050
    %v1052 = vlaneseq
    %v1053 = vshrl.u32 %v1052, 7
    %v1054 = vsub.s32 0, %v1053
    %v1055 = vrot.slane %v791, %v1054
    %v1068 = vlaneseq
    %v1069 = vshrl.u32 %v1068, 7
    %v1070 = vsub.s32 2, %v1069
    %v1071 = vrot.slane %v780, %v1070
    %v1072 = vlaneseq
    %v1073 = vshrl.u32 %v1072, 7
    %v1074 = vsub.s32 2, %v1073
    %v1075 = vrot.slane %v781, %v1074
    %v1076 = vlaneseq
    %v1077 = vshrl.u32 %v1076, 7
    %v1078 = vsub.s32 2, %v1077
    %v1079 = vrot.slane %v782, %v1078
    %v1080 = vlaneseq
    %v1081 = vshrl.u32 %v1080, 7
    %v1082 = vsub.s32 2, %v1081
    %v1083 = vrot.slane %v783, %v1082
    %v1084 = vlaneseq
    %v1085 = vshrl.u32 %v1084, 7
    %v1086 = vsub.s32 2, %v1085
    %v1087 = vrot.slane %v784, %v1086
    %v1088 = vlaneseq
    %v1089 = vshrl.u32 %v1088, 7
    %v1090 = vsub.s32 2, %v1089
    %v1091 = vrot.slane %v785, %v1090
    %v1092 = vlaneseq
    %v1093 = vshrl.u32 %v1092, 7
    %v1094 = vsub.s32 2, %v1093
    %v1095 = vrot.slane %v786, %v1094
    %v1096 = vlaneseq
    %v1097 = vshrl.u32 %v1096, 7
    %v1098 = vsub.s32 2, %v1097
    %v1099 = vrot.slane %v787, %v1098
    %v1100 = vlaneseq
    %v1101 = vshrl.u32 %v1100, 7
    %v1102 = vsub.s32 2, %v1101
    %v1103 = vrot.slane %v788, %v1102
    %v1104 = vlaneseq
    %v1105 = vshrl.u32 %v1104, 7
    %v1106 = vsub.s32 2, %v1105
    %v1107 = vrot.slane %v789, %v1106
    %v1108 = vlaneseq
    %v1109 = vshrl.u32 %v1108, 7
    %v1110 = vsub.s32 2, %v1109
    %v1111 = vrot.slane %v790, %v1110
    %v1112 = vlaneseq
    %v1113 = vshrl.u32 %v1112, 7
    %v1114 = vsub.s32 2, %v1113
    %v1115 = vrot.slane %v791, %v1114
    %vm1128 = vcmask 1040384
    %v1129 = vsel %vm1128, %v660, %v807
    %v1130 = vsel %vm1128, %v661, %v811
    %v1131 = vsel %vm1128, %v662, %v815
    %v1132 = vsel %vm1128, %v663, %v819
    %v1133 = vsel %vm1128, %v664, %v823
    %v1134 = vsel %vm1128, %v665, %v827
    %v1135 = vsel %vm1128, %v666, %v831
    %v1136 = vsel %vm1128, %v667, %v835
    %v1137 = vsel %vm1128, %v668, %v839
    %v1138 = vsel %vm1128, %v669, %v843
    %v1139 = vsel %vm1128, %v670, %v847
    %v1140 = vsel %vm1128, %v671, %v851
    %vm1141 = vcmask 1041408
    %v1142 = vsel %vm1141, %v1129, %v879
    %v1143 = vsel %vm1141, %v1130, %v883
    %v1144 = vsel %vm1141, %v1131, %v887
    %v1145 = vsel %vm1141, %v1132, %v891
    %v1146 = vsel %vm1141, %v1133, %v895
    %v1147 = vsel %vm1141, %v1134, %v899
    %v1148 = vsel %vm1141, %v1135, %v903
    %v1149 = vsel %vm1141, %v1136, %v907
    %v1150 = vsel %vm1141, %v1137, %v911
    %v1151 = vsel %vm1141, %v1138, %v915
    %v1152 = vsel %vm1141, %v1139, %v919
    %v1153 = vsel %vm1141, %v1140, %v923
    %vm1154 = vcmask 1042432
    %v1155 = vsel %vm1154, %v1142, %v939
    %v1156 = vsel %vm1154, %v1143, %v943
    %v1157 = vsel %vm1154, %v1144, %v947
    %v1158 = vsel %vm1154, %v1145, %v951
    %v1159 = vsel %vm1154, %v1146, %v955
    %v1160 = vsel %vm1154, %v1147, %v959
    %v1161 = vsel %vm1154, %v1148, %v963
    %v1162 = vsel %vm1154, %v1149, %v967
    %v1163 = vsel %vm1154, %v1150, %v971
    %v1164 = vsel %vm1154, %v1151, %v975
    %v1165 = vsel %vm1154, %v1152, %v979
    %v1166 = vsel %vm1154, %v1153, %v983
    %vm1167 = vcmask 1043456
    %v1168 = vsel %vm1167, %v1155, %v1011
    %v1169 = vsel %vm1167, %v1156, %v1015
    %v1170 = vsel %vm1167, %v1157, %v1019
    %v1171 = vsel %vm1167, %v1158, %v1023
    %v1172 = vsel %vm1167, %v1159, %v1027
    %v1173 = vsel %vm1167, %v1160, %v1031
    %v1174 = vsel %vm1167, %v1161, %v1035
    %v1175 = vsel %vm1167, %v1162, %v1039
    %v1176 = vsel %vm1167, %v1163, %v1043
    %v1177 = vsel %vm1167, %v1164, %v1047
    %v1178 = vsel %vm1167, %v1165, %v1051
    %v1179 = vsel %vm1167, %v1166, %v1055
    %vm1180 = vcmask 1044480
    %v1181 = vsel %vm1180, %v1168, %v1071
    %v1182 = vsel %vm1180, %v1169, %v1075
    %v1183 = vsel %vm1180, %v1170, %v1079
    %v1184 = vsel %vm1180, %v1171, %v1083
    %v1185 = vsel %vm1180, %v1172, %v1087
    %v1186 = vsel %vm1180, %v1173, %v1091
    %v1187 = vsel %vm1180, %v1174, %v1095
    %v1188 = vsel %vm1180, %v1175, %v1099
    %v1189 = vsel %vm1180, %v1176, %v1103
    %v1190 = vsel %vm1180, %v1177, %v1107
    %v1191 = vsel %vm1180, %v1178, %v1111
    %v1192 = vsel %vm1180, %v1179, %v1115
    %v1198 = vunpack.c.l.s4 1983009808
    %v1199 = vunpack.c.0.s8 %v1198
    %v1200 = vlaneseq
    %v1201 = vshrl.u32 %v1200, 7
    %v1202 = vsub.s32 %v1199, %v1201
    %v1203 = vrot.slane %v1181, %v1202
    %v1204 = vcombine.high %v1203, %v1203
    %v1206 = vunpack.c.l.s4 1983009808
    %v1207 = vunpack.c.0.s8 %v1206
    %v1208 = vlaneseq
    %v1209 = vshrl.u32 %v1208, 7
    %v1210 = vsub.s32 %v1207, %v1209
    %v1211 = vrot.slane %v1182, %v1210
    %v1212 = vcombine.high %v1211, %v1211
    %v1214 = vunpack.c.l.s4 1983009808
    %v1215 = vunpack.c.0.s8 %v1214
    %v1216 = vlaneseq
    %v1217 = vshrl.u32 %v1216, 7
    %v1218 = vsub.s32 %v1215, %v1217
    %v1219 = vrot.slane %v1187, %v1218
    %v1220 = vcombine.high %v1219, %v1219
    %v1222 = vunpack.c.l.s4 1983009808
    %v1223 = vunpack.c.0.s8 %v1222
    %v1224 = vlaneseq
    %v1225 = vshrl.u32 %v1224, 7
    %v1226 = vsub.s32 %v1223, %v1225
    %v1227 = vrot.slane %v1188, %v1226
    %v1228 = vcombine.high %v1227, %v1227
    %vm1229 = vcmask 1042434
    %vm1230 = vmor %vm1128, %vm1229
    %vm1231 = vcmask 1044484
    %vm1232 = vmor %vm1230, %vm1231
    %vm1233 = vcmask 1046534
    %vm1234 = vmor %vm1232, %vm1233
    %v1235 = vrot.slane %v1203, 7
    %v1236 = vrot.slane %v1235, 2
    %v1237 = vrot.slane %v1204, 7
    %v1238 = vsel %vm1234, %v1236, %v1237
    %v1239 = vrot.slane %v1211, 7
    %v1240 = vrot.slane %v1239, 2
    %v1241 = vrot.slane %v1212, 7
    %v1242 = vsel %vm1234, %v1240, %v1241
    %v1243 = vrot.slane %v1219, 7
    %v1244 = vrot.slane %v1243, 2
    %v1245 = vrot.slane %v1220, 7
    %v1246 = vsel %vm1234, %v1244, %v1245
    %v1247 = vrot.slane %v1227, 7
    %v1248 = vrot.slane %v1247, 2
    %v1249 = vrot.slane %v1228, 7
    %v1250 = vsel %vm1234, %v1248, %v1249
    %v1251 = vcombine.low %v1181, %v1182
    %v1252 = vcombine.low %v1187, %v1188
    %v1254 = vunpack.c.l.s4 1983009808
    %v1255 = vunpack.c.0.s8 %v1254
    %v1256 = vlaneseq
    %v1257 = vshrl.u32 %v1256, 7
    %v1258 = vsub.s32 %v1255, %v1257
    %v1259 = vrot.slane %v1251, %v1258
    %v1261 = vunpack.c.l.s4 1983009808
    %v1262 = vunpack.c.0.s8 %v1261
    %v1263 = vlaneseq
    %v1264 = vshrl.u32 %v1263, 7
    %v1265 = vsub.s32 %v1262, %v1264
    %v1266 = vrot.slane %v1252, %v1265
    %v1267 = vcombine.low %v1259, %v1266
    %v1269 = vcombine.low %v1238, %v1242
    %v1270 = vcombine.low %v1246, %v1250
    %v1272 = vunpack.c.l.s4 1983009808
    %v1273 = vunpack.c.0.s8 %v1272
    %v1274 = vlaneseq
    %v1275 = vshrl.u32 %v1274, 7
    %v1276 = vsub.s32 %v1273, %v1275
    %v1277 = vrot.slane %v1269, %v1276
    %v1279 = vunpack.c.l.s4 1983009808
    %v1280 = vunpack.c.0.s8 %v1279
    %v1281 = vlaneseq
    %v1282 = vshrl.u32 %v1281, 7
    %v1283 = vsub.s32 %v1280, %v1282
    %v1284 = vrot.slane %v1270, %v1283
    %v1285 = vcombine.low %v1277, %v1284
    %v1287 = vpack.c.bf16 %v1267, %v1267
    %v1288 = vpack.c.bf16 %v1285, %v1285
    %v1289 = vld [vmem:[%s3] sm:$0xf]
    %v1290 = vld [vmem:[%s3 + $0x4] sm:$0xf]
    %v1291 = vld [vmem:[%s3 + $0x8] sm:$0xf]
    %v1292 = vld [vmem:[%s3 + $0xc] sm:$0xf]
    %v1293 = vld [vmem:[%s3 + $0x10] sm:$0xf]
    %v1294 = vld [vmem:[%s3 + $0x14] sm:$0xf]
    %v1295 = vld [vmem:[%s3 + $0x18] sm:$0xf]
    %v1296 = vld [vmem:[%s3 + $0x1c] sm:$0xf]
    %v1297 = vld [vmem:[%s3 + $0x20] sm:$0xf]
    %v1298 = vld [vmem:[%s3 + $0x24] sm:$0xf]
    %v1299 = vld [vmem:[%s3 + $0x28] sm:$0xf]
    %v1300 = vld [vmem:[%s3 + $0x2c] sm:$0xf]
    %v1301 = vld [vmem:[%s3 + $0x30] sm:$0xf]
    %v1302 = vld [vmem:[%s3 + $0x34] sm:$0xf]
    %v1303 = vld [vmem:[%s3 + $0x38] sm:$0xf]
    %v1304 = vld [vmem:[%s3 + $0x3c] sm:$0xf]
    %v1305 = vld [vmem:[%s3 + $0x40] sm:$0xf]
    %v1306 = vld [vmem:[%s3 + $0x44] sm:$0xf]
    %v1307 = vld [vmem:[%s3 + $0x48] sm:$0xf]
    %v1308 = vld [vmem:[%s3 + $0x4c] sm:$0xf]
    %v1309 = vld [vmem:[%s3 + $0x50] sm:$0xf]
    %v1310 = vld [vmem:[%s3 + $0x54] sm:$0xf]
    %v1311 = vld [vmem:[%s3 + $0x58] sm:$0xf]
    %v1312 = vld [vmem:[%s3 + $0x5c] sm:$0xf]
    %v1313 = vld [vmem:[%s3 + $0x60] sm:$0xf]
    %v1314 = vld [vmem:[%s3 + $0x64] sm:$0xf]
    %v1315 = vld [vmem:[%s3 + $0x68] sm:$0xf]
    %v1316 = vld [vmem:[%s3 + $0x6c] sm:$0xf]
    %v1317 = vld [vmem:[%s3 + $0x70] sm:$0xf]
    %v1318 = vld [vmem:[%s3 + $0x74] sm:$0xf]
    %v1319 = vld [vmem:[%s3 + $0x78] sm:$0xf]
    %v1320 = vld [vmem:[%s3 + $0x7c] sm:$0xf]
    %v1321 = vcombine.high %v1181, %v1181
    %v1323 = vunpack.c.l.s4 1983009808
    %v1324 = vunpack.c.0.s8 %v1323
    %v1325 = vlaneseq
    %v1326 = vshrl.u32 %v1325, 7
    %v1327 = vsub.s32 %v1324, %v1326
    %v1328 = vrot.slane %v1321, %v1327
    %v1329 = vcombine.high %v1182, %v1182
    %v1331 = vunpack.c.l.s4 1983009808
    %v1332 = vunpack.c.0.s8 %v1331
    %v1333 = vlaneseq
    %v1334 = vshrl.u32 %v1333, 7
    %v1335 = vsub.s32 %v1332, %v1334
    %v1336 = vrot.slane %v1329, %v1335
    %v1337 = vcombine.high %v1187, %v1187
    %v1339 = vunpack.c.l.s4 1983009808
    %v1340 = vunpack.c.0.s8 %v1339
    %v1341 = vlaneseq
    %v1342 = vshrl.u32 %v1341, 7
    %v1343 = vsub.s32 %v1340, %v1342
    %v1344 = vrot.slane %v1337, %v1343
    %v1345 = vcombine.high %v1188, %v1188
    %v1347 = vunpack.c.l.s4 1983009808
    %v1348 = vunpack.c.0.s8 %v1347
    %v1349 = vlaneseq
    %v1350 = vshrl.u32 %v1349, 7
    %v1351 = vsub.s32 %v1348, %v1350
    %v1352 = vrot.slane %v1345, %v1351
    %v1353 = vrot.slane %v1237, 2
    %v1354 = vrot.slane %v1328, 7
    %v1355 = vsel %vm1234, %v1353, %v1354
    %v1356 = vrot.slane %v1241, 2
    %v1357 = vrot.slane %v1336, 7
    %v1358 = vsel %vm1234, %v1356, %v1357
    %v1359 = vrot.slane %v1245, 2
    %v1360 = vrot.slane %v1344, 7
    %v1361 = vsel %vm1234, %v1359, %v1360
    %v1362 = vrot.slane %v1249, 2
    %v1363 = vrot.slane %v1352, 7
    %v1364 = vsel %vm1234, %v1362, %v1363
    %v1365 = vcombine.low %v1204, %v1212
    %v1366 = vcombine.low %v1220, %v1228
    %v1368 = vunpack.c.l.s4 1983009808
    %v1369 = vunpack.c.0.s8 %v1368
    %v1370 = vlaneseq
    %v1371 = vshrl.u32 %v1370, 7
    %v1372 = vsub.s32 %v1369, %v1371
    %v1373 = vrot.slane %v1365, %v1372
    %v1375 = vunpack.c.l.s4 1983009808
    %v1376 = vunpack.c.0.s8 %v1375
    %v1377 = vlaneseq
    %v1378 = vshrl.u32 %v1377, 7
    %v1379 = vsub.s32 %v1376, %v1378
    %v1380 = vrot.slane %v1366, %v1379
    %v1381 = vcombine.low %v1373, %v1380
    %v1383 = vcombine.low %v1355, %v1358
    %v1384 = vcombine.low %v1361, %v1364
    %v1386 = vunpack.c.l.s4 1983009808
    %v1387 = vunpack.c.0.s8 %v1386
    %v1388 = vlaneseq
    %v1389 = vshrl.u32 %v1388, 7
    %v1390 = vsub.s32 %v1387, %v1389
    %v1391 = vrot.slane %v1383, %v1390
    %v1393 = vunpack.c.l.s4 1983009808
    %v1394 = vunpack.c.0.s8 %v1393
    %v1395 = vlaneseq
    %v1396 = vshrl.u32 %v1395, 7
    %v1397 = vsub.s32 %v1394, %v1396
    %v1398 = vrot.slane %v1384, %v1397
    %v1399 = vcombine.low %v1391, %v1398
    %v1401 = vpack.c.bf16 %v1381, %v1381
    %v1402 = vpack.c.bf16 %v1399, %v1399
    %s1403 = scalar_lea.vmem %s3, 128
    %v1404 = vld [vmem:[%s1403] sm:$0xf]
    %v1405 = vld [vmem:[%s1403 + $0x4] sm:$0xf]
    %v1406 = vld [vmem:[%s1403 + $0x8] sm:$0xf]
    %v1407 = vld [vmem:[%s1403 + $0xc] sm:$0xf]
    %v1408 = vld [vmem:[%s1403 + $0x10] sm:$0xf]
    %v1409 = vld [vmem:[%s1403 + $0x14] sm:$0xf]
    %v1410 = vld [vmem:[%s1403 + $0x18] sm:$0xf]
    %v1411 = vld [vmem:[%s1403 + $0x1c] sm:$0xf]
    %v1412 = vld [vmem:[%s1403 + $0x20] sm:$0xf]
    %v1413 = vld [vmem:[%s1403 + $0x24] sm:$0xf]
    %v1414 = vld [vmem:[%s1403 + $0x28] sm:$0xf]
    %v1415 = vld [vmem:[%s1403 + $0x2c] sm:$0xf]
    %v1416 = vld [vmem:[%s1403 + $0x30] sm:$0xf]
    %v1417 = vld [vmem:[%s1403 + $0x34] sm:$0xf]
    %v1418 = vld [vmem:[%s1403 + $0x38] sm:$0xf]
    %v1419 = vld [vmem:[%s1403 + $0x3c] sm:$0xf]
    %v1420 = vld [vmem:[%s1403 + $0x40] sm:$0xf]
    %v1421 = vld [vmem:[%s1403 + $0x44] sm:$0xf]
    %v1422 = vld [vmem:[%s1403 + $0x48] sm:$0xf]
    %v1423 = vld [vmem:[%s1403 + $0x4c] sm:$0xf]
    %v1424 = vld [vmem:[%s1403 + $0x50] sm:$0xf]
    %v1425 = vld [vmem:[%s1403 + $0x54] sm:$0xf]
    %v1426 = vld [vmem:[%s1403 + $0x58] sm:$0xf]
    %v1427 = vld [vmem:[%s1403 + $0x5c] sm:$0xf]
    %v1428 = vld [vmem:[%s1403 + $0x60] sm:$0xf]
    %v1429 = vld [vmem:[%s1403 + $0x64] sm:$0xf]
    %v1430 = vld [vmem:[%s1403 + $0x68] sm:$0xf]
    %v1431 = vld [vmem:[%s1403 + $0x6c] sm:$0xf]
    %v1432 = vld [vmem:[%s1403 + $0x70] sm:$0xf]
    %v1433 = vld [vmem:[%s1403 + $0x74] sm:$0xf]
    %v1434 = vld [vmem:[%s1403 + $0x78] sm:$0xf]
    %v1435 = vld [vmem:[%s1403 + $0x7c] sm:$0xf]
    %v1468 = vunpack.c.l.b16 %v1404
    %v1469 = vunpack.c.l.b16 %v1405
    %v1470 = vunpack.c.l.b16 %v1406
    %v1471 = vunpack.c.l.b16 %v1407
    %v1472 = vunpack.c.l.b16 %v1408
    %v1473 = vunpack.c.l.b16 %v1409
    %v1474 = vunpack.c.l.b16 %v1410
    %v1475 = vunpack.c.l.b16 %v1411
    %v1476 = vunpack.c.l.b16 %v1412
    %v1477 = vunpack.c.l.b16 %v1413
    %v1478 = vunpack.c.l.b16 %v1414
    %v1479 = vunpack.c.l.b16 %v1415
    %v1480 = vunpack.c.l.b16 %v1416
    %v1481 = vunpack.c.l.b16 %v1417
    %v1482 = vunpack.c.l.b16 %v1418
    %v1483 = vunpack.c.l.b16 %v1419
    %v1484 = vunpack.c.l.b16 %v1420
    %v1485 = vunpack.c.l.b16 %v1421
    %v1486 = vunpack.c.l.b16 %v1422
    %v1487 = vunpack.c.l.b16 %v1423
    %v1488 = vunpack.c.l.b16 %v1424
    %v1489 = vunpack.c.l.b16 %v1425
    %v1490 = vunpack.c.l.b16 %v1426
    %v1491 = vunpack.c.l.b16 %v1427
    %v1492 = vunpack.c.l.b16 %v1428
    %v1493 = vunpack.c.l.b16 %v1429
    %v1494 = vunpack.c.l.b16 %v1430
    %v1495 = vunpack.c.l.b16 %v1431
    %v1496 = vunpack.c.l.b16 %v1432
    %v1497 = vunpack.c.l.b16 %v1433
    %v1498 = vunpack.c.l.b16 %v1434
    %v1499 = vunpack.c.l.b16 %v1435
    %v1500 = vpack.c.b16 %v1469, %v1468
    %v1501 = vpack.c.b16 %v1471, %v1470
    %v1502 = vpack.c.b16 %v1473, %v1472
    %v1503 = vpack.c.b16 %v1475, %v1474
    %v1504 = vpack.c.b16 %v1477, %v1476
    %v1505 = vpack.c.b16 %v1479, %v1478
    %v1506 = vpack.c.b16 %v1481, %v1480
    %v1507 = vpack.c.b16 %v1483, %v1482
    %v1508 = vpack.c.b16 %v1485, %v1484
    %v1509 = vpack.c.b16 %v1487, %v1486
    %v1510 = vpack.c.b16 %v1489, %v1488
    %v1511 = vpack.c.b16 %v1491, %v1490
    %v1512 = vpack.c.b16 %v1493, %v1492
    %v1513 = vpack.c.b16 %v1495, %v1494
    %v1514 = vpack.c.b16 %v1497, %v1496
    %v1515 = vpack.c.b16 %v1499, %v1498
    %1532 = vmatprep.subr.bf16.mxu0 0
    %1533 = vmatpush1.bf16.msra.mxu0 %v1500
    %1534 = vmatprep.subr.bf16.mxu0 0
    %1535 = vmatpush1.bf16.msra.mxu0 %v1501
    %1536 = vmatprep.subr.bf16.mxu0 0
    %1537 = vmatpush1.bf16.msra.mxu0 %v1502
    %1538 = vmatprep.subr.bf16.mxu0 0
    %1539 = vmatpush1.bf16.msra.mxu0 %v1503
    %1540 = vmatprep.subr.bf16.mxu0 0
    %1541 = vmatpush1.bf16.msra.mxu0 %v1504
    %1542 = vmatprep.subr.bf16.mxu0 0
    %1543 = vmatpush1.bf16.msra.mxu0 %v1505
    %1544 = vmatprep.subr.bf16.mxu0 0
    %1545 = vmatpush1.bf16.msra.mxu0 %v1506
    %1546 = vmatprep.subr.bf16.mxu0 0
    %1547 = vmatpush1.bf16.msra.mxu0 %v1507
    %1548 = vmatprep.subr.bf16.mxu0 0
    %1549 = vmatpush1.bf16.msra.mxu0 %v1508
    %1550 = vmatprep.subr.bf16.mxu0 0
    %1551 = vmatpush1.bf16.msra.mxu0 %v1509
    %1552 = vmatprep.subr.bf16.mxu0 0
    %1553 = vmatpush1.bf16.msra.mxu0 %v1510
    %1554 = vmatprep.subr.bf16.mxu0 0
    %1555 = vmatpush1.bf16.msra.mxu0 %v1511
    %1556 = vmatprep.subr.bf16.mxu0 0
    %1557 = vmatpush1.bf16.msra.mxu0 %v1512
    %1558 = vmatprep.subr.bf16.mxu0 0
    %1559 = vmatpush1.bf16.msra.mxu0 %v1513
    %1560 = vmatprep.subr.bf16.mxu0 0
    %1561 = vmatpush1.bf16.msra.mxu0 %v1514
    %1562 = vmatprep.subr.bf16.mxu0 0
    %1563 = vmatpush1.bf16.msra.mxu0 %v1515
    %1564 = vmatprep.mubr.bf16.mxu0 %v1402
    %1565 = vmatmul.mubr.bf16.gmra.mrb[0].mxu0 %v1401
    %v1566 = vpop.f32.mrb[0].mxu0
    %v1567 = vadd.f32 0.0, %v1566
    %v1568 = vpop.f32.mrb[0].mxu0
    %v1569 = vpop.f32.mrb[0].mxu0
    %v1570 = vpop.f32.mrb[0].mxu0
    %1571 = vdwg.mxu0
    %v1604 = vunpack.c.l.b16 %v1289
    %v1605 = vunpack.c.l.b16 %v1290
    %v1606 = vunpack.c.l.b16 %v1291
    %v1607 = vunpack.c.l.b16 %v1292
    %v1608 = vunpack.c.l.b16 %v1293
    %v1609 = vunpack.c.l.b16 %v1294
    %v1610 = vunpack.c.l.b16 %v1295
    %v1611 = vunpack.c.l.b16 %v1296
    %v1612 = vunpack.c.l.b16 %v1297
    %v1613 = vunpack.c.l.b16 %v1298
    %v1614 = vunpack.c.l.b16 %v1299
    %v1615 = vunpack.c.l.b16 %v1300
    %v1616 = vunpack.c.l.b16 %v1301
    %v1617 = vunpack.c.l.b16 %v1302
    %v1618 = vunpack.c.l.b16 %v1303
    %v1619 = vunpack.c.l.b16 %v1304
    %v1620 = vunpack.c.l.b16 %v1305
    %v1621 = vunpack.c.l.b16 %v1306
    %v1622 = vunpack.c.l.b16 %v1307
    %v1623 = vunpack.c.l.b16 %v1308
    %v1624 = vunpack.c.l.b16 %v1309
    %v1625 = vunpack.c.l.b16 %v1310
    %v1626 = vunpack.c.l.b16 %v1311
    %v1627 = vunpack.c.l.b16 %v1312
    %v1628 = vunpack.c.l.b16 %v1313
    %v1629 = vunpack.c.l.b16 %v1314
    %v1630 = vunpack.c.l.b16 %v1315
    %v1631 = vunpack.c.l.b16 %v1316
    %v1632 = vunpack.c.l.b16 %v1317
    %v1633 = vunpack.c.l.b16 %v1318
    %v1634 = vunpack.c.l.b16 %v1319
    %v1635 = vunpack.c.l.b16 %v1320
    %v1636 = vpack.c.b16 %v1605, %v1604
    %v1637 = vpack.c.b16 %v1607, %v1606
    %v1638 = vpack.c.b16 %v1609, %v1608
    %v1639 = vpack.c.b16 %v1611, %v1610
    %v1640 = vpack.c.b16 %v1613, %v1612
    %v1641 = vpack.c.b16 %v1615, %v1614
    %v1642 = vpack.c.b16 %v1617, %v1616
    %v1643 = vpack.c.b16 %v1619, %v1618
    %v1644 = vpack.c.b16 %v1621, %v1620
    %v1645 = vpack.c.b16 %v1623, %v1622
    %v1646 = vpack.c.b16 %v1625, %v1624
    %v1647 = vpack.c.b16 %v1627, %v1626
    %v1648 = vpack.c.b16 %v1629, %v1628
    %v1649 = vpack.c.b16 %v1631, %v1630
    %v1650 = vpack.c.b16 %v1633, %v1632
    %v1651 = vpack.c.b16 %v1635, %v1634
    %1668 = vmatprep.subr.bf16.mxu0 0
    %1669 = vmatpush1.bf16.msra.mxu0 %v1636
    %1670 = vmatprep.subr.bf16.mxu0 0
    %1671 = vmatpush1.bf16.msra.mxu0 %v1637
    %1672 = vmatprep.subr.bf16.mxu0 0
    %1673 = vmatpush1.bf16.msra.mxu0 %v1638
    %1674 = vmatprep.subr.bf16.mxu0 0
    %1675 = vmatpush1.bf16.msra.mxu0 %v1639
    %1676 = vmatprep.subr.bf16.mxu0 0
    %1677 = vmatpush1.bf16.msra.mxu0 %v1640
    %1678 = vmatprep.subr.bf16.mxu0 0
    %1679 = vmatpush1.bf16.msra.mxu0 %v1641
    %1680 = vmatprep.subr.bf16.mxu0 0
    %1681 = vmatpush1.bf16.msra.mxu0 %v1642
    %1682 = vmatprep.subr.bf16.mxu0 0
    %1683 = vmatpush1.bf16.msra.mxu0 %v1643
    %1684 = vmatprep.subr.bf16.mxu0 0
    %1685 = vmatpush1.bf16.msra.mxu0 %v1644
    %1686 = vmatprep.subr.bf16.mxu0 0
    %1687 = vmatpush1.bf16.msra.mxu0 %v1645
    %1688 = vmatprep.subr.bf16.mxu0 0
    %1689 = vmatpush1.bf16.msra.mxu0 %v1646
    %1690 = vmatprep.subr.bf16.mxu0 0
    %1691 = vmatpush1.bf16.msra.mxu0 %v1647
    %1692 = vmatprep.subr.bf16.mxu0 0
    %1693 = vmatpush1.bf16.msra.mxu0 %v1648
    %1694 = vmatprep.subr.bf16.mxu0 0
    %1695 = vmatpush1.bf16.msra.mxu0 %v1649
    %1696 = vmatprep.subr.bf16.mxu0 0
    %1697 = vmatpush1.bf16.msra.mxu0 %v1650
    %1698 = vmatprep.subr.bf16.mxu0 0
    %1699 = vmatpush1.bf16.msra.mxu0 %v1651
    %1700 = vmatprep.mubr.bf16.mxu0 %v1288
    %1701 = vmatmul.mubr.bf16.gmra.mrb[0].mxu0 %v1287
    %v1702 = vpop.f32.mrb[0].mxu0
    %v1703 = vadd.f32 %v1567, %v1702
    %v1704 = vpop.f32.mrb[0].mxu0
    %v1705 = vpop.f32.mrb[0].mxu0
    %v1706 = vpop.f32.mrb[0].mxu0
    %1707 = vdwg.mxu0
    %v1708 = vcombine.low %v1328, %v1336
    %v1709 = vcombine.low %v1344, %v1352
    %v1711 = vunpack.c.l.s4 1983009808
    %v1712 = vunpack.c.0.s8 %v1711
    %v1713 = vlaneseq
    %v1714 = vshrl.u32 %v1713, 7
    %v1715 = vsub.s32 %v1712, %v1714
    %v1716 = vrot.slane %v1708, %v1715
    %v1718 = vunpack.c.l.s4 1983009808
    %v1719 = vunpack.c.0.s8 %v1718
    %v1720 = vlaneseq
    %v1721 = vshrl.u32 %v1720, 7
    %v1722 = vsub.s32 %v1719, %v1721
    %v1723 = vrot.slane %v1709, %v1722
    %v1724 = vcombine.low %v1716, %v1723
    %v1728 = vcombine.low %v1182, %v1183
    %v1729 = vcombine.low %v1188, %v1189
    %v1731 = vunpack.c.l.s4 1983009808
    %v1732 = vunpack.c.0.s8 %v1731
    %v1733 = vlaneseq
    %v1734 = vshrl.u32 %v1733, 7
    %v1735 = vsub.s32 %v1732, %v1734
    %v1736 = vrot.slane %v1728, %v1735
    %v1738 = vunpack.c.l.s4 1983009808
    %v1739 = vunpack.c.0.s8 %v1738
    %v1740 = vlaneseq
    %v1741 = vshrl.u32 %v1740, 7
    %v1742 = vsub.s32 %v1739, %v1741
    %v1743 = vrot.slane %v1729, %v1742
    %v1744 = vcombine.low %v1736, %v1743
    %v1746 = vpack.c.bf16 %v1724, %v1724
    %v1747 = vpack.c.bf16 %v1744, %v1744
    %s1748 = scalar_lea.vmem %s3, 256
    %v1749 = vld [vmem:[%s1748] sm:$0xf]
    %v1750 = vld [vmem:[%s1748 + $0x4] sm:$0xf]
    %v1751 = vld [vmem:[%s1748 + $0x8] sm:$0xf]
    %v1752 = vld [vmem:[%s1748 + $0xc] sm:$0xf]
    %v1753 = vld [vmem:[%s1748 + $0x10] sm:$0xf]
    %v1754 = vld [vmem:[%s1748 + $0x14] sm:$0xf]
    %v1755 = vld [vmem:[%s1748 + $0x18] sm:$0xf]
    %v1756 = vld [vmem:[%s1748 + $0x1c] sm:$0xf]
    %v1757 = vld [vmem:[%s1748 + $0x20] sm:$0xf]
    %v1758 = vld [vmem:[%s1748 + $0x24] sm:$0xf]
    %v1759 = vld [vmem:[%s1748 + $0x28] sm:$0xf]
    %v1760 = vld [vmem:[%s1748 + $0x2c] sm:$0xf]
    %v1761 = vld [vmem:[%s1748 + $0x30] sm:$0xf]
    %v1762 = vld [vmem:[%s1748 + $0x34] sm:$0xf]
    %v1763 = vld [vmem:[%s1748 + $0x38] sm:$0xf]
    %v1764 = vld [vmem:[%s1748 + $0x3c] sm:$0xf]
    %v1765 = vld [vmem:[%s1748 + $0x40] sm:$0xf]
    %v1766 = vld [vmem:[%s1748 + $0x44] sm:$0xf]
    %v1767 = vld [vmem:[%s1748 + $0x48] sm:$0xf]
    %v1768 = vld [vmem:[%s1748 + $0x4c] sm:$0xf]
    %v1769 = vld [vmem:[%s1748 + $0x50] sm:$0xf]
    %v1770 = vld [vmem:[%s1748 + $0x54] sm:$0xf]
    %v1771 = vld [vmem:[%s1748 + $0x58] sm:$0xf]
    %v1772 = vld [vmem:[%s1748 + $0x5c] sm:$0xf]
    %v1773 = vld [vmem:[%s1748 + $0x60] sm:$0xf]
    %v1774 = vld [vmem:[%s1748 + $0x64] sm:$0xf]
    %v1775 = vld [vmem:[%s1748 + $0x68] sm:$0xf]
    %v1776 = vld [vmem:[%s1748 + $0x6c] sm:$0xf]
    %v1777 = vld [vmem:[%s1748 + $0x70] sm:$0xf]
    %v1778 = vld [vmem:[%s1748 + $0x74] sm:$0xf]
    %v1779 = vld [vmem:[%s1748 + $0x78] sm:$0xf]
    %v1780 = vld [vmem:[%s1748 + $0x7c] sm:$0xf]
    %v1813 = vunpack.c.l.b16 %v1749
    %v1814 = vunpack.c.l.b16 %v1750
    %v1815 = vunpack.c.l.b16 %v1751
    %v1816 = vunpack.c.l.b16 %v1752
    %v1817 = vunpack.c.l.b16 %v1753
    %v1818 = vunpack.c.l.b16 %v1754
    %v1819 = vunpack.c.l.b16 %v1755
    %v1820 = vunpack.c.l.b16 %v1756
    %v1821 = vunpack.c.l.b16 %v1757
    %v1822 = vunpack.c.l.b16 %v1758
    %v1823 = vunpack.c.l.b16 %v1759
    %v1824 = vunpack.c.l.b16 %v1760
    %v1825 = vunpack.c.l.b16 %v1761
    %v1826 = vunpack.c.l.b16 %v1762
    %v1827 = vunpack.c.l.b16 %v1763
    %v1828 = vunpack.c.l.b16 %v1764
    %v1829 = vunpack.c.l.b16 %v1765
    %v1830 = vunpack.c.l.b16 %v1766
    %v1831 = vunpack.c.l.b16 %v1767
    %v1832 = vunpack.c.l.b16 %v1768
    %v1833 = vunpack.c.l.b16 %v1769
    %v1834 = vunpack.c.l.b16 %v1770
    %v1835 = vunpack.c.l.b16 %v1771
    %v1836 = vunpack.c.l.b16 %v1772
    %v1837 = vunpack.c.l.b16 %v1773
    %v1838 = vunpack.c.l.b16 %v1774
    %v1839 = vunpack.c.l.b16 %v1775
    %v1840 = vunpack.c.l.b16 %v1776
    %v1841 = vunpack.c.l.b16 %v1777
    %v1842 = vunpack.c.l.b16 %v1778
    %v1843 = vunpack.c.l.b16 %v1779
    %v1844 = vunpack.c.l.b16 %v1780
    %v1845 = vpack.c.b16 %v1814, %v1813
    %v1846 = vpack.c.b16 %v1816, %v1815
    %v1847 = vpack.c.b16 %v1818, %v1817
    %v1848 = vpack.c.b16 %v1820, %v1819
    %v1849 = vpack.c.b16 %v1822, %v1821
    %v1850 = vpack.c.b16 %v1824, %v1823
    %v1851 = vpack.c.b16 %v1826, %v1825
    %v1852 = vpack.c.b16 %v1828, %v1827
    %v1853 = vpack.c.b16 %v1830, %v1829
    %v1854 = vpack.c.b16 %v1832, %v1831
    %v1855 = vpack.c.b16 %v1834, %v1833
    %v1856 = vpack.c.b16 %v1836, %v1835
    %v1857 = vpack.c.b16 %v1838, %v1837
    %v1858 = vpack.c.b16 %v1840, %v1839
    %v1859 = vpack.c.b16 %v1842, %v1841
    %v1860 = vpack.c.b16 %v1844, %v1843
    %1877 = vmatprep.subr.bf16.mxu0 0
    %1878 = vmatpush1.bf16.msra.mxu0 %v1845
    %1879 = vmatprep.subr.bf16.mxu0 0
    %1880 = vmatpush1.bf16.msra.mxu0 %v1846
    %1881 = vmatprep.subr.bf16.mxu0 0
    %1882 = vmatpush1.bf16.msra.mxu0 %v1847
    %1883 = vmatprep.subr.bf16.mxu0 0
    %1884 = vmatpush1.bf16.msra.mxu0 %v1848
    %1885 = vmatprep.subr.bf16.mxu0 0
    %1886 = vmatpush1.bf16.msra.mxu0 %v1849
    %1887 = vmatprep.subr.bf16.mxu0 0
    %1888 = vmatpush1.bf16.msra.mxu0 %v1850
    %1889 = vmatprep.subr.bf16.mxu0 0
    %1890 = vmatpush1.bf16.msra.mxu0 %v1851
    %1891 = vmatprep.subr.bf16.mxu0 0
    %1892 = vmatpush1.bf16.msra.mxu0 %v1852
    %1893 = vmatprep.subr.bf16.mxu0 0
    %1894 = vmatpush1.bf16.msra.mxu0 %v1853
    %1895 = vmatprep.subr.bf16.mxu0 0
    %1896 = vmatpush1.bf16.msra.mxu0 %v1854
    %1897 = vmatprep.subr.bf16.mxu0 0
    %1898 = vmatpush1.bf16.msra.mxu0 %v1855
    %1899 = vmatprep.subr.bf16.mxu0 0
    %1900 = vmatpush1.bf16.msra.mxu0 %v1856
    %1901 = vmatprep.subr.bf16.mxu0 0
    %1902 = vmatpush1.bf16.msra.mxu0 %v1857
    %1903 = vmatprep.subr.bf16.mxu0 0
    %1904 = vmatpush1.bf16.msra.mxu0 %v1858
    %1905 = vmatprep.subr.bf16.mxu0 0
    %1906 = vmatpush1.bf16.msra.mxu0 %v1859
    %1907 = vmatprep.subr.bf16.mxu0 0
    %1908 = vmatpush1.bf16.msra.mxu0 %v1860
    %1909 = vmatprep.mubr.bf16.mxu0 %v1747
    %1910 = vmatmul.mubr.bf16.gmra.mrb[0].mxu0 %v1746
    %v1911 = vpop.f32.mrb[0].mxu0
    %v1912 = vadd.f32 0.0, %v1911
    %v1913 = vpop.f32.mrb[0].mxu0
    %v1914 = vpop.f32.mrb[0].mxu0
    %v1915 = vpop.f32.mrb[0].mxu0
    %1916 = vdwg.mxu0
    %v1917 = vadd.f32 %v1703, %v1912
    %v1919 = vunpack.c.l.s4 1983009808
    %v1920 = vunpack.c.0.s8 %v1919
    %v1921 = vlaneseq
    %v1922 = vshrl.u32 %v1921, 7
    %v1923 = vsub.s32 %v1920, %v1922
    %v1924 = vrot.slane %v1183, %v1923
    %v1925 = vcombine.high %v1924, %v1924
    %v1927 = vunpack.c.l.s4 1983009808
    %v1928 = vunpack.c.0.s8 %v1927
    %v1929 = vlaneseq
    %v1930 = vshrl.u32 %v1929, 7
    %v1931 = vsub.s32 %v1928, %v1930
    %v1932 = vrot.slane %v1189, %v1931
    %v1933 = vcombine.high %v1932, %v1932
    %v1934 = vrot.slane %v1924, 7
    %v1935 = vrot.slane %v1934, 2
    %v1936 = vrot.slane %v1925, 7
    %v1937 = vsel %vm1234, %v1935, %v1936
    %v1938 = vrot.slane %v1932, 7
    %v1939 = vrot.slane %v1938, 2
    %v1940 = vrot.slane %v1933, 7
    %v1941 = vsel %vm1234, %v1939, %v1940
    %v1942 = vcombine.low %v1242, %v1937
    %v1943 = vcombine.low %v1250, %v1941
    %v1945 = vunpack.c.l.s4 1983009808
    %v1946 = vunpack.c.0.s8 %v1945
    %v1947 = vlaneseq
    %v1948 = vshrl.u32 %v1947, 7
    %v1949 = vsub.s32 %v1946, %v1948
    %v1950 = vrot.slane %v1942, %v1949
    %v1952 = vunpack.c.l.s4 1983009808
    %v1953 = vunpack.c.0.s8 %v1952
    %v1954 = vlaneseq
    %v1955 = vshrl.u32 %v1954, 7
    %v1956 = vsub.s32 %v1953, %v1955
    %v1957 = vrot.slane %v1943, %v1956
    %v1958 = vcombine.low %v1950, %v1957
    %v1960 = vcombine.low %v1212, %v1925
    %v1961 = vcombine.low %v1228, %v1933
    %v1963 = vunpack.c.l.s4 1983009808
    %v1964 = vunpack.c.0.s8 %v1963
    %v1965 = vlaneseq
    %v1966 = vshrl.u32 %v1965, 7
    %v1967 = vsub.s32 %v1964, %v1966
    %v1968 = vrot.slane %v1960, %v1967
    %v1970 = vunpack.c.l.s4 1983009808
    %v1971 = vunpack.c.0.s8 %v1970
    %v1972 = vlaneseq
    %v1973 = vshrl.u32 %v1972, 7
    %v1974 = vsub.s32 %v1971, %v1973
    %v1975 = vrot.slane %v1961, %v1974
    %v1976 = vcombine.low %v1968, %v1975
    %v1978 = vpack.c.bf16 %v1958, %v1958
    %v1979 = vpack.c.bf16 %v1976, %v1976
    %s1980 = scalar_lea.vmem %s3, 384
    %v1981 = vld [vmem:[%s1980] sm:$0xf]
    %v1982 = vld [vmem:[%s1980 + $0x4] sm:$0xf]
    %v1983 = vld [vmem:[%s1980 + $0x8] sm:$0xf]
    %v1984 = vld [vmem:[%s1980 + $0xc] sm:$0xf]
    %v1985 = vld [vmem:[%s1980 + $0x10] sm:$0xf]
    %v1986 = vld [vmem:[%s1980 + $0x14] sm:$0xf]
    %v1987 = vld [vmem:[%s1980 + $0x18] sm:$0xf]
    %v1988 = vld [vmem:[%s1980 + $0x1c] sm:$0xf]
    %v1989 = vld [vmem:[%s1980 + $0x20] sm:$0xf]
    %v1990 = vld [vmem:[%s1980 + $0x24] sm:$0xf]
    %v1991 = vld [vmem:[%s1980 + $0x28] sm:$0xf]
    %v1992 = vld [vmem:[%s1980 + $0x2c] sm:$0xf]
    %v1993 = vld [vmem:[%s1980 + $0x30] sm:$0xf]
    %v1994 = vld [vmem:[%s1980 + $0x34] sm:$0xf]
    %v1995 = vld [vmem:[%s1980 + $0x38] sm:$0xf]
    %v1996 = vld [vmem:[%s1980 + $0x3c] sm:$0xf]
    %v1997 = vld [vmem:[%s1980 + $0x40] sm:$0xf]
    %v1998 = vld [vmem:[%s1980 + $0x44] sm:$0xf]
    %v1999 = vld [vmem:[%s1980 + $0x48] sm:$0xf]
    %v2000 = vld [vmem:[%s1980 + $0x4c] sm:$0xf]
    %v2001 = vld [vmem:[%s1980 + $0x50] sm:$0xf]
    %v2002 = vld [vmem:[%s1980 + $0x54] sm:$0xf]
    %v2003 = vld [vmem:[%s1980 + $0x58] sm:$0xf]
    %v2004 = vld [vmem:[%s1980 + $0x5c] sm:$0xf]
    %v2005 = vld [vmem:[%s1980 + $0x60] sm:$0xf]
    %v2006 = vld [vmem:[%s1980 + $0x64] sm:$0xf]
    %v2007 = vld [vmem:[%s1980 + $0x68] sm:$0xf]
    %v2008 = vld [vmem:[%s1980 + $0x6c] sm:$0xf]
    %v2009 = vld [vmem:[%s1980 + $0x70] sm:$0xf]
    %v2010 = vld [vmem:[%s1980 + $0x74] sm:$0xf]
    %v2011 = vld [vmem:[%s1980 + $0x78] sm:$0xf]
    %v2012 = vld [vmem:[%s1980 + $0x7c] sm:$0xf]
    %v2045 = vunpack.c.l.b16 %v1981
    %v2046 = vunpack.c.l.b16 %v1982
    %v2047 = vunpack.c.l.b16 %v1983
    %v2048 = vunpack.c.l.b16 %v1984
    %v2049 = vunpack.c.l.b16 %v1985
    %v2050 = vunpack.c.l.b16 %v1986
    %v2051 = vunpack.c.l.b16 %v1987
    %v2052 = vunpack.c.l.b16 %v1988
    %v2053 = vunpack.c.l.b16 %v1989
    %v2054 = vunpack.c.l.b16 %v1990
    %v2055 = vunpack.c.l.b16 %v1991
    %v2056 = vunpack.c.l.b16 %v1992
    %v2057 = vunpack.c.l.b16 %v1993
    %v2058 = vunpack.c.l.b16 %v1994
    %v2059 = vunpack.c.l.b16 %v1995
    %v2060 = vunpack.c.l.b16 %v1996
    %v2061 = vunpack.c.l.b16 %v1997
    %v2062 = vunpack.c.l.b16 %v1998
    %v2063 = vunpack.c.l.b16 %v1999
    %v2064 = vunpack.c.l.b16 %v2000
    %v2065 = vunpack.c.l.b16 %v2001
    %v2066 = vunpack.c.l.b16 %v2002
    %v2067 = vunpack.c.l.b16 %v2003
    %v2068 = vunpack.c.l.b16 %v2004
    %v2069 = vunpack.c.l.b16 %v2005
    %v2070 = vunpack.c.l.b16 %v2006
    %v2071 = vunpack.c.l.b16 %v2007
    %v2072 = vunpack.c.l.b16 %v2008
    %v2073 = vunpack.c.l.b16 %v2009
    %v2074 = vunpack.c.l.b16 %v2010
    %v2075 = vunpack.c.l.b16 %v2011
    %v2076 = vunpack.c.l.b16 %v2012
    %v2077 = vpack.c.b16 %v2046, %v2045
    %v2078 = vpack.c.b16 %v2048, %v2047
    %v2079 = vpack.c.b16 %v2050, %v2049
    %v2080 = vpack.c.b16 %v2052, %v2051
    %v2081 = vpack.c.b16 %v2054, %v2053
    %v2082 = vpack.c.b16 %v2056, %v2055
    %v2083 = vpack.c.b16 %v2058, %v2057
    %v2084 = vpack.c.b16 %v2060, %v2059
    %v2085 = vpack.c.b16 %v2062, %v2061
    %v2086 = vpack.c.b16 %v2064, %v2063
    %v2087 = vpack.c.b16 %v2066, %v2065
    %v2088 = vpack.c.b16 %v2068, %v2067
    %v2089 = vpack.c.b16 %v2070, %v2069
    %v2090 = vpack.c.b16 %v2072, %v2071
    %v2091 = vpack.c.b16 %v2074, %v2073
    %v2092 = vpack.c.b16 %v2076, %v2075
    %2109 = vmatprep.subr.bf16.mxu0 0
    %2110 = vmatpush1.bf16.msra.mxu0 %v2077
    %2111 = vmatprep.subr.bf16.mxu0 0
    %2112 = vmatpush1.bf16.msra.mxu0 %v2078
    %2113 = vmatprep.subr.bf16.mxu0 0
    %2114 = vmatpush1.bf16.msra.mxu0 %v2079
    %2115 = vmatprep.subr.bf16.mxu0 0
    %2116 = vmatpush1.bf16.msra.mxu0 %v2080
    %2117 = vmatprep.subr.bf16.mxu0 0
    %2118 = vmatpush1.bf16.msra.mxu0 %v2081
    %2119 = vmatprep.subr.bf16.mxu0 0
    %2120 = vmatpush1.bf16.msra.mxu0 %v2082
    %2121 = vmatprep.subr.bf16.mxu0 0
    %2122 = vmatpush1.bf16.msra.mxu0 %v2083
    %2123 = vmatprep.subr.bf16.mxu0 0
    %2124 = vmatpush1.bf16.msra.mxu0 %v2084
    %2125 = vmatprep.subr.bf16.mxu0 0
    %2126 = vmatpush1.bf16.msra.mxu0 %v2085
    %2127 = vmatprep.subr.bf16.mxu0 0
    %2128 = vmatpush1.bf16.msra.mxu0 %v2086
    %2129 = vmatprep.subr.bf16.mxu0 0
    %2130 = vmatpush1.bf16.msra.mxu0 %v2087
    %2131 = vmatprep.subr.bf16.mxu0 0
    %2132 = vmatpush1.bf16.msra.mxu0 %v2088
    %2133 = vmatprep.subr.bf16.mxu0 0
    %2134 = vmatpush1.bf16.msra.mxu0 %v2089
    %2135 = vmatprep.subr.bf16.mxu0 0
    %2136 = vmatpush1.bf16.msra.mxu0 %v2090
    %2137 = vmatprep.subr.bf16.mxu0 0
    %2138 = vmatpush1.bf16.msra.mxu0 %v2091
    %2139 = vmatprep.subr.bf16.mxu0 0
    %2140 = vmatpush1.bf16.msra.mxu0 %v2092
    %2141 = vmatprep.mubr.bf16.mxu0 %v1979
    %2142 = vmatmul.mubr.bf16.gmra.mrb[0].mxu0 %v1978
    %v2143 = vpop.f32.mrb[0].mxu0
    %v2144 = vadd.f32 0.0, %v2143
    %v2145 = vpop.f32.mrb[0].mxu0
    %v2146 = vpop.f32.mrb[0].mxu0
    %v2147 = vpop.f32.mrb[0].mxu0
    %2148 = vdwg.mxu0
    %v2149 = vadd.f32 %v1917, %v2144
    %v2150 = vcombine.high %v1183, %v1183
    %v2152 = vunpack.c.l.s4 1983009808
    %v2153 = vunpack.c.0.s8 %v2152
    %v2154 = vlaneseq
    %v2155 = vshrl.u32 %v2154, 7
    %v2156 = vsub.s32 %v2153, %v2155
    %v2157 = vrot.slane %v2150, %v2156
    %v2158 = vcombine.high %v1189, %v1189
    %v2160 = vunpack.c.l.s4 1983009808
    %v2161 = vunpack.c.0.s8 %v2160
    %v2162 = vlaneseq
    %v2163 = vshrl.u32 %v2162, 7
    %v2164 = vsub.s32 %v2161, %v2163
    %v2165 = vrot.slane %v2158, %v2164
    %v2166 = vrot.slane %v1936, 2
    %v2167 = vrot.slane %v2157, 7
    %v2168 = vsel %vm1234, %v2166, %v2167
    %v2169 = vrot.slane %v1940, 2
    %v2170 = vrot.slane %v2165, 7
    %v2171 = vsel %vm1234, %v2169, %v2170
    %v2172 = vcombine.low %v1358, %v2168
    %v2173 = vcombine.low %v1364, %v2171
    %v2175 = vunpack.c.l.s4 1983009808
    %v2176 = vunpack.c.0.s8 %v2175
    %v2177 = vlaneseq
    %v2178 = vshrl.u32 %v2177, 7
    %v2179 = vsub.s32 %v2176, %v2178
    %v2180 = vrot.slane %v2172, %v2179
    %v2182 = vunpack.c.l.s4 1983009808
    %v2183 = vunpack.c.0.s8 %v2182
    %v2184 = vlaneseq
    %v2185 = vshrl.u32 %v2184, 7
    %v2186 = vsub.s32 %v2183, %v2185
    %v2187 = vrot.slane %v2173, %v2186
    %v2188 = vcombine.low %v2180, %v2187
    %v2190 = vcombine.low %v1336, %v2157
    %v2191 = vcombine.low %v1352, %v2165
    %v2193 = vunpack.c.l.s4 1983009808
    %v2194 = vunpack.c.0.s8 %v2193
    %v2195 = vlaneseq
    %v2196 = vshrl.u32 %v2195, 7
    %v2197 = vsub.s32 %v2194, %v2196
    %v2198 = vrot.slane %v2190, %v2197
    %v2200 = vunpack.c.l.s4 1983009808
    %v2201 = vunpack.c.0.s8 %v2200
    %v2202 = vlaneseq
    %v2203 = vshrl.u32 %v2202, 7
    %v2204 = vsub.s32 %v2201, %v2203
    %v2205 = vrot.slane %v2191, %v2204
    %v2206 = vcombine.low %v2198, %v2205
    %v2208 = vpack.c.bf16 %v2188, %v2188
    %v2209 = vpack.c.bf16 %v2206, %v2206
    %s2210 = scalar_lea.vmem %s3, 512
    %v2211 = vld [vmem:[%s2210] sm:$0xf]
    %v2212 = vld [vmem:[%s2210 + $0x4] sm:$0xf]
    %v2213 = vld [vmem:[%s2210 + $0x8] sm:$0xf]
    %v2214 = vld [vmem:[%s2210 + $0xc] sm:$0xf]
    %v2215 = vld [vmem:[%s2210 + $0x10] sm:$0xf]
    %v2216 = vld [vmem:[%s2210 + $0x14] sm:$0xf]
    %v2217 = vld [vmem:[%s2210 + $0x18] sm:$0xf]
    %v2218 = vld [vmem:[%s2210 + $0x1c] sm:$0xf]
    %v2219 = vld [vmem:[%s2210 + $0x20] sm:$0xf]
    %v2220 = vld [vmem:[%s2210 + $0x24] sm:$0xf]
    %v2221 = vld [vmem:[%s2210 + $0x28] sm:$0xf]
    %v2222 = vld [vmem:[%s2210 + $0x2c] sm:$0xf]
    %v2223 = vld [vmem:[%s2210 + $0x30] sm:$0xf]
    %v2224 = vld [vmem:[%s2210 + $0x34] sm:$0xf]
    %v2225 = vld [vmem:[%s2210 + $0x38] sm:$0xf]
    %v2226 = vld [vmem:[%s2210 + $0x3c] sm:$0xf]
    %v2227 = vld [vmem:[%s2210 + $0x40] sm:$0xf]
    %v2228 = vld [vmem:[%s2210 + $0x44] sm:$0xf]
    %v2229 = vld [vmem:[%s2210 + $0x48] sm:$0xf]
    %v2230 = vld [vmem:[%s2210 + $0x4c] sm:$0xf]
    %v2231 = vld [vmem:[%s2210 + $0x50] sm:$0xf]
    %v2232 = vld [vmem:[%s2210 + $0x54] sm:$0xf]
    %v2233 = vld [vmem:[%s2210 + $0x58] sm:$0xf]
    %v2234 = vld [vmem:[%s2210 + $0x5c] sm:$0xf]
    %v2235 = vld [vmem:[%s2210 + $0x60] sm:$0xf]
    %v2236 = vld [vmem:[%s2210 + $0x64] sm:$0xf]
    %v2237 = vld [vmem:[%s2210 + $0x68] sm:$0xf]
    %v2238 = vld [vmem:[%s2210 + $0x6c] sm:$0xf]
    %v2239 = vld [vmem:[%s2210 + $0x70] sm:$0xf]
    %v2240 = vld [vmem:[%s2210 + $0x74] sm:$0xf]
    %v2241 = vld [vmem:[%s2210 + $0x78] sm:$0xf]
    %v2242 = vld [vmem:[%s2210 + $0x7c] sm:$0xf]
    %v2275 = vunpack.c.l.b16 %v2211
    %v2276 = vunpack.c.l.b16 %v2212
    %v2277 = vunpack.c.l.b16 %v2213
    %v2278 = vunpack.c.l.b16 %v2214
    %v2279 = vunpack.c.l.b16 %v2215
    %v2280 = vunpack.c.l.b16 %v2216
    %v2281 = vunpack.c.l.b16 %v2217
    %v2282 = vunpack.c.l.b16 %v2218
    %v2283 = vunpack.c.l.b16 %v2219
    %v2284 = vunpack.c.l.b16 %v2220
    %v2285 = vunpack.c.l.b16 %v2221
    %v2286 = vunpack.c.l.b16 %v2222
    %v2287 = vunpack.c.l.b16 %v2223
    %v2288 = vunpack.c.l.b16 %v2224
    %v2289 = vunpack.c.l.b16 %v2225
    %v2290 = vunpack.c.l.b16 %v2226
    %v2291 = vunpack.c.l.b16 %v2227
    %v2292 = vunpack.c.l.b16 %v2228
    %v2293 = vunpack.c.l.b16 %v2229
    %v2294 = vunpack.c.l.b16 %v2230
    %v2295 = vunpack.c.l.b16 %v2231
    %v2296 = vunpack.c.l.b16 %v2232
    %v2297 = vunpack.c.l.b16 %v2233
    %v2298 = vunpack.c.l.b16 %v2234
    %v2299 = vunpack.c.l.b16 %v2235
    %v2300 = vunpack.c.l.b16 %v2236
    %v2301 = vunpack.c.l.b16 %v2237
    %v2302 = vunpack.c.l.b16 %v2238
    %v2303 = vunpack.c.l.b16 %v2239
    %v2304 = vunpack.c.l.b16 %v2240
    %v2305 = vunpack.c.l.b16 %v2241
    %v2306 = vunpack.c.l.b16 %v2242
    %v2307 = vpack.c.b16 %v2276, %v2275
    %v2308 = vpack.c.b16 %v2278, %v2277
    %v2309 = vpack.c.b16 %v2280, %v2279
    %v2310 = vpack.c.b16 %v2282, %v2281
    %v2311 = vpack.c.b16 %v2284, %v2283
    %v2312 = vpack.c.b16 %v2286, %v2285
    %v2313 = vpack.c.b16 %v2288, %v2287
    %v2314 = vpack.c.b16 %v2290, %v2289
    %v2315 = vpack.c.b16 %v2292, %v2291
    %v2316 = vpack.c.b16 %v2294, %v2293
    %v2317 = vpack.c.b16 %v2296, %v2295
    %v2318 = vpack.c.b16 %v2298, %v2297
    %v2319 = vpack.c.b16 %v2300, %v2299
    %v2320 = vpack.c.b16 %v2302, %v2301
    %v2321 = vpack.c.b16 %v2304, %v2303
    %v2322 = vpack.c.b16 %v2306, %v2305
    %2339 = vmatprep.subr.bf16.mxu0 0
    %2340 = vmatpush1.bf16.msra.mxu0 %v2307
    %2341 = vmatprep.subr.bf16.mxu0 0
    %2342 = vmatpush1.bf16.msra.mxu0 %v2308
    %2343 = vmatprep.subr.bf16.mxu0 0
    %2344 = vmatpush1.bf16.msra.mxu0 %v2309
    %2345 = vmatprep.subr.bf16.mxu0 0
    %2346 = vmatpush1.bf16.msra.mxu0 %v2310
    %2347 = vmatprep.subr.bf16.mxu0 0
    %2348 = vmatpush1.bf16.msra.mxu0 %v2311
    %2349 = vmatprep.subr.bf16.mxu0 0
    %2350 = vmatpush1.bf16.msra.mxu0 %v2312
    %2351 = vmatprep.subr.bf16.mxu0 0
    %2352 = vmatpush1.bf16.msra.mxu0 %v2313
    %2353 = vmatprep.subr.bf16.mxu0 0
    %2354 = vmatpush1.bf16.msra.mxu0 %v2314
    %2355 = vmatprep.subr.bf16.mxu0 0
    %2356 = vmatpush1.bf16.msra.mxu0 %v2315
    %2357 = vmatprep.subr.bf16.mxu0 0
    %2358 = vmatpush1.bf16.msra.mxu0 %v2316
    %2359 = vmatprep.subr.bf16.mxu0 0
    %2360 = vmatpush1.bf16.msra.mxu0 %v2317
    %2361 = vmatprep.subr.bf16.mxu0 0
    %2362 = vmatpush1.bf16.msra.mxu0 %v2318
    %2363 = vmatprep.subr.bf16.mxu0 0
    %2364 = vmatpush1.bf16.msra.mxu0 %v2319
    %2365 = vmatprep.subr.bf16.mxu0 0
    %2366 = vmatpush1.bf16.msra.mxu0 %v2320
    %2367 = vmatprep.subr.bf16.mxu0 0
    %2368 = vmatpush1.bf16.msra.mxu0 %v2321
    %2369 = vmatprep.subr.bf16.mxu0 0
    %2370 = vmatpush1.bf16.msra.mxu0 %v2322
    %2371 = vmatprep.mubr.bf16.mxu0 %v2209
    %2372 = vmatmul.mubr.bf16.gmra.mrb[0].mxu0 %v2208
    %v2373 = vpop.f32.mrb[0].mxu0
    %v2374 = vadd.f32 0.0, %v2373
    %v2375 = vpop.f32.mrb[0].mxu0
    %v2376 = vpop.f32.mrb[0].mxu0
    %v2377 = vpop.f32.mrb[0].mxu0
    %2378 = vdwg.mxu0
    %v2379 = vadd.f32 %v2149, %v2374
    %v2383 = vunpack.c.l.s4 1983009808
    %v2384 = vunpack.c.0.s8 %v2383
    %v2385 = vlaneseq
    %v2386 = vshrl.u32 %v2385, 7
    %v2387 = vsub.s32 %v2384, %v2386
    %v2388 = vrot.slane %v1184, %v2387
    %v2389 = vcombine.high %v2388, %v2388
    %v2391 = vunpack.c.l.s4 1983009808
    %v2392 = vunpack.c.0.s8 %v2391
    %v2393 = vlaneseq
    %v2394 = vshrl.u32 %v2393, 7
    %v2395 = vsub.s32 %v2392, %v2394
    %v2396 = vrot.slane %v1190, %v2395
    %v2397 = vcombine.high %v2396, %v2396
    %v2398 = vrot.slane %v2388, 7
    %v2399 = vrot.slane %v2398, 2
    %v2400 = vrot.slane %v2389, 7
    %v2401 = vsel %vm1234, %v2399, %v2400
    %v2402 = vrot.slane %v2396, 7
    %v2403 = vrot.slane %v2402, 2
    %v2404 = vrot.slane %v2397, 7
    %v2405 = vsel %vm1234, %v2403, %v2404
    %v2406 = vcombine.low %v1183, %v1184
    %v2407 = vcombine.low %v1189, %v1190
    %v2409 = vunpack.c.l.s4 1983009808
    %v2410 = vunpack.c.0.s8 %v2409
    %v2411 = vlaneseq
    %v2412 = vshrl.u32 %v2411, 7
    %v2413 = vsub.s32 %v2410, %v2412
    %v2414 = vrot.slane %v2406, %v2413
    %v2416 = vunpack.c.l.s4 1983009808
    %v2417 = vunpack.c.0.s8 %v2416
    %v2418 = vlaneseq
    %v2419 = vshrl.u32 %v2418, 7
    %v2420 = vsub.s32 %v2417, %v2419
    %v2421 = vrot.slane %v2407, %v2420
    %v2422 = vcombine.low %v2414, %v2421
    %v2424 = vcombine.low %v1937, %v2401
    %v2425 = vcombine.low %v1941, %v2405
    %v2427 = vunpack.c.l.s4 1983009808
    %v2428 = vunpack.c.0.s8 %v2427
    %v2429 = vlaneseq
    %v2430 = vshrl.u32 %v2429, 7
    %v2431 = vsub.s32 %v2428, %v2430
    %v2432 = vrot.slane %v2424, %v2431
    %v2434 = vunpack.c.l.s4 1983009808
    %v2435 = vunpack.c.0.s8 %v2434
    %v2436 = vlaneseq
    %v2437 = vshrl.u32 %v2436, 7
    %v2438 = vsub.s32 %v2435, %v2437
    %v2439 = vrot.slane %v2425, %v2438
    %v2440 = vcombine.low %v2432, %v2439
    %v2442 = vpack.c.bf16 %v2422, %v2422
    %v2443 = vpack.c.bf16 %v2440, %v2440
    %s2444 = scalar_lea.vmem %s3, 640
    %v2445 = vld [vmem:[%s2444] sm:$0xf]
    %v2446 = vld [vmem:[%s2444 + $0x4] sm:$0xf]
    %v2447 = vld [vmem:[%s2444 + $0x8] sm:$0xf]
    %v2448 = vld [vmem:[%s2444 + $0xc] sm:$0xf]
    %v2449 = vld [vmem:[%s2444 + $0x10] sm:$0xf]
    %v2450 = vld [vmem:[%s2444 + $0x14] sm:$0xf]
    %v2451 = vld [vmem:[%s2444 + $0x18] sm:$0xf]
    %v2452 = vld [vmem:[%s2444 + $0x1c] sm:$0xf]
    %v2453 = vld [vmem:[%s2444 + $0x20] sm:$0xf]
    %v2454 = vld [vmem:[%s2444 + $0x24] sm:$0xf]
    %v2455 = vld [vmem:[%s2444 + $0x28] sm:$0xf]
    %v2456 = vld [vmem:[%s2444 + $0x2c] sm:$0xf]
    %v2457 = vld [vmem:[%s2444 + $0x30] sm:$0xf]
    %v2458 = vld [vmem:[%s2444 + $0x34] sm:$0xf]
    %v2459 = vld [vmem:[%s2444 + $0x38] sm:$0xf]
    %v2460 = vld [vmem:[%s2444 + $0x3c] sm:$0xf]
    %v2461 = vld [vmem:[%s2444 + $0x40] sm:$0xf]
    %v2462 = vld [vmem:[%s2444 + $0x44] sm:$0xf]
    %v2463 = vld [vmem:[%s2444 + $0x48] sm:$0xf]
    %v2464 = vld [vmem:[%s2444 + $0x4c] sm:$0xf]
    %v2465 = vld [vmem:[%s2444 + $0x50] sm:$0xf]
    %v2466 = vld [vmem:[%s2444 + $0x54] sm:$0xf]
    %v2467 = vld [vmem:[%s2444 + $0x58] sm:$0xf]
    %v2468 = vld [vmem:[%s2444 + $0x5c] sm:$0xf]
    %v2469 = vld [vmem:[%s2444 + $0x60] sm:$0xf]
    %v2470 = vld [vmem:[%s2444 + $0x64] sm:$0xf]
    %v2471 = vld [vmem:[%s2444 + $0x68] sm:$0xf]
    %v2472 = vld [vmem:[%s2444 + $0x6c] sm:$0xf]
    %v2473 = vld [vmem:[%s2444 + $0x70] sm:$0xf]
    %v2474 = vld [vmem:[%s2444 + $0x74] sm:$0xf]
    %v2475 = vld [vmem:[%s2444 + $0x78] sm:$0xf]
    %v2476 = vld [vmem:[%s2444 + $0x7c] sm:$0xf]
    %v2509 = vunpack.c.l.b16 %v2445
    %v2510 = vunpack.c.l.b16 %v2446
    %v2511 = vunpack.c.l.b16 %v2447
    %v2512 = vunpack.c.l.b16 %v2448
    %v2513 = vunpack.c.l.b16 %v2449
    %v2514 = vunpack.c.l.b16 %v2450
    %v2515 = vunpack.c.l.b16 %v2451
    %v2516 = vunpack.c.l.b16 %v2452
    %v2517 = vunpack.c.l.b16 %v2453
    %v2518 = vunpack.c.l.b16 %v2454
    %v2519 = vunpack.c.l.b16 %v2455
    %v2520 = vunpack.c.l.b16 %v2456
    %v2521 = vunpack.c.l.b16 %v2457
    %v2522 = vunpack.c.l.b16 %v2458
    %v2523 = vunpack.c.l.b16 %v2459
    %v2524 = vunpack.c.l.b16 %v2460
    %v2525 = vunpack.c.l.b16 %v2461
    %v2526 = vunpack.c.l.b16 %v2462
    %v2527 = vunpack.c.l.b16 %v2463
    %v2528 = vunpack.c.l.b16 %v2464
    %v2529 = vunpack.c.l.b16 %v2465
    %v2530 = vunpack.c.l.b16 %v2466
    %v2531 = vunpack.c.l.b16 %v2467
    %v2532 = vunpack.c.l.b16 %v2468
    %v2533 = vunpack.c.l.b16 %v2469
    %v2534 = vunpack.c.l.b16 %v2470
    %v2535 = vunpack.c.l.b16 %v2471
    %v2536 = vunpack.c.l.b16 %v2472
    %v2537 = vunpack.c.l.b16 %v2473
    %v2538 = vunpack.c.l.b16 %v2474
    %v2539 = vunpack.c.l.b16 %v2475
    %v2540 = vunpack.c.l.b16 %v2476
    %v2541 = vpack.c.b16 %v2510, %v2509
    %v2542 = vpack.c.b16 %v2512, %v2511
    %v2543 = vpack.c.b16 %v2514, %v2513
    %v2544 = vpack.c.b16 %v2516, %v2515
    %v2545 = vpack.c.b16 %v2518, %v2517
    %v2546 = vpack.c.b16 %v2520, %v2519
    %v2547 = vpack.c.b16 %v2522, %v2521
    %v2548 = vpack.c.b16 %v2524, %v2523
    %v2549 = vpack.c.b16 %v2526, %v2525
    %v2550 = vpack.c.b16 %v2528, %v2527
    %v2551 = vpack.c.b16 %v2530, %v2529
    %v2552 = vpack.c.b16 %v2532, %v2531
    %v2553 = vpack.c.b16 %v2534, %v2533
    %v2554 = vpack.c.b16 %v2536, %v2535
    %v2555 = vpack.c.b16 %v2538, %v2537
    %v2556 = vpack.c.b16 %v2540, %v2539
    %2573 = vmatprep.subr.bf16.mxu0 0
    %2574 = vmatpush1.bf16.msra.mxu0 %v2541
    %2575 = vmatprep.subr.bf16.mxu0 0
    %2576 = vmatpush1.bf16.msra.mxu0 %v2542
    %2577 = vmatprep.subr.bf16.mxu0 0
    %2578 = vmatpush1.bf16.msra.mxu0 %v2543
    %2579 = vmatprep.subr.bf16.mxu0 0
    %2580 = vmatpush1.bf16.msra.mxu0 %v2544
    %2581 = vmatprep.subr.bf16.mxu0 0
    %2582 = vmatpush1.bf16.msra.mxu0 %v2545
    %2583 = vmatprep.subr.bf16.mxu0 0
    %2584 = vmatpush1.bf16.msra.mxu0 %v2546
    %2585 = vmatprep.subr.bf16.mxu0 0
    %2586 = vmatpush1.bf16.msra.mxu0 %v2547
    %2587 = vmatprep.subr.bf16.mxu0 0
    %2588 = vmatpush1.bf16.msra.mxu0 %v2548
    %2589 = vmatprep.subr.bf16.mxu0 0
    %2590 = vmatpush1.bf16.msra.mxu0 %v2549
    %2591 = vmatprep.subr.bf16.mxu0 0
    %2592 = vmatpush1.bf16.msra.mxu0 %v2550
    %2593 = vmatprep.subr.bf16.mxu0 0
    %2594 = vmatpush1.bf16.msra.mxu0 %v2551
    %2595 = vmatprep.subr.bf16.mxu0 0
    %2596 = vmatpush1.bf16.msra.mxu0 %v2552
    %2597 = vmatprep.subr.bf16.mxu0 0
    %2598 = vmatpush1.bf16.msra.mxu0 %v2553
    %2599 = vmatprep.subr.bf16.mxu0 0
    %2600 = vmatpush1.bf16.msra.mxu0 %v2554
    %2601 = vmatprep.subr.bf16.mxu0 0
    %2602 = vmatpush1.bf16.msra.mxu0 %v2555
    %2603 = vmatprep.subr.bf16.mxu0 0
    %2604 = vmatpush1.bf16.msra.mxu0 %v2556
    %2605 = vmatprep.mubr.bf16.mxu0 %v2443
    %2606 = vmatmul.mubr.bf16.gmra.mrb[0].mxu0 %v2442
    %v2607 = vpop.f32.mrb[0].mxu0
    %v2608 = vadd.f32 0.0, %v2607
    %v2609 = vpop.f32.mrb[0].mxu0
    %v2610 = vpop.f32.mrb[0].mxu0
    %v2611 = vpop.f32.mrb[0].mxu0
    %2612 = vdwg.mxu0
    %v2613 = vadd.f32 %v2379, %v2608
    %v2614 = vcombine.high %v1184, %v1184
    %v2616 = vunpack.c.l.s4 1983009808
    %v2617 = vunpack.c.0.s8 %v2616
    %v2618 = vlaneseq
    %v2619 = vshrl.u32 %v2618, 7
    %v2620 = vsub.s32 %v2617, %v2619
    %v2621 = vrot.slane %v2614, %v2620
    %v2622 = vcombine.high %v1190, %v1190
    %v2624 = vunpack.c.l.s4 1983009808
    %v2625 = vunpack.c.0.s8 %v2624
    %v2626 = vlaneseq
    %v2627 = vshrl.u32 %v2626, 7
    %v2628 = vsub.s32 %v2625, %v2627
    %v2629 = vrot.slane %v2622, %v2628
    %v2630 = vrot.slane %v2400, 2
    %v2631 = vrot.slane %v2621, 7
    %v2632 = vsel %vm1234, %v2630, %v2631
    %v2633 = vrot.slane %v2404, 2
    %v2634 = vrot.slane %v2629, 7
    %v2635 = vsel %vm1234, %v2633, %v2634
    %v2636 = vcombine.low %v1925, %v2389
    %v2637 = vcombine.low %v1933, %v2397
    %v2639 = vunpack.c.l.s4 1983009808
    %v2640 = vunpack.c.0.s8 %v2639
    %v2641 = vlaneseq
    %v2642 = vshrl.u32 %v2641, 7
    %v2643 = vsub.s32 %v2640, %v2642
    %v2644 = vrot.slane %v2636, %v2643
    %v2646 = vunpack.c.l.s4 1983009808
    %v2647 = vunpack.c.0.s8 %v2646
    %v2648 = vlaneseq
    %v2649 = vshrl.u32 %v2648, 7
    %v2650 = vsub.s32 %v2647, %v2649
    %v2651 = vrot.slane %v2637, %v2650
    %v2652 = vcombine.low %v2644, %v2651
    %v2654 = vcombine.low %v2168, %v2632
    %v2655 = vcombine.low %v2171, %v2635
    %v2657 = vunpack.c.l.s4 1983009808
    %v2658 = vunpack.c.0.s8 %v2657
    %v2659 = vlaneseq
    %v2660 = vshrl.u32 %v2659, 7
    %v2661 = vsub.s32 %v2658, %v2660
    %v2662 = vrot.slane %v2654, %v2661
    %v2664 = vunpack.c.l.s4 1983009808
    %v2665 = vunpack.c.0.s8 %v2664
    %v2666 = vlaneseq
    %v2667 = vshrl.u32 %v2666, 7
    %v2668 = vsub.s32 %v2665, %v2667
    %v2669 = vrot.slane %v2655, %v2668
    %v2670 = vcombine.low %v2662, %v2669
    %v2672 = vpack.c.bf16 %v2652, %v2652
    %v2673 = vpack.c.bf16 %v2670, %v2670
    %s2674 = scalar_lea.vmem %s3, 768
    %v2675 = vld [vmem:[%s2674] sm:$0xf]
    %v2676 = vld [vmem:[%s2674 + $0x4] sm:$0xf]
    %v2677 = vld [vmem:[%s2674 + $0x8] sm:$0xf]
    %v2678 = vld [vmem:[%s2674 + $0xc] sm:$0xf]
    %v2679 = vld [vmem:[%s2674 + $0x10] sm:$0xf]
    %v2680 = vld [vmem:[%s2674 + $0x14] sm:$0xf]
    %v2681 = vld [vmem:[%s2674 + $0x18] sm:$0xf]
    %v2682 = vld [vmem:[%s2674 + $0x1c] sm:$0xf]
    %v2683 = vld [vmem:[%s2674 + $0x20] sm:$0xf]
    %v2684 = vld [vmem:[%s2674 + $0x24] sm:$0xf]
    %v2685 = vld [vmem:[%s2674 + $0x28] sm:$0xf]
    %v2686 = vld [vmem:[%s2674 + $0x2c] sm:$0xf]
    %v2687 = vld [vmem:[%s2674 + $0x30] sm:$0xf]
    %v2688 = vld [vmem:[%s2674 + $0x34] sm:$0xf]
    %v2689 = vld [vmem:[%s2674 + $0x38] sm:$0xf]
    %v2690 = vld [vmem:[%s2674 + $0x3c] sm:$0xf]
    %v2691 = vld [vmem:[%s2674 + $0x40] sm:$0xf]
    %v2692 = vld [vmem:[%s2674 + $0x44] sm:$0xf]
    %v2693 = vld [vmem:[%s2674 + $0x48] sm:$0xf]
    %v2694 = vld [vmem:[%s2674 + $0x4c] sm:$0xf]
    %v2695 = vld [vmem:[%s2674 + $0x50] sm:$0xf]
    %v2696 = vld [vmem:[%s2674 + $0x54] sm:$0xf]
    %v2697 = vld [vmem:[%s2674 + $0x58] sm:$0xf]
    %v2698 = vld [vmem:[%s2674 + $0x5c] sm:$0xf]
    %v2699 = vld [vmem:[%s2674 + $0x60] sm:$0xf]
    %v2700 = vld [vmem:[%s2674 + $0x64] sm:$0xf]
    %v2701 = vld [vmem:[%s2674 + $0x68] sm:$0xf]
    %v2702 = vld [vmem:[%s2674 + $0x6c] sm:$0xf]
    %v2703 = vld [vmem:[%s2674 + $0x70] sm:$0xf]
    %v2704 = vld [vmem:[%s2674 + $0x74] sm:$0xf]
    %v2705 = vld [vmem:[%s2674 + $0x78] sm:$0xf]
    %v2706 = vld [vmem:[%s2674 + $0x7c] sm:$0xf]
    %v2739 = vunpack.c.l.b16 %v2675
    %v2740 = vunpack.c.l.b16 %v2676
    %v2741 = vunpack.c.l.b16 %v2677
    %v2742 = vunpack.c.l.b16 %v2678
    %v2743 = vunpack.c.l.b16 %v2679
    %v2744 = vunpack.c.l.b16 %v2680
    %v2745 = vunpack.c.l.b16 %v2681
    %v2746 = vunpack.c.l.b16 %v2682
    %v2747 = vunpack.c.l.b16 %v2683
    %v2748 = vunpack.c.l.b16 %v2684
    %v2749 = vunpack.c.l.b16 %v2685
    %v2750 = vunpack.c.l.b16 %v2686
    %v2751 = vunpack.c.l.b16 %v2687
    %v2752 = vunpack.c.l.b16 %v2688
    %v2753 = vunpack.c.l.b16 %v2689
    %v2754 = vunpack.c.l.b16 %v2690
    %v2755 = vunpack.c.l.b16 %v2691
    %v2756 = vunpack.c.l.b16 %v2692
    %v2757 = vunpack.c.l.b16 %v2693
    %v2758 = vunpack.c.l.b16 %v2694
    %v2759 = vunpack.c.l.b16 %v2695
    %v2760 = vunpack.c.l.b16 %v2696
    %v2761 = vunpack.c.l.b16 %v2697
    %v2762 = vunpack.c.l.b16 %v2698
    %v2763 = vunpack.c.l.b16 %v2699
    %v2764 = vunpack.c.l.b16 %v2700
    %v2765 = vunpack.c.l.b16 %v2701
    %v2766 = vunpack.c.l.b16 %v2702
    %v2767 = vunpack.c.l.b16 %v2703
    %v2768 = vunpack.c.l.b16 %v2704
    %v2769 = vunpack.c.l.b16 %v2705
    %v2770 = vunpack.c.l.b16 %v2706
    %v2771 = vpack.c.b16 %v2740, %v2739
    %v2772 = vpack.c.b16 %v2742, %v2741
    %v2773 = vpack.c.b16 %v2744, %v2743
    %v2774 = vpack.c.b16 %v2746, %v2745
    %v2775 = vpack.c.b16 %v2748, %v2747
    %v2776 = vpack.c.b16 %v2750, %v2749
    %v2777 = vpack.c.b16 %v2752, %v2751
    %v2778 = vpack.c.b16 %v2754, %v2753
    %v2779 = vpack.c.b16 %v2756, %v2755
    %v2780 = vpack.c.b16 %v2758, %v2757
    %v2781 = vpack.c.b16 %v2760, %v2759
    %v2782 = vpack.c.b16 %v2762, %v2761
    %v2783 = vpack.c.b16 %v2764, %v2763
    %v2784 = vpack.c.b16 %v2766, %v2765
    %v2785 = vpack.c.b16 %v2768, %v2767
    %v2786 = vpack.c.b16 %v2770, %v2769
    %2803 = vmatprep.subr.bf16.mxu0 0
    %2804 = vmatpush1.bf16.msra.mxu0 %v2771
    %2805 = vmatprep.subr.bf16.mxu0 0
    %2806 = vmatpush1.bf16.msra.mxu0 %v2772
    %2807 = vmatprep.subr.bf16.mxu0 0
    %2808 = vmatpush1.bf16.msra.mxu0 %v2773
    %2809 = vmatprep.subr.bf16.mxu0 0
    %2810 = vmatpush1.bf16.msra.mxu0 %v2774
    %2811 = vmatprep.subr.bf16.mxu0 0
    %2812 = vmatpush1.bf16.msra.mxu0 %v2775
    %2813 = vmatprep.subr.bf16.mxu0 0
    %2814 = vmatpush1.bf16.msra.mxu0 %v2776
    %2815 = vmatprep.subr.bf16.mxu0 0
    %2816 = vmatpush1.bf16.msra.mxu0 %v2777
    %2817 = vmatprep.subr.bf16.mxu0 0
    %2818 = vmatpush1.bf16.msra.mxu0 %v2778
    %2819 = vmatprep.subr.bf16.mxu0 0
    %2820 = vmatpush1.bf16.msra.mxu0 %v2779
    %2821 = vmatprep.subr.bf16.mxu0 0
    %2822 = vmatpush1.bf16.msra.mxu0 %v2780
    %2823 = vmatprep.subr.bf16.mxu0 0
    %2824 = vmatpush1.bf16.msra.mxu0 %v2781
    %2825 = vmatprep.subr.bf16.mxu0 0
    %2826 = vmatpush1.bf16.msra.mxu0 %v2782
    %2827 = vmatprep.subr.bf16.mxu0 0
    %2828 = vmatpush1.bf16.msra.mxu0 %v2783
    %2829 = vmatprep.subr.bf16.mxu0 0
    %2830 = vmatpush1.bf16.msra.mxu0 %v2784
    %2831 = vmatprep.subr.bf16.mxu0 0
    %2832 = vmatpush1.bf16.msra.mxu0 %v2785
    %2833 = vmatprep.subr.bf16.mxu0 0
    %2834 = vmatpush1.bf16.msra.mxu0 %v2786
    %2835 = vmatprep.mubr.bf16.mxu0 %v2673
    %2836 = vmatmul.mubr.bf16.gmra.mrb[0].mxu0 %v2672
    %v2837 = vpop.f32.mrb[0].mxu0
    %v2838 = vadd.f32 0.0, %v2837
    %v2839 = vpop.f32.mrb[0].mxu0
    %v2840 = vpop.f32.mrb[0].mxu0
    %v2841 = vpop.f32.mrb[0].mxu0
    %2842 = vdwg.mxu0
    %v2843 = vadd.f32 %v2613, %v2838
    %v2844 = vcombine.low %v2157, %v2621
    %v2845 = vcombine.low %v2165, %v2629
    %v2847 = vunpack.c.l.s4 1983009808
    %v2848 = vunpack.c.0.s8 %v2847
    %v2849 = vlaneseq
    %v2850 = vshrl.u32 %v2849, 7
    %v2851 = vsub.s32 %v2848, %v2850
    %v2852 = vrot.slane %v2844, %v2851
    %v2854 = vunpack.c.l.s4 1983009808
    %v2855 = vunpack.c.0.s8 %v2854
    %v2856 = vlaneseq
    %v2857 = vshrl.u32 %v2856, 7
    %v2858 = vsub.s32 %v2855, %v2857
    %v2859 = vrot.slane %v2845, %v2858
    %v2860 = vcombine.low %v2852, %v2859
    %v2864 = vcombine.low %v1184, %v1185
    %v2865 = vcombine.low %v1190, %v1191
    %v2867 = vunpack.c.l.s4 1983009808
    %v2868 = vunpack.c.0.s8 %v2867
    %v2869 = vlaneseq
    %v2870 = vshrl.u32 %v2869, 7
    %v2871 = vsub.s32 %v2868, %v2870
    %v2872 = vrot.slane %v2864, %v2871
    %v2874 = vunpack.c.l.s4 1983009808
    %v2875 = vunpack.c.0.s8 %v2874
    %v2876 = vlaneseq
    %v2877 = vshrl.u32 %v2876, 7
    %v2878 = vsub.s32 %v2875, %v2877
    %v2879 = vrot.slane %v2865, %v2878
    %v2880 = vcombine.low %v2872, %v2879
    %v2882 = vpack.c.bf16 %v2860, %v2860
    %v2883 = vpack.c.bf16 %v2880, %v2880
    %s2884 = scalar_lea.vmem %s3, 896
    %v2885 = vld [vmem:[%s2884] sm:$0xf]
    %v2886 = vld [vmem:[%s2884 + $0x4] sm:$0xf]
    %v2887 = vld [vmem:[%s2884 + $0x8] sm:$0xf]
    %v2888 = vld [vmem:[%s2884 + $0xc] sm:$0xf]
    %v2889 = vld [vmem:[%s2884 + $0x10] sm:$0xf]
    %v2890 = vld [vmem:[%s2884 + $0x14] sm:$0xf]
    %v2891 = vld [vmem:[%s2884 + $0x18] sm:$0xf]
    %v2892 = vld [vmem:[%s2884 + $0x1c] sm:$0xf]
    %v2893 = vld [vmem:[%s2884 + $0x20] sm:$0xf]
    %v2894 = vld [vmem:[%s2884 + $0x24] sm:$0xf]
    %v2895 = vld [vmem:[%s2884 + $0x28] sm:$0xf]
    %v2896 = vld [vmem:[%s2884 + $0x2c] sm:$0xf]
    %v2897 = vld [vmem:[%s2884 + $0x30] sm:$0xf]
    %v2898 = vld [vmem:[%s2884 + $0x34] sm:$0xf]
    %v2899 = vld [vmem:[%s2884 + $0x38] sm:$0xf]
    %v2900 = vld [vmem:[%s2884 + $0x3c] sm:$0xf]
    %v2901 = vld [vmem:[%s2884 + $0x40] sm:$0xf]
    %v2902 = vld [vmem:[%s2884 + $0x44] sm:$0xf]
    %v2903 = vld [vmem:[%s2884 + $0x48] sm:$0xf]
    %v2904 = vld [vmem:[%s2884 + $0x4c] sm:$0xf]
    %v2905 = vld [vmem:[%s2884 + $0x50] sm:$0xf]
    %v2906 = vld [vmem:[%s2884 + $0x54] sm:$0xf]
    %v2907 = vld [vmem:[%s2884 + $0x58] sm:$0xf]
    %v2908 = vld [vmem:[%s2884 + $0x5c] sm:$0xf]
    %v2909 = vld [vmem:[%s2884 + $0x60] sm:$0xf]
    %v2910 = vld [vmem:[%s2884 + $0x64] sm:$0xf]
    %v2911 = vld [vmem:[%s2884 + $0x68] sm:$0xf]
    %v2912 = vld [vmem:[%s2884 + $0x6c] sm:$0xf]
    %v2913 = vld [vmem:[%s2884 + $0x70] sm:$0xf]
    %v2914 = vld [vmem:[%s2884 + $0x74] sm:$0xf]
    %v2915 = vld [vmem:[%s2884 + $0x78] sm:$0xf]
    %v2916 = vld [vmem:[%s2884 + $0x7c] sm:$0xf]
    %v2949 = vunpack.c.l.b16 %v2885
    %v2950 = vunpack.c.l.b16 %v2886
    %v2951 = vunpack.c.l.b16 %v2887
    %v2952 = vunpack.c.l.b16 %v2888
    %v2953 = vunpack.c.l.b16 %v2889
    %v2954 = vunpack.c.l.b16 %v2890
    %v2955 = vunpack.c.l.b16 %v2891
    %v2956 = vunpack.c.l.b16 %v2892
    %v2957 = vunpack.c.l.b16 %v2893
    %v2958 = vunpack.c.l.b16 %v2894
    %v2959 = vunpack.c.l.b16 %v2895
    %v2960 = vunpack.c.l.b16 %v2896
    %v2961 = vunpack.c.l.b16 %v2897
    %v2962 = vunpack.c.l.b16 %v2898
    %v2963 = vunpack.c.l.b16 %v2899
    %v2964 = vunpack.c.l.b16 %v2900
    %v2965 = vunpack.c.l.b16 %v2901
    %v2966 = vunpack.c.l.b16 %v2902
    %v2967 = vunpack.c.l.b16 %v2903
    %v2968 = vunpack.c.l.b16 %v2904
    %v2969 = vunpack.c.l.b16 %v2905
    %v2970 = vunpack.c.l.b16 %v2906
    %v2971 = vunpack.c.l.b16 %v2907
    %v2972 = vunpack.c.l.b16 %v2908
    %v2973 = vunpack.c.l.b16 %v2909
    %v2974 = vunpack.c.l.b16 %v2910
    %v2975 = vunpack.c.l.b16 %v2911
    %v2976 = vunpack.c.l.b16 %v2912
    %v2977 = vunpack.c.l.b16 %v2913
    %v2978 = vunpack.c.l.b16 %v2914
    %v2979 = vunpack.c.l.b16 %v2915
    %v2980 = vunpack.c.l.b16 %v2916
    %v2981 = vpack.c.b16 %v2950, %v2949
    %v2982 = vpack.c.b16 %v2952, %v2951
    %v2983 = vpack.c.b16 %v2954, %v2953
    %v2984 = vpack.c.b16 %v2956, %v2955
    %v2985 = vpack.c.b16 %v2958, %v2957
    %v2986 = vpack.c.b16 %v2960, %v2959
    %v2987 = vpack.c.b16 %v2962, %v2961
    %v2988 = vpack.c.b16 %v2964, %v2963
    %v2989 = vpack.c.b16 %v2966, %v2965
    %v2990 = vpack.c.b16 %v2968, %v2967
    %v2991 = vpack.c.b16 %v2970, %v2969
    %v2992 = vpack.c.b16 %v2972, %v2971
    %v2993 = vpack.c.b16 %v2974, %v2973
    %v2994 = vpack.c.b16 %v2976, %v2975
    %v2995 = vpack.c.b16 %v2978, %v2977
    %v2996 = vpack.c.b16 %v2980, %v2979
    %3013 = vmatprep.subr.bf16.mxu0 0
    %3014 = vmatpush1.bf16.msra.mxu0 %v2981
    %3015 = vmatprep.subr.bf16.mxu0 0
    %3016 = vmatpush1.bf16.msra.mxu0 %v2982
    %3017 = vmatprep.subr.bf16.mxu0 0
    %3018 = vmatpush1.bf16.msra.mxu0 %v2983
    %3019 = vmatprep.subr.bf16.mxu0 0
    %3020 = vmatpush1.bf16.msra.mxu0 %v2984
    %3021 = vmatprep.subr.bf16.mxu0 0
    %3022 = vmatpush1.bf16.msra.mxu0 %v2985
    %3023 = vmatprep.subr.bf16.mxu0 0
    %3024 = vmatpush1.bf16.msra.mxu0 %v2986
    %3025 = vmatprep.subr.bf16.mxu0 0
    %3026 = vmatpush1.bf16.msra.mxu0 %v2987
    %3027 = vmatprep.subr.bf16.mxu0 0
    %3028 = vmatpush1.bf16.msra.mxu0 %v2988
    %3029 = vmatprep.subr.bf16.mxu0 0
    %3030 = vmatpush1.bf16.msra.mxu0 %v2989
    %3031 = vmatprep.subr.bf16.mxu0 0
    %3032 = vmatpush1.bf16.msra.mxu0 %v2990
    %3033 = vmatprep.subr.bf16.mxu0 0
    %3034 = vmatpush1.bf16.msra.mxu0 %v2991
    %3035 = vmatprep.subr.bf16.mxu0 0
    %3036 = vmatpush1.bf16.msra.mxu0 %v2992
    %3037 = vmatprep.subr.bf16.mxu0 0
    %3038 = vmatpush1.bf16.msra.mxu0 %v2993
    %3039 = vmatprep.subr.bf16.mxu0 0
    %3040 = vmatpush1.bf16.msra.mxu0 %v2994
    %3041 = vmatprep.subr.bf16.mxu0 0
    %3042 = vmatpush1.bf16.msra.mxu0 %v2995
    %3043 = vmatprep.subr.bf16.mxu0 0
    %3044 = vmatpush1.bf16.msra.mxu0 %v2996
    %3045 = vmatprep.mubr.bf16.mxu0 %v2883
    %3046 = vmatmul.mubr.bf16.gmra.mrb[0].mxu0 %v2882
    %v3047 = vpop.f32.mrb[0].mxu0
    %v3048 = vadd.f32 0.0, %v3047
    %v3049 = vpop.f32.mrb[0].mxu0
    %v3050 = vpop.f32.mrb[0].mxu0
    %v3051 = vpop.f32.mrb[0].mxu0
    %3052 = vdwg.mxu0
    %v3053 = vadd.f32 %v2843, %v3048
    %v3055 = vunpack.c.l.s4 1983009808
    %v3056 = vunpack.c.0.s8 %v3055
    %v3057 = vlaneseq
    %v3058 = vshrl.u32 %v3057, 7
    %v3059 = vsub.s32 %v3056, %v3058
    %v3060 = vrot.slane %v1185, %v3059
    %v3061 = vcombine.high %v3060, %v3060
    %v3063 = vunpack.c.l.s4 1983009808
    %v3064 = vunpack.c.0.s8 %v3063
    %v3065 = vlaneseq
    %v3066 = vshrl.u32 %v3065, 7
    %v3067 = vsub.s32 %v3064, %v3066
    %v3068 = vrot.slane %v1191, %v3067
    %v3069 = vcombine.high %v3068, %v3068
    %v3070 = vrot.slane %v3060, 7
    %v3071 = vrot.slane %v3070, 2
    %v3072 = vrot.slane %v3061, 7
    %v3073 = vsel %vm1234, %v3071, %v3072
    %v3074 = vrot.slane %v3068, 7
    %v3075 = vrot.slane %v3074, 2
    %v3076 = vrot.slane %v3069, 7
    %v3077 = vsel %vm1234, %v3075, %v3076
    %v3078 = vcombine.low %v2401, %v3073
    %v3079 = vcombine.low %v2405, %v3077
    %v3081 = vunpack.c.l.s4 1983009808
    %v3082 = vunpack.c.0.s8 %v3081
    %v3083 = vlaneseq
    %v3084 = vshrl.u32 %v3083, 7
    %v3085 = vsub.s32 %v3082, %v3084
    %v3086 = vrot.slane %v3078, %v3085
    %v3088 = vunpack.c.l.s4 1983009808
    %v3089 = vunpack.c.0.s8 %v3088
    %v3090 = vlaneseq
    %v3091 = vshrl.u32 %v3090, 7
    %v3092 = vsub.s32 %v3089, %v3091
    %v3093 = vrot.slane %v3079, %v3092
    %v3094 = vcombine.low %v3086, %v3093
    %v3096 = vcombine.low %v2389, %v3061
    %v3097 = vcombine.low %v2397, %v3069
    %v3099 = vunpack.c.l.s4 1983009808
    %v3100 = vunpack.c.0.s8 %v3099
    %v3101 = vlaneseq
    %v3102 = vshrl.u32 %v3101, 7
    %v3103 = vsub.s32 %v3100, %v3102
    %v3104 = vrot.slane %v3096, %v3103
    %v3106 = vunpack.c.l.s4 1983009808
    %v3107 = vunpack.c.0.s8 %v3106
    %v3108 = vlaneseq
    %v3109 = vshrl.u32 %v3108, 7
    %v3110 = vsub.s32 %v3107, %v3109
    %v3111 = vrot.slane %v3097, %v3110
    %v3112 = vcombine.low %v3104, %v3111
    %v3114 = vpack.c.bf16 %v3094, %v3094
    %v3115 = vpack.c.bf16 %v3112, %v3112
    %s3116 = scalar_lea.vmem %s3, 1024
    %v3117 = vld [vmem:[%s3116] sm:$0xf]
    %v3118 = vld [vmem:[%s3116 + $0x4] sm:$0xf]
    %v3119 = vld [vmem:[%s3116 + $0x8] sm:$0xf]
    %v3120 = vld [vmem:[%s3116 + $0xc] sm:$0xf]
    %v3121 = vld [vmem:[%s3116 + $0x10] sm:$0xf]
    %v3122 = vld [vmem:[%s3116 + $0x14] sm:$0xf]
    %v3123 = vld [vmem:[%s3116 + $0x18] sm:$0xf]
    %v3124 = vld [vmem:[%s3116 + $0x1c] sm:$0xf]
    %v3125 = vld [vmem:[%s3116 + $0x20] sm:$0xf]
    %v3126 = vld [vmem:[%s3116 + $0x24] sm:$0xf]
    %v3127 = vld [vmem:[%s3116 + $0x28] sm:$0xf]
    %v3128 = vld [vmem:[%s3116 + $0x2c] sm:$0xf]
    %v3129 = vld [vmem:[%s3116 + $0x30] sm:$0xf]
    %v3130 = vld [vmem:[%s3116 + $0x34] sm:$0xf]
    %v3131 = vld [vmem:[%s3116 + $0x38] sm:$0xf]
    %v3132 = vld [vmem:[%s3116 + $0x3c] sm:$0xf]
    %v3133 = vld [vmem:[%s3116 + $0x40] sm:$0xf]
    %v3134 = vld [vmem:[%s3116 + $0x44] sm:$0xf]
    %v3135 = vld [vmem:[%s3116 + $0x48] sm:$0xf]
    %v3136 = vld [vmem:[%s3116 + $0x4c] sm:$0xf]
    %v3137 = vld [vmem:[%s3116 + $0x50] sm:$0xf]
    %v3138 = vld [vmem:[%s3116 + $0x54] sm:$0xf]
    %v3139 = vld [vmem:[%s3116 + $0x58] sm:$0xf]
    %v3140 = vld [vmem:[%s3116 + $0x5c] sm:$0xf]
    %v3141 = vld [vmem:[%s3116 + $0x60] sm:$0xf]
    %v3142 = vld [vmem:[%s3116 + $0x64] sm:$0xf]
    %v3143 = vld [vmem:[%s3116 + $0x68] sm:$0xf]
    %v3144 = vld [vmem:[%s3116 + $0x6c] sm:$0xf]
    %v3145 = vld [vmem:[%s3116 + $0x70] sm:$0xf]
    %v3146 = vld [vmem:[%s3116 + $0x74] sm:$0xf]
    %v3147 = vld [vmem:[%s3116 + $0x78] sm:$0xf]
    %v3148 = vld [vmem:[%s3116 + $0x7c] sm:$0xf]
    %v3181 = vunpack.c.l.b16 %v3117
    %v3182 = vunpack.c.l.b16 %v3118
    %v3183 = vunpack.c.l.b16 %v3119
    %v3184 = vunpack.c.l.b16 %v3120
    %v3185 = vunpack.c.l.b16 %v3121
    %v3186 = vunpack.c.l.b16 %v3122
    %v3187 = vunpack.c.l.b16 %v3123
    %v3188 = vunpack.c.l.b16 %v3124
    %v3189 = vunpack.c.l.b16 %v3125
    %v3190 = vunpack.c.l.b16 %v3126
    %v3191 = vunpack.c.l.b16 %v3127
    %v3192 = vunpack.c.l.b16 %v3128
    %v3193 = vunpack.c.l.b16 %v3129
    %v3194 = vunpack.c.l.b16 %v3130
    %v3195 = vunpack.c.l.b16 %v3131
    %v3196 = vunpack.c.l.b16 %v3132
    %v3197 = vunpack.c.l.b16 %v3133
    %v3198 = vunpack.c.l.b16 %v3134
    %v3199 = vunpack.c.l.b16 %v3135
    %v3200 = vunpack.c.l.b16 %v3136
    %v3201 = vunpack.c.l.b16 %v3137
    %v3202 = vunpack.c.l.b16 %v3138
    %v3203 = vunpack.c.l.b16 %v3139
    %v3204 = vunpack.c.l.b16 %v3140
    %v3205 = vunpack.c.l.b16 %v3141
    %v3206 = vunpack.c.l.b16 %v3142
    %v3207 = vunpack.c.l.b16 %v3143
    %v3208 = vunpack.c.l.b16 %v3144
    %v3209 = vunpack.c.l.b16 %v3145
    %v3210 = vunpack.c.l.b16 %v3146
    %v3211 = vunpack.c.l.b16 %v3147
    %v3212 = vunpack.c.l.b16 %v3148
    %v3213 = vpack.c.b16 %v3182, %v3181
    %v3214 = vpack.c.b16 %v3184, %v3183
    %v3215 = vpack.c.b16 %v3186, %v3185
    %v3216 = vpack.c.b16 %v3188, %v3187
    %v3217 = vpack.c.b16 %v3190, %v3189
    %v3218 = vpack.c.b16 %v3192, %v3191
    %v3219 = vpack.c.b16 %v3194, %v3193
    %v3220 = vpack.c.b16 %v3196, %v3195
    %v3221 = vpack.c.b16 %v3198, %v3197
    %v3222 = vpack.c.b16 %v3200, %v3199
    %v3223 = vpack.c.b16 %v3202, %v3201
    %v3224 = vpack.c.b16 %v3204, %v3203
    %v3225 = vpack.c.b16 %v3206, %v3205
    %v3226 = vpack.c.b16 %v3208, %v3207
    %v3227 = vpack.c.b16 %v3210, %v3209
    %v3228 = vpack.c.b16 %v3212, %v3211
    %3245 = vmatprep.subr.bf16.mxu0 0
    %3246 = vmatpush1.bf16.msra.mxu0 %v3213
    %3247 = vmatprep.subr.bf16.mxu0 0
    %3248 = vmatpush1.bf16.msra.mxu0 %v3214
    %3249 = vmatprep.subr.bf16.mxu0 0
    %3250 = vmatpush1.bf16.msra.mxu0 %v3215
    %3251 = vmatprep.subr.bf16.mxu0 0
    %3252 = vmatpush1.bf16.msra.mxu0 %v3216
    %3253 = vmatprep.subr.bf16.mxu0 0
    %3254 = vmatpush1.bf16.msra.mxu0 %v3217
    %3255 = vmatprep.subr.bf16.mxu0 0
    %3256 = vmatpush1.bf16.msra.mxu0 %v3218
    %3257 = vmatprep.subr.bf16.mxu0 0
    %3258 = vmatpush1.bf16.msra.mxu0 %v3219
    %3259 = vmatprep.subr.bf16.mxu0 0
    %3260 = vmatpush1.bf16.msra.mxu0 %v3220
    %3261 = vmatprep.subr.bf16.mxu0 0
    %3262 = vmatpush1.bf16.msra.mxu0 %v3221
    %3263 = vmatprep.subr.bf16.mxu0 0
    %3264 = vmatpush1.bf16.msra.mxu0 %v3222
    %3265 = vmatprep.subr.bf16.mxu0 0
    %3266 = vmatpush1.bf16.msra.mxu0 %v3223
    %3267 = vmatprep.subr.bf16.mxu0 0
    %3268 = vmatpush1.bf16.msra.mxu0 %v3224
    %3269 = vmatprep.subr.bf16.mxu0 0
    %3270 = vmatpush1.bf16.msra.mxu0 %v3225
    %3271 = vmatprep.subr.bf16.mxu0 0
    %3272 = vmatpush1.bf16.msra.mxu0 %v3226
    %3273 = vmatprep.subr.bf16.mxu0 0
    %3274 = vmatpush1.bf16.msra.mxu0 %v3227
    %3275 = vmatprep.subr.bf16.mxu0 0
    %3276 = vmatpush1.bf16.msra.mxu0 %v3228
    %3277 = vmatprep.mubr.bf16.mxu0 %v3115
    %3278 = vmatmul.mubr.bf16.gmra.mrb[0].mxu0 %v3114
    %v3279 = vpop.f32.mrb[0].mxu0
    %v3280 = vadd.f32 0.0, %v3279
    %v3281 = vpop.f32.mrb[0].mxu0
    %v3282 = vpop.f32.mrb[0].mxu0
    %v3283 = vpop.f32.mrb[0].mxu0
    %3284 = vdwg.mxu0
    %v3285 = vadd.f32 %v3053, %v3280
    %v3286 = vcombine.high %v1185, %v1185
    %v3288 = vunpack.c.l.s4 1983009808
    %v3289 = vunpack.c.0.s8 %v3288
    %v3290 = vlaneseq
    %v3291 = vshrl.u32 %v3290, 7
    %v3292 = vsub.s32 %v3289, %v3291
    %v3293 = vrot.slane %v3286, %v3292
    %v3294 = vcombine.high %v1191, %v1191
    %v3296 = vunpack.c.l.s4 1983009808
    %v3297 = vunpack.c.0.s8 %v3296
    %v3298 = vlaneseq
    %v3299 = vshrl.u32 %v3298, 7
    %v3300 = vsub.s32 %v3297, %v3299
    %v3301 = vrot.slane %v3294, %v3300
    %v3302 = vrot.slane %v3072, 2
    %v3303 = vrot.slane %v3293, 7
    %v3304 = vsel %vm1234, %v3302, %v3303
    %v3305 = vrot.slane %v3076, 2
    %v3306 = vrot.slane %v3301, 7
    %v3307 = vsel %vm1234, %v3305, %v3306
    %v3308 = vcombine.low %v2632, %v3304
    %v3309 = vcombine.low %v2635, %v3307
    %v3311 = vunpack.c.l.s4 1983009808
    %v3312 = vunpack.c.0.s8 %v3311
    %v3313 = vlaneseq
    %v3314 = vshrl.u32 %v3313, 7
    %v3315 = vsub.s32 %v3312, %v3314
    %v3316 = vrot.slane %v3308, %v3315
    %v3318 = vunpack.c.l.s4 1983009808
    %v3319 = vunpack.c.0.s8 %v3318
    %v3320 = vlaneseq
    %v3321 = vshrl.u32 %v3320, 7
    %v3322 = vsub.s32 %v3319, %v3321
    %v3323 = vrot.slane %v3309, %v3322
    %v3324 = vcombine.low %v3316, %v3323
    %v3326 = vcombine.low %v2621, %v3293
    %v3327 = vcombine.low %v2629, %v3301
    %v3329 = vunpack.c.l.s4 1983009808
    %v3330 = vunpack.c.0.s8 %v3329
    %v3331 = vlaneseq
    %v3332 = vshrl.u32 %v3331, 7
    %v3333 = vsub.s32 %v3330, %v3332
    %v3334 = vrot.slane %v3326, %v3333
    %v3336 = vunpack.c.l.s4 1983009808
    %v3337 = vunpack.c.0.s8 %v3336
    %v3338 = vlaneseq
    %v3339 = vshrl.u32 %v3338, 7
    %v3340 = vsub.s32 %v3337, %v3339
    %v3341 = vrot.slane %v3327, %v3340
    %v3342 = vcombine.low %v3334, %v3341
    %v3344 = vpack.c.bf16 %v3324, %v3324
    %v3345 = vpack.c.bf16 %v3342, %v3342
    %s3346 = scalar_lea.vmem %s3, 1152
    %v3347 = vld [vmem:[%s3346] sm:$0xf]
    %v3348 = vld [vmem:[%s3346 + $0x4] sm:$0xf]
    %v3349 = vld [vmem:[%s3346 + $0x8] sm:$0xf]
    %v3350 = vld [vmem:[%s3346 + $0xc] sm:$0xf]
    %v3351 = vld [vmem:[%s3346 + $0x10] sm:$0xf]
    %v3352 = vld [vmem:[%s3346 + $0x14] sm:$0xf]
    %v3353 = vld [vmem:[%s3346 + $0x18] sm:$0xf]
    %v3354 = vld [vmem:[%s3346 + $0x1c] sm:$0xf]
    %v3355 = vld [vmem:[%s3346 + $0x20] sm:$0xf]
    %v3356 = vld [vmem:[%s3346 + $0x24] sm:$0xf]
    %v3357 = vld [vmem:[%s3346 + $0x28] sm:$0xf]
    %v3358 = vld [vmem:[%s3346 + $0x2c] sm:$0xf]
    %v3359 = vld [vmem:[%s3346 + $0x30] sm:$0xf]
    %v3360 = vld [vmem:[%s3346 + $0x34] sm:$0xf]
    %v3361 = vld [vmem:[%s3346 + $0x38] sm:$0xf]
    %v3362 = vld [vmem:[%s3346 + $0x3c] sm:$0xf]
    %v3363 = vld [vmem:[%s3346 + $0x40] sm:$0xf]
    %v3364 = vld [vmem:[%s3346 + $0x44] sm:$0xf]
    %v3365 = vld [vmem:[%s3346 + $0x48] sm:$0xf]
    %v3366 = vld [vmem:[%s3346 + $0x4c] sm:$0xf]
    %v3367 = vld [vmem:[%s3346 + $0x50] sm:$0xf]
    %v3368 = vld [vmem:[%s3346 + $0x54] sm:$0xf]
    %v3369 = vld [vmem:[%s3346 + $0x58] sm:$0xf]
    %v3370 = vld [vmem:[%s3346 + $0x5c] sm:$0xf]
    %v3371 = vld [vmem:[%s3346 + $0x60] sm:$0xf]
    %v3372 = vld [vmem:[%s3346 + $0x64] sm:$0xf]
    %v3373 = vld [vmem:[%s3346 + $0x68] sm:$0xf]
    %v3374 = vld [vmem:[%s3346 + $0x6c] sm:$0xf]
    %v3375 = vld [vmem:[%s3346 + $0x70] sm:$0xf]
    %v3376 = vld [vmem:[%s3346 + $0x74] sm:$0xf]
    %v3377 = vld [vmem:[%s3346 + $0x78] sm:$0xf]
    %v3378 = vld [vmem:[%s3346 + $0x7c] sm:$0xf]
    %v3411 = vunpack.c.l.b16 %v3347
    %v3412 = vunpack.c.l.b16 %v3348
    %v3413 = vunpack.c.l.b16 %v3349
    %v3414 = vunpack.c.l.b16 %v3350
    %v3415 = vunpack.c.l.b16 %v3351
    %v3416 = vunpack.c.l.b16 %v3352
    %v3417 = vunpack.c.l.b16 %v3353
    %v3418 = vunpack.c.l.b16 %v3354
    %v3419 = vunpack.c.l.b16 %v3355
    %v3420 = vunpack.c.l.b16 %v3356
    %v3421 = vunpack.c.l.b16 %v3357
    %v3422 = vunpack.c.l.b16 %v3358
    %v3423 = vunpack.c.l.b16 %v3359
    %v3424 = vunpack.c.l.b16 %v3360
    %v3425 = vunpack.c.l.b16 %v3361
    %v3426 = vunpack.c.l.b16 %v3362
    %v3427 = vunpack.c.l.b16 %v3363
    %v3428 = vunpack.c.l.b16 %v3364
    %v3429 = vunpack.c.l.b16 %v3365
    %v3430 = vunpack.c.l.b16 %v3366
    %v3431 = vunpack.c.l.b16 %v3367
    %v3432 = vunpack.c.l.b16 %v3368
    %v3433 = vunpack.c.l.b16 %v3369
    %v3434 = vunpack.c.l.b16 %v3370
    %v3435 = vunpack.c.l.b16 %v3371
    %v3436 = vunpack.c.l.b16 %v3372
    %v3437 = vunpack.c.l.b16 %v3373
    %v3438 = vunpack.c.l.b16 %v3374
    %v3439 = vunpack.c.l.b16 %v3375
    %v3440 = vunpack.c.l.b16 %v3376
    %v3441 = vunpack.c.l.b16 %v3377
    %v3442 = vunpack.c.l.b16 %v3378
    %v3443 = vpack.c.b16 %v3412, %v3411
    %v3444 = vpack.c.b16 %v3414, %v3413
    %v3445 = vpack.c.b16 %v3416, %v3415
    %v3446 = vpack.c.b16 %v3418, %v3417
    %v3447 = vpack.c.b16 %v3420, %v3419
    %v3448 = vpack.c.b16 %v3422, %v3421
    %v3449 = vpack.c.b16 %v3424, %v3423
    %v3450 = vpack.c.b16 %v3426, %v3425
    %v3451 = vpack.c.b16 %v3428, %v3427
    %v3452 = vpack.c.b16 %v3430, %v3429
    %v3453 = vpack.c.b16 %v3432, %v3431
    %v3454 = vpack.c.b16 %v3434, %v3433
    %v3455 = vpack.c.b16 %v3436, %v3435
    %v3456 = vpack.c.b16 %v3438, %v3437
    %v3457 = vpack.c.b16 %v3440, %v3439
    %v3458 = vpack.c.b16 %v3442, %v3441
    %3475 = vmatprep.subr.bf16.mxu0 0
    %3476 = vmatpush1.bf16.msra.mxu0 %v3443
    %3477 = vmatprep.subr.bf16.mxu0 0
    %3478 = vmatpush1.bf16.msra.mxu0 %v3444
    %3479 = vmatprep.subr.bf16.mxu0 0
    %3480 = vmatpush1.bf16.msra.mxu0 %v3445
    %3481 = vmatprep.subr.bf16.mxu0 0
    %3482 = vmatpush1.bf16.msra.mxu0 %v3446
    %3483 = vmatprep.subr.bf16.mxu0 0
    %3484 = vmatpush1.bf16.msra.mxu0 %v3447
    %3485 = vmatprep.subr.bf16.mxu0 0
    %3486 = vmatpush1.bf16.msra.mxu0 %v3448
    %3487 = vmatprep.subr.bf16.mxu0 0
    %3488 = vmatpush1.bf16.msra.mxu0 %v3449
    %3489 = vmatprep.subr.bf16.mxu0 0
    %3490 = vmatpush1.bf16.msra.mxu0 %v3450
    %3491 = vmatprep.subr.bf16.mxu0 0
    %3492 = vmatpush1.bf16.msra.mxu0 %v3451
    %3493 = vmatprep.subr.bf16.mxu0 0
    %3494 = vmatpush1.bf16.msra.mxu0 %v3452
    %3495 = vmatprep.subr.bf16.mxu0 0
    %3496 = vmatpush1.bf16.msra.mxu0 %v3453
    %3497 = vmatprep.subr.bf16.mxu0 0
    %3498 = vmatpush1.bf16.msra.mxu0 %v3454
    %3499 = vmatprep.subr.bf16.mxu0 0
    %3500 = vmatpush1.bf16.msra.mxu0 %v3455
    %3501 = vmatprep.subr.bf16.mxu0 0
    %3502 = vmatpush1.bf16.msra.mxu0 %v3456
    %3503 = vmatprep.subr.bf16.mxu0 0
    %3504 = vmatpush1.bf16.msra.mxu0 %v3457
    %3505 = vmatprep.subr.bf16.mxu0 0
    %3506 = vmatpush1.bf16.msra.mxu0 %v3458
    %3507 = vmatprep.mubr.bf16.mxu0 %v3345
    %3508 = vmatmul.mubr.bf16.gmra.mrb[0].mxu0 %v3344
    %v3509 = vpop.f32.mrb[0].mxu0
    %v3510 = vadd.f32 0.0, %v3509
    %v3511 = vpop.f32.mrb[0].mxu0
    %v3512 = vpop.f32.mrb[0].mxu0
    %v3513 = vpop.f32.mrb[0].mxu0
    %3514 = vdwg.mxu0
    %v3515 = vadd.f32 %v3285, %v3510
    %v3519 = vunpack.c.l.s4 1983009808
    %v3520 = vunpack.c.0.s8 %v3519
    %v3521 = vlaneseq
    %v3522 = vshrl.u32 %v3521, 7
    %v3523 = vsub.s32 %v3520, %v3522
    %v3524 = vrot.slane %v1186, %v3523
    %v3525 = vcombine.high %v3524, %v3524
    %v3527 = vunpack.c.l.s4 1983009808
    %v3528 = vunpack.c.0.s8 %v3527
    %v3529 = vlaneseq
    %v3530 = vshrl.u32 %v3529, 7
    %v3531 = vsub.s32 %v3528, %v3530
    %v3532 = vrot.slane %v1192, %v3531
    %v3533 = vcombine.high %v3532, %v3532
    %v3534 = vrot.slane %v3524, 7
    %v3535 = vrot.slane %v3534, 2
    %v3536 = vrot.slane %v3525, 7
    %v3537 = vsel %vm1234, %v3535, %v3536
    %v3538 = vrot.slane %v3532, 7
    %v3539 = vrot.slane %v3538, 2
    %v3540 = vrot.slane %v3533, 7
    %v3541 = vsel %vm1234, %v3539, %v3540
    %v3542 = vcombine.low %v1185, %v1186
    %v3543 = vcombine.low %v1191, %v1192
    %v3545 = vunpack.c.l.s4 1983009808
    %v3546 = vunpack.c.0.s8 %v3545
    %v3547 = vlaneseq
    %v3548 = vshrl.u32 %v3547, 7
    %v3549 = vsub.s32 %v3546, %v3548
    %v3550 = vrot.slane %v3542, %v3549
    %v3552 = vunpack.c.l.s4 1983009808
    %v3553 = vunpack.c.0.s8 %v3552
    %v3554 = vlaneseq
    %v3555 = vshrl.u32 %v3554, 7
    %v3556 = vsub.s32 %v3553, %v3555
    %v3557 = vrot.slane %v3543, %v3556
    %v3558 = vcombine.low %v3550, %v3557
    %v3560 = vcombine.low %v3073, %v3537
    %v3561 = vcombine.low %v3077, %v3541
    %v3563 = vunpack.c.l.s4 1983009808
    %v3564 = vunpack.c.0.s8 %v3563
    %v3565 = vlaneseq
    %v3566 = vshrl.u32 %v3565, 7
    %v3567 = vsub.s32 %v3564, %v3566
    %v3568 = vrot.slane %v3560, %v3567
    %v3570 = vunpack.c.l.s4 1983009808
    %v3571 = vunpack.c.0.s8 %v3570
    %v3572 = vlaneseq
    %v3573 = vshrl.u32 %v3572, 7
    %v3574 = vsub.s32 %v3571, %v3573
    %v3575 = vrot.slane %v3561, %v3574
    %v3576 = vcombine.low %v3568, %v3575
    %v3578 = vpack.c.bf16 %v3558, %v3558
    %v3579 = vpack.c.bf16 %v3576, %v3576
    %s3580 = scalar_lea.vmem %s3, 1280
    %v3581 = vld [vmem:[%s3580] sm:$0xf]
    %v3582 = vld [vmem:[%s3580 + $0x4] sm:$0xf]
    %v3583 = vld [vmem:[%s3580 + $0x8] sm:$0xf]
    %v3584 = vld [vmem:[%s3580 + $0xc] sm:$0xf]
    %v3585 = vld [vmem:[%s3580 + $0x10] sm:$0xf]
    %v3586 = vld [vmem:[%s3580 + $0x14] sm:$0xf]
    %v3587 = vld [vmem:[%s3580 + $0x18] sm:$0xf]
    %v3588 = vld [vmem:[%s3580 + $0x1c] sm:$0xf]
    %v3589 = vld [vmem:[%s3580 + $0x20] sm:$0xf]
    %v3590 = vld [vmem:[%s3580 + $0x24] sm:$0xf]
    %v3591 = vld [vmem:[%s3580 + $0x28] sm:$0xf]
    %v3592 = vld [vmem:[%s3580 + $0x2c] sm:$0xf]
    %v3593 = vld [vmem:[%s3580 + $0x30] sm:$0xf]
    %v3594 = vld [vmem:[%s3580 + $0x34] sm:$0xf]
    %v3595 = vld [vmem:[%s3580 + $0x38] sm:$0xf]
    %v3596 = vld [vmem:[%s3580 + $0x3c] sm:$0xf]
    %v3597 = vld [vmem:[%s3580 + $0x40] sm:$0xf]
    %v3598 = vld [vmem:[%s3580 + $0x44] sm:$0xf]
    %v3599 = vld [vmem:[%s3580 + $0x48] sm:$0xf]
    %v3600 = vld [vmem:[%s3580 + $0x4c] sm:$0xf]
    %v3601 = vld [vmem:[%s3580 + $0x50] sm:$0xf]
    %v3602 = vld [vmem:[%s3580 + $0x54] sm:$0xf]
    %v3603 = vld [vmem:[%s3580 + $0x58] sm:$0xf]
    %v3604 = vld [vmem:[%s3580 + $0x5c] sm:$0xf]
    %v3605 = vld [vmem:[%s3580 + $0x60] sm:$0xf]
    %v3606 = vld [vmem:[%s3580 + $0x64] sm:$0xf]
    %v3607 = vld [vmem:[%s3580 + $0x68] sm:$0xf]
    %v3608 = vld [vmem:[%s3580 + $0x6c] sm:$0xf]
    %v3609 = vld [vmem:[%s3580 + $0x70] sm:$0xf]
    %v3610 = vld [vmem:[%s3580 + $0x74] sm:$0xf]
    %v3611 = vld [vmem:[%s3580 + $0x78] sm:$0xf]
    %v3612 = vld [vmem:[%s3580 + $0x7c] sm:$0xf]
    %v3645 = vunpack.c.l.b16 %v3581
    %v3646 = vunpack.c.l.b16 %v3582
    %v3647 = vunpack.c.l.b16 %v3583
    %v3648 = vunpack.c.l.b16 %v3584
    %v3649 = vunpack.c.l.b16 %v3585
    %v3650 = vunpack.c.l.b16 %v3586
    %v3651 = vunpack.c.l.b16 %v3587
    %v3652 = vunpack.c.l.b16 %v3588
    %v3653 = vunpack.c.l.b16 %v3589
    %v3654 = vunpack.c.l.b16 %v3590
    %v3655 = vunpack.c.l.b16 %v3591
    %v3656 = vunpack.c.l.b16 %v3592
    %v3657 = vunpack.c.l.b16 %v3593
    %v3658 = vunpack.c.l.b16 %v3594
    %v3659 = vunpack.c.l.b16 %v3595
    %v3660 = vunpack.c.l.b16 %v3596
    %v3661 = vunpack.c.l.b16 %v3597
    %v3662 = vunpack.c.l.b16 %v3598
    %v3663 = vunpack.c.l.b16 %v3599
    %v3664 = vunpack.c.l.b16 %v3600
    %v3665 = vunpack.c.l.b16 %v3601
    %v3666 = vunpack.c.l.b16 %v3602
    %v3667 = vunpack.c.l.b16 %v3603
    %v3668 = vunpack.c.l.b16 %v3604
    %v3669 = vunpack.c.l.b16 %v3605
    %v3670 = vunpack.c.l.b16 %v3606
    %v3671 = vunpack.c.l.b16 %v3607
    %v3672 = vunpack.c.l.b16 %v3608
    %v3673 = vunpack.c.l.b16 %v3609
    %v3674 = vunpack.c.l.b16 %v3610
    %v3675 = vunpack.c.l.b16 %v3611
    %v3676 = vunpack.c.l.b16 %v3612
    %v3677 = vpack.c.b16 %v3646, %v3645
    %v3678 = vpack.c.b16 %v3648, %v3647
    %v3679 = vpack.c.b16 %v3650, %v3649
    %v3680 = vpack.c.b16 %v3652, %v3651
    %v3681 = vpack.c.b16 %v3654, %v3653
    %v3682 = vpack.c.b16 %v3656, %v3655
    %v3683 = vpack.c.b16 %v3658, %v3657
    %v3684 = vpack.c.b16 %v3660, %v3659
    %v3685 = vpack.c.b16 %v3662, %v3661
    %v3686 = vpack.c.b16 %v3664, %v3663
    %v3687 = vpack.c.b16 %v3666, %v3665
    %v3688 = vpack.c.b16 %v3668, %v3667
    %v3689 = vpack.c.b16 %v3670, %v3669
    %v3690 = vpack.c.b16 %v3672, %v3671
    %v3691 = vpack.c.b16 %v3674, %v3673
    %v3692 = vpack.c.b16 %v3676, %v3675
    %3709 = vmatprep.subr.bf16.mxu0 0
    %3710 = vmatpush1.bf16.msra.mxu0 %v3677
    %3711 = vmatprep.subr.bf16.mxu0 0
    %3712 = vmatpush1.bf16.msra.mxu0 %v3678
    %3713 = vmatprep.subr.bf16.mxu0 0
    %3714 = vmatpush1.bf16.msra.mxu0 %v3679
    %3715 = vmatprep.subr.bf16.mxu0 0
    %3716 = vmatpush1.bf16.msra.mxu0 %v3680
    %3717 = vmatprep.subr.bf16.mxu0 0
    %3718 = vmatpush1.bf16.msra.mxu0 %v3681
    %3719 = vmatprep.subr.bf16.mxu0 0
    %3720 = vmatpush1.bf16.msra.mxu0 %v3682
    %3721 = vmatprep.subr.bf16.mxu0 0
    %3722 = vmatpush1.bf16.msra.mxu0 %v3683
    %3723 = vmatprep.subr.bf16.mxu0 0
    %3724 = vmatpush1.bf16.msra.mxu0 %v3684
    %3725 = vmatprep.subr.bf16.mxu0 0
    %3726 = vmatpush1.bf16.msra.mxu0 %v3685
    %3727 = vmatprep.subr.bf16.mxu0 0
    %3728 = vmatpush1.bf16.msra.mxu0 %v3686
    %3729 = vmatprep.subr.bf16.mxu0 0
    %3730 = vmatpush1.bf16.msra.mxu0 %v3687
    %3731 = vmatprep.subr.bf16.mxu0 0
    %3732 = vmatpush1.bf16.msra.mxu0 %v3688
    %3733 = vmatprep.subr.bf16.mxu0 0
    %3734 = vmatpush1.bf16.msra.mxu0 %v3689
    %3735 = vmatprep.subr.bf16.mxu0 0
    %3736 = vmatpush1.bf16.msra.mxu0 %v3690
    %3737 = vmatprep.subr.bf16.mxu0 0
    %3738 = vmatpush1.bf16.msra.mxu0 %v3691
    %3739 = vmatprep.subr.bf16.mxu0 0
    %3740 = vmatpush1.bf16.msra.mxu0 %v3692
    %3741 = vmatprep.mubr.bf16.mxu0 %v3579
    %3742 = vmatmul.mubr.bf16.gmra.mrb[0].mxu0 %v3578
    %v3743 = vpop.f32.mrb[0].mxu0
    %v3744 = vadd.f32 0.0, %v3743
    %v3745 = vpop.f32.mrb[0].mxu0
    %v3746 = vpop.f32.mrb[0].mxu0
    %v3747 = vpop.f32.mrb[0].mxu0
    %3748 = vdwg.mxu0
    %v3749 = vadd.f32 %v3515, %v3744
    %v3750 = vcombine.high %v1186, %v1186
    %v3752 = vunpack.c.l.s4 1983009808
    %v3753 = vunpack.c.0.s8 %v3752
    %v3754 = vlaneseq
    %v3755 = vshrl.u32 %v3754, 7
    %v3756 = vsub.s32 %v3753, %v3755
    %v3757 = vrot.slane %v3750, %v3756
    %v3758 = vcombine.high %v1192, %v1192
    %v3760 = vunpack.c.l.s4 1983009808
    %v3761 = vunpack.c.0.s8 %v3760
    %v3762 = vlaneseq
    %v3763 = vshrl.u32 %v3762, 7
    %v3764 = vsub.s32 %v3761, %v3763
    %v3765 = vrot.slane %v3758, %v3764
    %v3766 = vrot.slane %v3536, 2
    %v3767 = vrot.slane %v3757, 7
    %v3768 = vsel %vm1234, %v3766, %v3767
    %v3769 = vrot.slane %v3540, 2
    %v3770 = vrot.slane %v3765, 7
    %v3771 = vsel %vm1234, %v3769, %v3770
    %v3772 = vcombine.low %v3061, %v3525
    %v3773 = vcombine.low %v3069, %v3533
    %v3775 = vunpack.c.l.s4 1983009808
    %v3776 = vunpack.c.0.s8 %v3775
    %v3777 = vlaneseq
    %v3778 = vshrl.u32 %v3777, 7
    %v3779 = vsub.s32 %v3776, %v3778
    %v3780 = vrot.slane %v3772, %v3779
    %v3782 = vunpack.c.l.s4 1983009808
    %v3783 = vunpack.c.0.s8 %v3782
    %v3784 = vlaneseq
    %v3785 = vshrl.u32 %v3784, 7
    %v3786 = vsub.s32 %v3783, %v3785
    %v3787 = vrot.slane %v3773, %v3786
    %v3788 = vcombine.low %v3780, %v3787
    %v3790 = vcombine.low %v3304, %v3768
    %v3791 = vcombine.low %v3307, %v3771
    %v3793 = vunpack.c.l.s4 1983009808
    %v3794 = vunpack.c.0.s8 %v3793
    %v3795 = vlaneseq
    %v3796 = vshrl.u32 %v3795, 7
    %v3797 = vsub.s32 %v3794, %v3796
    %v3798 = vrot.slane %v3790, %v3797
    %v3800 = vunpack.c.l.s4 1983009808
    %v3801 = vunpack.c.0.s8 %v3800
    %v3802 = vlaneseq
    %v3803 = vshrl.u32 %v3802, 7
    %v3804 = vsub.s32 %v3801, %v3803
    %v3805 = vrot.slane %v3791, %v3804
    %v3806 = vcombine.low %v3798, %v3805
    %v3808 = vpack.c.bf16 %v3788, %v3788
    %v3809 = vpack.c.bf16 %v3806, %v3806
    %s3810 = scalar_lea.vmem %s3, 1408
    %v3811 = vld [vmem:[%s3810] sm:$0xf]
    %v3812 = vld [vmem:[%s3810 + $0x4] sm:$0xf]
    %v3813 = vld [vmem:[%s3810 + $0x8] sm:$0xf]
    %v3814 = vld [vmem:[%s3810 + $0xc] sm:$0xf]
    %v3815 = vld [vmem:[%s3810 + $0x10] sm:$0xf]
    %v3816 = vld [vmem:[%s3810 + $0x14] sm:$0xf]
    %v3817 = vld [vmem:[%s3810 + $0x18] sm:$0xf]
    %v3818 = vld [vmem:[%s3810 + $0x1c] sm:$0xf]
    %v3819 = vld [vmem:[%s3810 + $0x20] sm:$0xf]
    %v3820 = vld [vmem:[%s3810 + $0x24] sm:$0xf]
    %v3821 = vld [vmem:[%s3810 + $0x28] sm:$0xf]
    %v3822 = vld [vmem:[%s3810 + $0x2c] sm:$0xf]
    %v3823 = vld [vmem:[%s3810 + $0x30] sm:$0xf]
    %v3824 = vld [vmem:[%s3810 + $0x34] sm:$0xf]
    %v3825 = vld [vmem:[%s3810 + $0x38] sm:$0xf]
    %v3826 = vld [vmem:[%s3810 + $0x3c] sm:$0xf]
    %v3827 = vld [vmem:[%s3810 + $0x40] sm:$0xf]
    %v3828 = vld [vmem:[%s3810 + $0x44] sm:$0xf]
    %v3829 = vld [vmem:[%s3810 + $0x48] sm:$0xf]
    %v3830 = vld [vmem:[%s3810 + $0x4c] sm:$0xf]
    %v3831 = vld [vmem:[%s3810 + $0x50] sm:$0xf]
    %v3832 = vld [vmem:[%s3810 + $0x54] sm:$0xf]
    %v3833 = vld [vmem:[%s3810 + $0x58] sm:$0xf]
    %v3834 = vld [vmem:[%s3810 + $0x5c] sm:$0xf]
    %v3835 = vld [vmem:[%s3810 + $0x60] sm:$0xf]
    %v3836 = vld [vmem:[%s3810 + $0x64] sm:$0xf]
    %v3837 = vld [vmem:[%s3810 + $0x68] sm:$0xf]
    %v3838 = vld [vmem:[%s3810 + $0x6c] sm:$0xf]
    %v3839 = vld [vmem:[%s3810 + $0x70] sm:$0xf]
    %v3840 = vld [vmem:[%s3810 + $0x74] sm:$0xf]
    %v3841 = vld [vmem:[%s3810 + $0x78] sm:$0xf]
    %v3842 = vld [vmem:[%s3810 + $0x7c] sm:$0xf]
    %v3875 = vunpack.c.l.b16 %v3811
    %v3876 = vunpack.c.l.b16 %v3812
    %v3877 = vunpack.c.l.b16 %v3813
    %v3878 = vunpack.c.l.b16 %v3814
    %v3879 = vunpack.c.l.b16 %v3815
    %v3880 = vunpack.c.l.b16 %v3816
    %v3881 = vunpack.c.l.b16 %v3817
    %v3882 = vunpack.c.l.b16 %v3818
    %v3883 = vunpack.c.l.b16 %v3819
    %v3884 = vunpack.c.l.b16 %v3820
    %v3885 = vunpack.c.l.b16 %v3821
    %v3886 = vunpack.c.l.b16 %v3822
    %v3887 = vunpack.c.l.b16 %v3823
    %v3888 = vunpack.c.l.b16 %v3824
    %v3889 = vunpack.c.l.b16 %v3825
    %v3890 = vunpack.c.l.b16 %v3826
    %v3891 = vunpack.c.l.b16 %v3827
    %v3892 = vunpack.c.l.b16 %v3828
    %v3893 = vunpack.c.l.b16 %v3829
    %v3894 = vunpack.c.l.b16 %v3830
    %v3895 = vunpack.c.l.b16 %v3831
    %v3896 = vunpack.c.l.b16 %v3832
    %v3897 = vunpack.c.l.b16 %v3833
    %v3898 = vunpack.c.l.b16 %v3834
    %v3899 = vunpack.c.l.b16 %v3835
    %v3900 = vunpack.c.l.b16 %v3836
    %v3901 = vunpack.c.l.b16 %v3837
    %v3902 = vunpack.c.l.b16 %v3838
    %v3903 = vunpack.c.l.b16 %v3839
    %v3904 = vunpack.c.l.b16 %v3840
    %v3905 = vunpack.c.l.b16 %v3841
    %v3906 = vunpack.c.l.b16 %v3842
    %v3907 = vpack.c.b16 %v3876, %v3875
    %v3908 = vpack.c.b16 %v3878, %v3877
    %v3909 = vpack.c.b16 %v3880, %v3879
    %v3910 = vpack.c.b16 %v3882, %v3881
    %v3911 = vpack.c.b16 %v3884, %v3883
    %v3912 = vpack.c.b16 %v3886, %v3885
    %v3913 = vpack.c.b16 %v3888, %v3887
    %v3914 = vpack.c.b16 %v3890, %v3889
    %v3915 = vpack.c.b16 %v3892, %v3891
    %v3916 = vpack.c.b16 %v3894, %v3893
    %v3917 = vpack.c.b16 %v3896, %v3895
    %v3918 = vpack.c.b16 %v3898, %v3897
    %v3919 = vpack.c.b16 %v3900, %v3899
    %v3920 = vpack.c.b16 %v3902, %v3901
    %v3921 = vpack.c.b16 %v3904, %v3903
    %v3922 = vpack.c.b16 %v3906, %v3905
    %3939 = vmatprep.subr.bf16.mxu0 0
    %3940 = vmatpush1.bf16.msra.mxu0 %v3907
    %3941 = vmatprep.subr.bf16.mxu0 0
    %3942 = vmatpush1.bf16.msra.mxu0 %v3908
    %3943 = vmatprep.subr.bf16.mxu0 0
    %3944 = vmatpush1.bf16.msra.mxu0 %v3909
    %3945 = vmatprep.subr.bf16.mxu0 0
    %3946 = vmatpush1.bf16.msra.mxu0 %v3910
    %3947 = vmatprep.subr.bf16.mxu0 0
    %3948 = vmatpush1.bf16.msra.mxu0 %v3911
    %3949 = vmatprep.subr.bf16.mxu0 0
    %3950 = vmatpush1.bf16.msra.mxu0 %v3912
    %3951 = vmatprep.subr.bf16.mxu0 0
    %3952 = vmatpush1.bf16.msra.mxu0 %v3913
    %3953 = vmatprep.subr.bf16.mxu0 0
    %3954 = vmatpush1.bf16.msra.mxu0 %v3914
    %3955 = vmatprep.subr.bf16.mxu0 0
    %3956 = vmatpush1.bf16.msra.mxu0 %v3915
    %3957 = vmatprep.subr.bf16.mxu0 0
    %3958 = vmatpush1.bf16.msra.mxu0 %v3916
    %3959 = vmatprep.subr.bf16.mxu0 0
    %3960 = vmatpush1.bf16.msra.mxu0 %v3917
    %3961 = vmatprep.subr.bf16.mxu0 0
    %3962 = vmatpush1.bf16.msra.mxu0 %v3918
    %3963 = vmatprep.subr.bf16.mxu0 0
    %3964 = vmatpush1.bf16.msra.mxu0 %v3919
    %3965 = vmatprep.subr.bf16.mxu0 0
    %3966 = vmatpush1.bf16.msra.mxu0 %v3920
    %3967 = vmatprep.subr.bf16.mxu0 0
    %3968 = vmatpush1.bf16.msra.mxu0 %v3921
    %3969 = vmatprep.subr.bf16.mxu0 0
    %3970 = vmatpush1.bf16.msra.mxu0 %v3922
    %3971 = vmatprep.mubr.bf16.mxu0 %v3809
    %3972 = vmatmul.mubr.bf16.gmra.mrb[0].mxu0 %v3808
    %v3973 = vpop.f32.mrb[0].mxu0
    %v3974 = vadd.f32 0.0, %v3973
    %v3975 = vpop.f32.mrb[0].mxu0
    %v3976 = vpop.f32.mrb[0].mxu0
    %v3977 = vpop.f32.mrb[0].mxu0
    %3978 = vdwg.mxu0
    %v3979 = vadd.f32 %v3749, %v3974
    %v3980 = vcombine.low %v3293, %v3757
    %v3981 = vcombine.low %v3301, %v3765
    %v3983 = vunpack.c.l.s4 1983009808
    %v3984 = vunpack.c.0.s8 %v3983
    %v3985 = vlaneseq
    %v3986 = vshrl.u32 %v3985, 7
    %v3987 = vsub.s32 %v3984, %v3986
    %v3988 = vrot.slane %v3980, %v3987
    %v3990 = vunpack.c.l.s4 1983009808
    %v3991 = vunpack.c.0.s8 %v3990
    %v3992 = vlaneseq
    %v3993 = vshrl.u32 %v3992, 7
    %v3994 = vsub.s32 %v3991, %v3993
    %v3995 = vrot.slane %v3981, %v3994
    %v3996 = vcombine.low %v3988, %v3995
    %v3998 = vpack.c.bf16 %v3996, %v3996
    %s3999 = scalar_lea.vmem %s3, 1536
    %v4000 = vld [vmem:[%s3999] sm:$0xf]
    %v4001 = vld [vmem:[%s3999 + $0x4] sm:$0xf]
    %v4002 = vld [vmem:[%s3999 + $0x8] sm:$0xf]
    %v4003 = vld [vmem:[%s3999 + $0xc] sm:$0xf]
    %v4004 = vld [vmem:[%s3999 + $0x10] sm:$0xf]
    %v4005 = vld [vmem:[%s3999 + $0x14] sm:$0xf]
    %v4006 = vld [vmem:[%s3999 + $0x18] sm:$0xf]
    %v4007 = vld [vmem:[%s3999 + $0x1c] sm:$0xf]
    %v4008 = vld [vmem:[%s3999 + $0x20] sm:$0xf]
    %v4009 = vld [vmem:[%s3999 + $0x24] sm:$0xf]
    %v4010 = vld [vmem:[%s3999 + $0x28] sm:$0xf]
    %v4011 = vld [vmem:[%s3999 + $0x2c] sm:$0xf]
    %v4012 = vld [vmem:[%s3999 + $0x30] sm:$0xf]
    %v4013 = vld [vmem:[%s3999 + $0x34] sm:$0xf]
    %v4014 = vld [vmem:[%s3999 + $0x38] sm:$0xf]
    %v4015 = vld [vmem:[%s3999 + $0x3c] sm:$0xf]
    %v4016 = vld [vmem:[%s3999 + $0x40] sm:$0xf]
    %v4017 = vld [vmem:[%s3999 + $0x44] sm:$0xf]
    %v4018 = vld [vmem:[%s3999 + $0x48] sm:$0xf]
    %v4019 = vld [vmem:[%s3999 + $0x4c] sm:$0xf]
    %v4020 = vld [vmem:[%s3999 + $0x50] sm:$0xf]
    %v4021 = vld [vmem:[%s3999 + $0x54] sm:$0xf]
    %v4022 = vld [vmem:[%s3999 + $0x58] sm:$0xf]
    %v4023 = vld [vmem:[%s3999 + $0x5c] sm:$0xf]
    %v4024 = vld [vmem:[%s3999 + $0x60] sm:$0xf]
    %v4025 = vld [vmem:[%s3999 + $0x64] sm:$0xf]
    %v4026 = vld [vmem:[%s3999 + $0x68] sm:$0xf]
    %v4027 = vld [vmem:[%s3999 + $0x6c] sm:$0xf]
    %v4028 = vld [vmem:[%s3999 + $0x70] sm:$0xf]
    %v4029 = vld [vmem:[%s3999 + $0x74] sm:$0xf]
    %v4030 = vld [vmem:[%s3999 + $0x78] sm:$0xf]
    %v4031 = vld [vmem:[%s3999 + $0x7c] sm:$0xf]
    %v4064 = vunpack.c.l.b16 %v4000
    %v4065 = vunpack.c.l.b16 %v4001
    %v4066 = vunpack.c.l.b16 %v4002
    %v4067 = vunpack.c.l.b16 %v4003
    %v4068 = vunpack.c.l.b16 %v4004
    %v4069 = vunpack.c.l.b16 %v4005
    %v4070 = vunpack.c.l.b16 %v4006
    %v4071 = vunpack.c.l.b16 %v4007
    %v4072 = vunpack.c.l.b16 %v4008
    %v4073 = vunpack.c.l.b16 %v4009
    %v4074 = vunpack.c.l.b16 %v4010
    %v4075 = vunpack.c.l.b16 %v4011
    %v4076 = vunpack.c.l.b16 %v4012
    %v4077 = vunpack.c.l.b16 %v4013
    %v4078 = vunpack.c.l.b16 %v4014
    %v4079 = vunpack.c.l.b16 %v4015
    %v4080 = vunpack.c.l.b16 %v4016
    %v4081 = vunpack.c.l.b16 %v4017
    %v4082 = vunpack.c.l.b16 %v4018
    %v4083 = vunpack.c.l.b16 %v4019
    %v4084 = vunpack.c.l.b16 %v4020
    %v4085 = vunpack.c.l.b16 %v4021
    %v4086 = vunpack.c.l.b16 %v4022
    %v4087 = vunpack.c.l.b16 %v4023
    %v4088 = vunpack.c.l.b16 %v4024
    %v4089 = vunpack.c.l.b16 %v4025
    %v4090 = vunpack.c.l.b16 %v4026
    %v4091 = vunpack.c.l.b16 %v4027
    %v4092 = vunpack.c.l.b16 %v4028
    %v4093 = vunpack.c.l.b16 %v4029
    %v4094 = vunpack.c.l.b16 %v4030
    %v4095 = vunpack.c.l.b16 %v4031
    %v4096 = vpack.c.b16 %v4065, %v4064
    %v4097 = vpack.c.b16 %v4067, %v4066
    %v4098 = vpack.c.b16 %v4069, %v4068
    %v4099 = vpack.c.b16 %v4071, %v4070
    %v4100 = vpack.c.b16 %v4073, %v4072
    %v4101 = vpack.c.b16 %v4075, %v4074
    %v4102 = vpack.c.b16 %v4077, %v4076
    %v4103 = vpack.c.b16 %v4079, %v4078
    %v4104 = vpack.c.b16 %v4081, %v4080
    %v4105 = vpack.c.b16 %v4083, %v4082
    %v4106 = vpack.c.b16 %v4085, %v4084
    %v4107 = vpack.c.b16 %v4087, %v4086
    %v4108 = vpack.c.b16 %v4089, %v4088
    %v4109 = vpack.c.b16 %v4091, %v4090
    %v4110 = vpack.c.b16 %v4093, %v4092
    %v4111 = vpack.c.b16 %v4095, %v4094
    %4128 = vmatprep.subr.bf16.mxu0 0
    %4129 = vmatpush1.bf16.msra.mxu0 %v4096
    %4130 = vmatprep.subr.bf16.mxu0 0
    %4131 = vmatpush1.bf16.msra.mxu0 %v4097
    %4132 = vmatprep.subr.bf16.mxu0 0
    %4133 = vmatpush1.bf16.msra.mxu0 %v4098
    %4134 = vmatprep.subr.bf16.mxu0 0
    %4135 = vmatpush1.bf16.msra.mxu0 %v4099
    %4136 = vmatprep.subr.bf16.mxu0 0
    %4137 = vmatpush1.bf16.msra.mxu0 %v4100
    %4138 = vmatprep.subr.bf16.mxu0 0
    %4139 = vmatpush1.bf16.msra.mxu0 %v4101
    %4140 = vmatprep.subr.bf16.mxu0 0
    %4141 = vmatpush1.bf16.msra.mxu0 %v4102
    %4142 = vmatprep.subr.bf16.mxu0 0
    %4143 = vmatpush1.bf16.msra.mxu0 %v4103
    %4144 = vmatprep.subr.bf16.mxu0 0
    %4145 = vmatpush1.bf16.msra.mxu0 %v4104
    %4146 = vmatprep.subr.bf16.mxu0 0
    %4147 = vmatpush1.bf16.msra.mxu0 %v4105
    %4148 = vmatprep.subr.bf16.mxu0 0
    %4149 = vmatpush1.bf16.msra.mxu0 %v4106
    %4150 = vmatprep.subr.bf16.mxu0 0
    %4151 = vmatpush1.bf16.msra.mxu0 %v4107
    %4152 = vmatprep.subr.bf16.mxu0 0
    %4153 = vmatpush1.bf16.msra.mxu0 %v4108
    %4154 = vmatprep.subr.bf16.mxu0 0
    %4155 = vmatpush1.bf16.msra.mxu0 %v4109
    %4156 = vmatprep.subr.bf16.mxu0 0
    %4157 = vmatpush1.bf16.msra.mxu0 %v4110
    %4158 = vmatprep.subr.bf16.mxu0 0
    %4159 = vmatpush1.bf16.msra.mxu0 %v4111
    %4160 = vmatprep.mubr.bf16.mxu0 %v3998
    %4161 = vmatmul.mubr.bf16.gmra.mrb[0].mxu0 %v3998
    %v4162 = vpop.f32.mrb[0].mxu0
    %v4163 = vadd.f32 0.0, %v4162
    %v4164 = vpop.f32.mrb[0].mxu0
    %v4165 = vpop.f32.mrb[0].mxu0
    %v4166 = vpop.f32.mrb[0].mxu0
    %4167 = vdwg.mxu0
    %v4168 = vadd.f32 %v3979, %v4163
    %v4169 = vld [vmem:[%s4] sm:$0x1]
    %v4171 = vlaneseq
    %v4172 = vshrl.u32 %v4171, 7
    %v4173 = vsub.s32 0, %v4172
    %v4174 = vrot.slane %v4169, %v4173
    %v4176 = vadd.f32 %v4168, %v4174
    %v4177 = vmax.f32 %v4176, 0.0
    %v4179 = vcombine.high %v4177, %v4177
    %v4181 = vunpack.c.l.s4 1983009808
    %v4182 = vunpack.c.0.s8 %v4181
    %v4183 = vlaneseq
    %v4184 = vshrl.u32 %v4183, 7
    %v4185 = vsub.s32 %v4182, %v4184
    %v4186 = vrot.slane %v4177, %v4185
    %v4188 = vunpack.c.l.s4 1983009808
    %v4189 = vunpack.c.0.s8 %v4188
    %v4190 = vlaneseq
    %v4191 = vshrl.u32 %v4190, 7
    %v4192 = vsub.s32 %v4189, %v4191
    %v4193 = vrot.slane %v4179, %v4192
    %v4194 = vcombine.high %v4186, %v4186
    %v4195 = vcombine.high %v4193, %v4193
    %v4200 = vmax.f32 %v4186, %v4194
    %v4201 = vmax.f32 %v4193, %v4195
    %v4204 = vrot.slane %v4200, 7
    %v4205 = vrot.slane %v4204, 2
    %v4206 = vrot.slane %v4201, 7
    %v4207 = vrot.slane %v4206, 2
    %v4210 = vmax.f32 %v4200, %v4205
    %v4211 = vmax.f32 %v4201, %v4207
    %v4212 = vpack.c.bf16 %v4210, %v4210
    %v4213 = vpack.c.bf16 %v4211, %v4211
    %v4214 = vld [vmem:[%s5] sm:$0xf]
    %v4215 = vld [vmem:[%s5 + $0x4] sm:$0xf]
    %v4216 = vld [vmem:[%s5 + $0x8] sm:$0xf]
    %v4217 = vld [vmem:[%s5 + $0xc] sm:$0xf]
    %v4218 = vld [vmem:[%s5 + $0x10] sm:$0xf]
    %v4219 = vld [vmem:[%s5 + $0x14] sm:$0xf]
    %v4220 = vld [vmem:[%s5 + $0x18] sm:$0xf]
    %v4221 = vld [vmem:[%s5 + $0x1c] sm:$0xf]
    %v4222 = vld [vmem:[%s5 + $0x20] sm:$0xf]
    %v4223 = vld [vmem:[%s5 + $0x24] sm:$0xf]
    %v4224 = vld [vmem:[%s5 + $0x28] sm:$0xf]
    %v4225 = vld [vmem:[%s5 + $0x2c] sm:$0xf]
    %v4226 = vld [vmem:[%s5 + $0x30] sm:$0xf]
    %v4227 = vld [vmem:[%s5 + $0x34] sm:$0xf]
    %v4228 = vld [vmem:[%s5 + $0x38] sm:$0xf]
    %v4229 = vld [vmem:[%s5 + $0x3c] sm:$0xf]
    %v4230 = vld [vmem:[%s6] sm:$0x1]
    %v4232 = vlaneseq
    %v4233 = vshrl.u32 %v4232, 7
    %v4234 = vsub.s32 0, %v4233
    %v4235 = vrot.slane %v4230, %v4234
    %v4239 = vunpack.c.l.b16 %v4212
    %v4240 = vunpack.c.l.b16 %v4213
    %v4241 = vrot.slane %v4240, 7
    %vm4242 = vcmask 1041409
    %v4243 = vsel %vm4242, %v4241, %v4239
    %v4244 = vpack.c.b16 %v4243, %v4243
    %v4262 = vunpack.c.l.b16 %v4214
    %v4263 = vunpack.c.l.b16 %v4215
    %v4264 = vunpack.c.l.b16 %v4216
    %v4265 = vunpack.c.l.b16 %v4217
    %v4266 = vunpack.c.l.b16 %v4218
    %v4267 = vunpack.c.l.b16 %v4219
    %v4268 = vunpack.c.l.b16 %v4220
    %v4269 = vunpack.c.l.b16 %v4221
    %v4270 = vunpack.c.l.b16 %v4222
    %v4271 = vunpack.c.l.b16 %v4223
    %v4272 = vunpack.c.l.b16 %v4224
    %v4273 = vunpack.c.l.b16 %v4225
    %v4274 = vunpack.c.l.b16 %v4226
    %v4275 = vunpack.c.l.b16 %v4227
    %v4276 = vunpack.c.l.b16 %v4228
    %v4277 = vunpack.c.l.b16 %v4229
    %v4278 = vpack.c.b16 %v4263, %v4262
    %v4279 = vpack.c.b16 %v4265, %v4264
    %v4280 = vpack.c.b16 %v4267, %v4266
    %v4281 = vpack.c.b16 %v4269, %v4268
    %v4282 = vpack.c.b16 %v4271, %v4270
    %v4283 = vpack.c.b16 %v4273, %v4272
    %v4284 = vpack.c.b16 %v4275, %v4274
    %v4285 = vpack.c.b16 %v4277, %v4276
    %4294 = vmatprep.subr.bf16.mxu0 0
    %4295 = vmatpush1.bf16.msra.mxu0 %v4278
    %4296 = vmatprep.subr.bf16.mxu0 0
    %4297 = vmatpush1.bf16.msra.mxu0 %v4279
    %4298 = vmatprep.subr.bf16.mxu0 0
    %4299 = vmatpush1.bf16.msra.mxu0 %v4280
    %4300 = vmatprep.subr.bf16.mxu0 0
    %4301 = vmatpush1.bf16.msra.mxu0 %v4281
    %4302 = vmatprep.subr.bf16.mxu0 0
    %4303 = vmatpush1.bf16.msra.mxu0 %v4282
    %4304 = vmatprep.subr.bf16.mxu0 0
    %4305 = vmatpush1.bf16.msra.mxu0 %v4283
    %4306 = vmatprep.subr.bf16.mxu0 0
    %4307 = vmatpush1.bf16.msra.mxu0 %v4284
    %4308 = vmatprep.subr.bf16.mxu0 0
    %4309 = vmatpush1.bf16.msra.mxu0 %v4285
    %4310 = vmatprep.subr.bf16.mxu0 0
    %4311 = vmatpush1.bf16.msra.mxu0 0
    %4312 = vmatprep.subr.bf16.mxu0 0
    %4313 = vmatpush1.bf16.msra.mxu0 0
    %4314 = vmatprep.subr.bf16.mxu0 0
    %4315 = vmatpush1.bf16.msra.mxu0 0
    %4316 = vmatprep.subr.bf16.mxu0 0
    %4317 = vmatpush1.bf16.msra.mxu0 0
    %4318 = vmatprep.subr.bf16.mxu0 0
    %4319 = vmatpush1.bf16.msra.mxu0 0
    %4320 = vmatprep.subr.bf16.mxu0 0
    %4321 = vmatpush1.bf16.msra.mxu0 0
    %4322 = vmatprep.subr.bf16.mxu0 0
    %4323 = vmatpush1.bf16.msra.mxu0 0
    %4324 = vmatprep.subr.bf16.mxu0 0
    %4325 = vmatpush1.bf16.msra.mxu0 0
    %4326 = vmatprep.mubr.bf16.mxu0 0
    %4327 = vmatmul.mubr.bf16.gmra.mrb[0].mxu0 %v4244
    %v4328 = vpop.f32.mrb[0].mxu0
    %v4329 = vadd.f32 %v4235, %v4328
    %v4330 = vpop.f32.mrb[0].mxu0
    %v4331 = vpop.f32.mrb[0].mxu0
    %v4332 = vpop.f32.mrb[0].mxu0
    %4333 = vdwg.mxu0
    %v4334 = vmax.f32 %v4329, 0.0
    %v4335 = vpack.c.bf16 %v4334, %v4334
    %v4336 = vld [vmem:[%s7] sm:$0xf]
    %v4337 = vld [vmem:[%s7 + $0x4] sm:$0xf]
    %v4338 = vld [vmem:[%s7 + $0x8] sm:$0xf]
    %v4339 = vld [vmem:[%s7 + $0xc] sm:$0xf]
    %v4340 = vld [vmem:[%s7 + $0x10] sm:$0xf]
    %v4341 = vld [vmem:[%s7 + $0x14] sm:$0xf]
    %v4342 = vld [vmem:[%s7 + $0x18] sm:$0xf]
    %v4343 = vld [vmem:[%s7 + $0x1c] sm:$0xf]
    %v4344 = vld [vmem:[%s7 + $0x20] sm:$0xf]
    %v4345 = vld [vmem:[%s7 + $0x24] sm:$0xf]
    %v4346 = vld [vmem:[%s7 + $0x28] sm:$0xf]
    %v4347 = vld [vmem:[%s7 + $0x2c] sm:$0xf]
    %v4348 = vld [vmem:[%s7 + $0x30] sm:$0xf]
    %v4349 = vld [vmem:[%s7 + $0x34] sm:$0xf]
    %v4350 = vld [vmem:[%s7 + $0x38] sm:$0xf]
    %v4351 = vld [vmem:[%s7 + $0x3c] sm:$0xf]
    %v4352 = vld [vmem:[%s8] sm:$0x1]
    %v4354 = vlaneseq
    %v4355 = vshrl.u32 %v4354, 7
    %v4356 = vsub.s32 0, %v4355
    %v4357 = vrot.slane %v4352, %v4356
    %v4375 = vunpack.c.l.b16 %v4336
    %v4376 = vunpack.c.l.b16 %v4337
    %v4377 = vunpack.c.l.b16 %v4338
    %v4378 = vunpack.c.l.b16 %v4339
    %v4379 = vunpack.c.l.b16 %v4340
    %v4380 = vunpack.c.l.b16 %v4341
    %v4381 = vunpack.c.l.b16 %v4342
    %v4382 = vunpack.c.l.b16 %v4343
    %v4383 = vunpack.c.l.b16 %v4344
    %v4384 = vunpack.c.l.b16 %v4345
    %v4385 = vunpack.c.l.b16 %v4346
    %v4386 = vunpack.c.l.b16 %v4347
    %v4387 = vunpack.c.l.b16 %v4348
    %v4388 = vunpack.c.l.b16 %v4349
    %v4389 = vunpack.c.l.b16 %v4350
    %v4390 = vunpack.c.l.b16 %v4351
    %v4391 = vpack.c.b16 %v4376, %v4375
    %v4392 = vpack.c.b16 %v4378, %v4377
    %v4393 = vpack.c.b16 %v4380, %v4379
    %v4394 = vpack.c.b16 %v4382, %v4381
    %v4395 = vpack.c.b16 %v4384, %v4383
    %v4396 = vpack.c.b16 %v4386, %v4385
    %v4397 = vpack.c.b16 %v4388, %v4387
    %v4398 = vpack.c.b16 %v4390, %v4389
    %4407 = vmatprep.subr.bf16.mxu0 0
    %4408 = vmatpush1.bf16.msra.mxu0 %v4391
    %4409 = vmatprep.subr.bf16.mxu0 0
    %4410 = vmatpush1.bf16.msra.mxu0 %v4392
    %4411 = vmatprep.subr.bf16.mxu0 0
    %4412 = vmatpush1.bf16.msra.mxu0 %v4393
    %4413 = vmatprep.subr.bf16.mxu0 0
    %4414 = vmatpush1.bf16.msra.mxu0 %v4394
    %4415 = vmatprep.subr.bf16.mxu0 0
    %4416 = vmatpush1.bf16.msra.mxu0 %v4395
    %4417 = vmatprep.subr.bf16.mxu0 0
    %4418 = vmatpush1.bf16.msra.mxu0 %v4396
    %4419 = vmatprep.subr.bf16.mxu0 0
    %4420 = vmatpush1.bf16.msra.mxu0 %v4397
    %4421 = vmatprep.subr.bf16.mxu0 0
    %4422 = vmatpush1.bf16.msra.mxu0 %v4398
    %4423 = vmatprep.subr.bf16.mxu0 0
    %4424 = vmatpush1.bf16.msra.mxu0 0
    %4425 = vmatprep.subr.bf16.mxu0 0
    %4426 = vmatpush1.bf16.msra.mxu0 0
    %4427 = vmatprep.subr.bf16.mxu0 0
    %4428 = vmatpush1.bf16.msra.mxu0 0
    %4429 = vmatprep.subr.bf16.mxu0 0
    %4430 = vmatpush1.bf16.msra.mxu0 0
    %4431 = vmatprep.subr.bf16.mxu0 0
    %4432 = vmatpush1.bf16.msra.mxu0 0
    %4433 = vmatprep.subr.bf16.mxu0 0
    %4434 = vmatpush1.bf16.msra.mxu0 0
    %4435 = vmatprep.subr.bf16.mxu0 0
    %4436 = vmatpush1.bf16.msra.mxu0 0
    %4437 = vmatprep.subr.bf16.mxu0 0
    %4438 = vmatpush1.bf16.msra.mxu0 0
    %4439 = vmatprep.mubr.bf16.mxu0 0
    %4440 = vmatmul.mubr.bf16.gmra.mrb[0].mxu0 %v4335
    %v4441 = vpop.f32.mrb[0].mxu0
    %v4442 = vadd.f32 %v4357, %v4441
    %v4443 = vpop.f32.mrb[0].mxu0
    %v4444 = vpop.f32.mrb[0].mxu0
    %v4445 = vpop.f32.mrb[0].mxu0
    %4446 = vdwg.mxu0
    %v4447 = vmax.f32 %v4442, 0.0
    %v4448 = vpack.c.bf16 %v4447, %v4447
    %v4449 = vld [vmem:[%s9] sm:$0xf]
    %v4450 = vld [vmem:[%s9 + $0x4] sm:$0xf]
    %v4451 = vld [vmem:[%s9 + $0x8] sm:$0xf]
    %v4452 = vld [vmem:[%s9 + $0xc] sm:$0xf]
    %v4453 = vld [vmem:[%s9 + $0x10] sm:$0xf]
    %v4454 = vld [vmem:[%s9 + $0x14] sm:$0xf]
    %v4455 = vld [vmem:[%s9 + $0x18] sm:$0xf]
    %v4456 = vld [vmem:[%s9 + $0x1c] sm:$0xf]
    %v4457 = vld [vmem:[%s9 + $0x20] sm:$0xf]
    %v4458 = vld [vmem:[%s9 + $0x24] sm:$0xf]
    %v4459 = vld [vmem:[%s9 + $0x28] sm:$0xf]
    %v4460 = vld [vmem:[%s9 + $0x2c] sm:$0xf]
    %v4461 = vld [vmem:[%s9 + $0x30] sm:$0xf]
    %v4462 = vld [vmem:[%s9 + $0x34] sm:$0xf]
    %v4463 = vld [vmem:[%s9 + $0x38] sm:$0xf]
    %v4464 = vld [vmem:[%s9 + $0x3c] sm:$0xf]
    %v4465 = vld [vmem:[%s10] sm:$0x1]
    %v4467 = vlaneseq
    %v4468 = vshrl.u32 %v4467, 7
    %v4469 = vsub.s32 0, %v4468
    %v4470 = vrot.slane %v4465, %v4469
    %v4488 = vunpack.c.l.b16 %v4449
    %v4489 = vunpack.c.l.b16 %v4450
    %v4490 = vunpack.c.l.b16 %v4451
    %v4491 = vunpack.c.l.b16 %v4452
    %v4492 = vunpack.c.l.b16 %v4453
    %v4493 = vunpack.c.l.b16 %v4454
    %v4494 = vunpack.c.l.b16 %v4455
    %v4495 = vunpack.c.l.b16 %v4456
    %v4496 = vunpack.c.l.b16 %v4457
    %v4497 = vunpack.c.l.b16 %v4458
    %v4498 = vunpack.c.l.b16 %v4459
    %v4499 = vunpack.c.l.b16 %v4460
    %v4500 = vunpack.c.l.b16 %v4461
    %v4501 = vunpack.c.l.b16 %v4462
    %v4502 = vunpack.c.l.b16 %v4463
    %v4503 = vunpack.c.l.b16 %v4464
    %v4504 = vpack.c.b16 %v4489, %v4488
    %v4505 = vpack.c.b16 %v4491, %v4490
    %v4506 = vpack.c.b16 %v4493, %v4492
    %v4507 = vpack.c.b16 %v4495, %v4494
    %v4508 = vpack.c.b16 %v4497, %v4496
    %v4509 = vpack.c.b16 %v4499, %v4498
    %v4510 = vpack.c.b16 %v4501, %v4500
    %v4511 = vpack.c.b16 %v4503, %v4502
    %4520 = vmatprep.subr.bf16.mxu0 0
    %4521 = vmatpush1.bf16.msra.mxu0 %v4504
    %4522 = vmatprep.subr.bf16.mxu0 0
    %4523 = vmatpush1.bf16.msra.mxu0 %v4505
    %4524 = vmatprep.subr.bf16.mxu0 0
    %4525 = vmatpush1.bf16.msra.mxu0 %v4506
    %4526 = vmatprep.subr.bf16.mxu0 0
    %4527 = vmatpush1.bf16.msra.mxu0 %v4507
    %4528 = vmatprep.subr.bf16.mxu0 0
    %4529 = vmatpush1.bf16.msra.mxu0 %v4508
    %4530 = vmatprep.subr.bf16.mxu0 0
    %4531 = vmatpush1.bf16.msra.mxu0 %v4509
    %4532 = vmatprep.subr.bf16.mxu0 0
    %4533 = vmatpush1.bf16.msra.mxu0 %v4510
    %4534 = vmatprep.subr.bf16.mxu0 0
    %4535 = vmatpush1.bf16.msra.mxu0 %v4511
    %4536 = vmatprep.subr.bf16.mxu0 0
    %4537 = vmatpush1.bf16.msra.mxu0 0
    %4538 = vmatprep.subr.bf16.mxu0 0
    %4539 = vmatpush1.bf16.msra.mxu0 0
    %4540 = vmatprep.subr.bf16.mxu0 0
    %4541 = vmatpush1.bf16.msra.mxu0 0
    %4542 = vmatprep.subr.bf16.mxu0 0
    %4543 = vmatpush1.bf16.msra.mxu0 0
    %4544 = vmatprep.subr.bf16.mxu0 0
    %4545 = vmatpush1.bf16.msra.mxu0 0
    %4546 = vmatprep.subr.bf16.mxu0 0
    %4547 = vmatpush1.bf16.msra.mxu0 0
    %4548 = vmatprep.subr.bf16.mxu0 0
    %4549 = vmatpush1.bf16.msra.mxu0 0
    %4550 = vmatprep.subr.bf16.mxu0 0
    %4551 = vmatpush1.bf16.msra.mxu0 0
    %4552 = vmatprep.mubr.bf16.mxu0 0
    %4553 = vmatmul.mubr.bf16.gmra.mrb[0].mxu0 %v4448
    %v4554 = vpop.f32.mrb[0].mxu0
    %v4555 = vadd.f32 %v4470, %v4554
    %v4556 = vpop.f32.mrb[0].mxu0
    %v4557 = vpop.f32.mrb[0].mxu0
    %v4558 = vpop.f32.mrb[0].mxu0
    %4559 = vdwg.mxu0
    %4560 = vst [vmem:[#allocation2] sm:$0x3] %v4555
    // Predicated region
    $region46: #{lenet_forward.1} parent=1 // pred_check
      _
    $region47: #{lenet_forward.1} parent=1 // pred_check_branch
      %4562 = sbr.rel (0) target = $region49
    $region48: #{lenet_forward.1} parent=1 // pred_region
      %s4564 = ssub.s32 32, 32
      %4565 = vsyncadd [#allocation3], %s4564
      %s4567 = sshll.u32 [#allocation2], 4
      %s4568 = int_to_ptr.vmem [resolvable:$true] %s4567
      %4570 = dma.vmem_to_hbm [thread:$0]  %s4568, 32, %s11, [#allocation3]
    $region49: #{lenet_forward.1} parent=1 // pred_fallthru
      _
    // Predicated region
    $region50: #{lenet_forward.1} parent=1 // pred_check
      _
    $region51: #{lenet_forward.1} parent=1 // pred_check_branch
      %4572 = sbr.rel (0) target = $region53
    $region52: #{lenet_forward.1} parent=1 // pred_region
      %4573 = dma.done [#allocation3], 32
    $region53: #{lenet_forward.1} parent=1 // pred_fallthru
      _
    %4574 = vsyncpa [#allocation3], 1

</llo_original>
